<compile_context>
chip_gen: v7x
topology: tpu7x:2x2x1
jax: 0.10.0
libtpu: 0.0.40
codegen_flags: <defaults>
</compile_context>

<pallas_src>
import math

import jax
import jax.numpy as jnp
from jax.experimental import pallas as pl
from jax.experimental.pallas import tpu as pltpu


def _vmem_limit():
    # Re-derive the scoped VMEM budget per generation (v7x has only 64 MiB).
    try:
        info = pltpu.get_tpu_info()
        cap = getattr(info, "vmem_capacity_bytes", None)
        if cap:
            return int(min(64 * 1024 * 1024, cap * 3 // 4))
    except Exception:
        pass
    return 32 * 1024 * 1024


def _pick_row_tile(H, W):
    """Largest divisor of H giving >=2 row tiles and ~<=256 rows per tile."""
    target = max(1, 256 // max(W, 1))
    best = H  # fallback: whole image as one tile (H == 1 or no divisor fits)
    for d in range(1, H + 1):
        if H % d == 0 and H // d >= 2 and d <= target:
            best = d
    return best


# ----------------------------------------------------------------------------
# Fused Inception kernel
# ----------------------------------------------------------------------------
def _make_inception_kernel(H, W, th, c_in, c1, c3r, c3, c5r, c5, cp):
    Cs = c1 + c3r + c5r     # fused stem output channels
    HP = 2                  # stem scratch halo (covers 3x3 pad=1 and 5x5 pad=2)
    PP = 1                  # pool scratch halo
    NEG = -1e30             # -inf surrogate for maxpool padding

    def kernel(x_ref, ws_ref, bs_ref, w3_ref, b3_ref, w5_ref, b5_ref,
               wp_ref, bp_ref, o_ref, stem_ref, xpad_ref):
        t = pl.program_id(1)

        # ---- once per batch element: full-image 1x1 stem + padded x copy ----
        @pl.when(t == 0)
        def _init():
            stem_ref[...] = jnp.zeros(stem_ref.shape, stem_ref.dtype)
            xpad_ref[...] = jnp.full(xpad_ref.shape, NEG, xpad_ref.dtype)
            x_img = x_ref[0]                                     # (H, W, Cin) f32
            xpad_ref[PP:PP + H, PP:PP + W, :] = x_img
            x2d = x_img.reshape(H * W, c_in).astype(jnp.bfloat16)
            acc = jnp.dot(x2d, ws_ref[...],
                          preferred_element_type=jnp.float32)
            acc = jnp.maximum(acc + bs_ref[...], 0.0)
            stem_ref[HP:HP + H, HP:HP + W, :] = acc.reshape(H, W, Cs)

        r0 = t * th                                              # first out row

        # ---- branch 1: only_1x1 (already ReLU'd in the stem scratch) --------
        o_ref[0, :, :, 0:c1] = stem_ref[pl.ds(HP + r0, th), HP:HP + W, 0:c1]

        # ---- branch 2: reduce3 -> 3x3 conv (pad 1): on-chip im2col ----------
        taps = []
        for dy in range(3):
            for dx in range(3):
                taps.append(stem_ref[pl.ds(r0 + dy + (HP - 1), th),
                                     (HP - 1) + dx:(HP - 1) + dx + W,
                                     c1:c1 + c3r])
        slab = jnp.concatenate(taps, axis=-1)                    # (th, W, 9*c3r)
        slab = slab.reshape(th * W, 9 * c3r).astype(jnp.bfloat16)
        acc = jnp.dot(slab, w3_ref[...], preferred_element_type=jnp.float32)
        acc = jnp.maximum(acc + b3_ref[...], 0.0)
        o_ref[0, :, :, c1:c1 + c3] = acc.reshape(th, W, c3)

        # ---- branch 3: reduce5 -> 5x5 conv (pad 2): on-chip im2col ----------
        taps = []
        for dy in range(5):
            for dx in range(5):
                taps.append(stem_ref[pl.ds(r0 + dy, th), dx:dx + W,
                                     c1 + c3r:Cs])
        slab = jnp.concatenate(taps, axis=-1)                    # (th, W, 25*c5r)
        slab = slab.reshape(th * W, 25 * c5r).astype(jnp.bfloat16)
        acc = jnp.dot(slab, w5_ref[...], preferred_element_type=jnp.float32)
        acc = jnp.maximum(acc + b5_ref[...], 0.0)
        o_ref[0, :, :, c1 + c3:c1 + c3 + c5] = acc.reshape(th, W, c5)

        # ---- branch 4: maxpool(3x3, s1, p1) fused with 1x1 conv -------------
        m = xpad_ref[pl.ds(r0, th), 0:W, :]
        for dy in range(3):
            for dx in range(3):
                if dy == 0 and dx == 0:
                    continue
                m = jnp.maximum(m, xpad_ref[pl.ds(r0 + dy, th), dx:dx + W, :])
        mp = m.reshape(th * W, c_in).astype(jnp.bfloat16)
        acc = jnp.dot(mp, wp_ref[...], preferred_element_type=jnp.float32)
        acc = jnp.maximum(acc + bp_ref[...], 0.0)
        o_ref[0, :, :, c1 + c3 + c5:] = acc.reshape(th, W, cp)

    return kernel


# ----------------------------------------------------------------------------
# Weight layout helpers (plain JAX, parameter plumbing only)
# ----------------------------------------------------------------------------
def _w_1x1(w):
    # (Cout, Cin, 1, 1) -> (Cin, Cout)
    return jnp.transpose(w[:, :, 0, 0], (1, 0))


def _w_im2col(w):
    # (Cout, Cin, k, k) -> (k*k*Cin, Cout); row index = (dy*k + dx)*Cin + cin
    cout, cin, k, _ = w.shape
    return jnp.transpose(w, (2, 3, 1, 0)).reshape(k * k * cin, cout)


# ----------------------------------------------------------------------------
# Forward pass
# ----------------------------------------------------------------------------
def inception_forward(x_nchw, p):
    N, Cin, H, W = x_nchw.shape
    x = jnp.transpose(x_nchw, (0, 2, 3, 1))                     # NHWC f32

    c1 = p["w1"].shape[0]
    c3r, c3 = p["w3r"].shape[0], p["w3"].shape[0]
    c5r, c5 = p["w5r"].shape[0], p["w5"].shape[0]
    cp = p["wp"].shape[0]
    Cs = c1 + c3r + c5r
    Ctot = c1 + c3 + c5 + cp

    # Fused 1x1 stem weights: [only_1x1 | reduce3[0] | reduce5[0]]
    w_stem = jnp.concatenate(
        [_w_1x1(p["w1"]), _w_1x1(p["w3r"]), _w_1x1(p["w5r"])],
        axis=1).astype(jnp.bfloat16)
    b_stem = jnp.concatenate([p["b1"], p["b3r"], p["b5r"]]).reshape(1, Cs)
    w3m = _w_im2col(p["w3"]).astype(jnp.bfloat16)
    w5m = _w_im2col(p["w5"]).astype(jnp.bfloat16)
    wp = _w_1x1(p["wp"]).astype(jnp.bfloat16)
    b3 = p["b3"].reshape(1, c3)
    b5 = p["b5"].reshape(1, c5)
    bp = p["bp"].reshape(1, cp)

    th = _pick_row_tile(H, W)
    T = H // th

    flops = 2 * N * H * W * (Cin * Cs + 9 * c3r * c3 + 25 * c5r * c5 + Cin * cp)
    w_bytes = 2 * (Cin * Cs + 9 * c3r * c3 + 25 * c5r * c5 + Cin * cp)
    bytes_accessed = N * H * W * Cin * 4 + N * H * W * Ctot * 4 + w_bytes

    out_nhwc = pl.pallas_call(
        _make_inception_kernel(H, W, th, Cin, c1, c3r, c3, c5r, c5, cp),
        out_shape=jax.ShapeDtypeStruct((N, H, W, Ctot), jnp.float32),
        grid=(N, T),
        in_specs=[
            pl.BlockSpec((1, H, W, Cin), lambda n, t: (n, 0, 0, 0)),
            pl.BlockSpec((Cin, Cs), lambda n, t: (0, 0)),
            pl.BlockSpec((1, Cs), lambda n, t: (0, 0)),
            pl.BlockSpec((9 * c3r, c3), lambda n, t: (0, 0)),
            pl.BlockSpec((1, c3), lambda n, t: (0, 0)),
            pl.BlockSpec((25 * c5r, c5), lambda n, t: (0, 0)),
            pl.BlockSpec((1, c5), lambda n, t: (0, 0)),
            pl.BlockSpec((Cin, cp), lambda n, t: (0, 0)),
            pl.BlockSpec((1, cp), lambda n, t: (0, 0)),
        ],
        out_specs=pl.BlockSpec((1, th, W, Ctot), lambda n, t: (n, t, 0, 0)),
        scratch_shapes=[
            pltpu.VMEM((H + 4, W + 4, Cs), jnp.float32),   # padded stem
            pltpu.VMEM((H + 2, W + 2, Cin), jnp.float32),  # -inf padded x
        ],
        compiler_params=pltpu.CompilerParams(
            dimension_semantics=("parallel", "arbitrary"),
            vmem_limit_bytes=_vmem_limit()),
        cost_estimate=pl.CostEstimate(
            flops=flops, transcendentals=0, bytes_accessed=bytes_accessed),
    )(x, w_stem, b_stem, w3m, b3, w5m, b5, wp, bp)

    # single layout transpose at the module boundary (matches torch.cat(dim=1))
    return jnp.transpose(out_nhwc, (0, 3, 1, 2))


# ----------------------------------------------------------------------------
# Parameter init (deterministic) + spectral normalization
# ----------------------------------------------------------------------------
def _spectral_normalize(w, key, n_iter=1, eps=1e-12):
    # torch.nn.utils.spectral_norm reparameterization: W / sigma_max(W_mat)
    cout = w.shape[0]
    wm = w.reshape(cout, -1)
    u = jax.random.normal(key, (cout,), dtype=w.dtype)
    u = u / (jnp.linalg.norm(u) + eps)
    v = None
    for _ in range(n_iter):
        v = wm.T @ u
        v = v / (jnp.linalg.norm(v) + eps)
        u = wm @ v
        u = u / (jnp.linalg.norm(u) + eps)
    sigma = u @ (wm @ v)
    return w / sigma


def _init_conv(key, cout, cin, k):
    kw, kb, ku = jax.random.split(key, 3)
    fan_in = cin * k * k
    bound = 1.0 / math.sqrt(fan_in)
    w = jax.random.uniform(kw, (cout, cin, k, k), minval=-bound, maxval=bound,
                           dtype=jnp.float32)
    b = jax.random.uniform(kb, (cout,), minval=-bound, maxval=bound,
                           dtype=jnp.float32)
    return _spectral_normalize(w, ku), b


def init_inception_params(key, ch_in, ch_1x1, ch_3x3_r, ch_3x3, ch_5x5_r,
                          ch_5x5, ch_pool):
    keys = jax.random.split(key, 6)
    p = {}
    p["w1"], p["b1"] = _init_conv(keys[0], ch_1x1, ch_in, 1)
    p["w3r"], p["b3r"] = _init_conv(keys[1], ch_3x3_r, ch_in, 1)
    p["w3"], p["b3"] = _init_conv(keys[2], ch_3x3, ch_3x3_r, 3)
    p["w5r"], p["b5r"] = _init_conv(keys[3], ch_5x5_r, ch_in, 1)
    p["w5"], p["b5"] = _init_conv(keys[4], ch_5x5, ch_5x5_r, 5)
    p["wp"], p["bp"] = _init_conv(keys[5], ch_pool, ch_in, 1)
    return p


# ----------------------------------------------------------------------------
# Pure-JAX reference (correctness check only; same bf16 MXU inputs)
# ----------------------------------------------------------------------------
def _ref_forward(x, p):
    bf = lambda a: a.astype(jnp.bfloat16).astype(jnp.float32)

    def conv(inp, w, b, pad):
        y = jax.lax.conv_general_dilated(
            bf(inp), bf(w), (1, 1), [(pad, pad), (pad, pad)],
            dimension_numbers=("NCHW", "OIHW", "NCHW"),
            preferred_element_type=jnp.float32)
        return jax.nn.relu(y + b[None, :, None, None])

    y1 = conv(x, p["w1"], p["b1"], 0)
    y2 = conv(conv(x, p["w3r"], p["b3r"], 0), p["w3"], p["b3"], 1)
    y3 = conv(conv(x, p["w5r"], p["b5r"], 0), p["w5"], p["b5"], 2)
    xm = jax.lax.reduce_window(
        bf(x), -jnp.inf, jax.lax.max, (1, 1, 3, 3), (1, 1, 1, 1),
        padding=((0, 0), (0, 0), (1, 1), (1, 1)))
    y4 = conv(xm, p["wp"], p["bp"], 0)
    return jnp.concatenate([y1, y2, y3, y4], axis=1)


# ----------------------------------------------------------------------------
if __name__ == "__main__":
    key = jax.random.PRNGKey(0)
    kx, kp = jax.random.split(key)

    # small shapes: batch=2, ch_in=4, spatial=16
    N, C_IN, H, W = 2, 4, 16, 16
    ch_1x1, ch_3x3_r, ch_3x3, ch_5x5_r, ch_5x5, ch_pool = 8, 4, 8, 4, 8, 8

    x = jax.random.normal(kx, (N, C_IN, H, W), dtype=jnp.float32)
    params = init_inception_params(kp, C_IN, ch_1x1, ch_3x3_r, ch_3x3,
                                   ch_5x5_r, ch_5x5, ch_pool)

    out = jax.jit(inception_forward)(x, params)
    out = jax.block_until_ready(out)

    assert out.shape == (N, ch_1x1 + ch_3x3 + ch_5x5 + ch_pool, H, W), out.shape

    ref = jax.block_until_ready(_ref_forward(x, params))
    max_diff = float(jnp.max(jnp.abs(out - ref)))
    assert jnp.allclose(out, ref, atol=3e-2, rtol=3e-2), max_diff

    print("KERNEL_OK")
</pallas_src>

<mosaic_0001>
module attributes {stable_mosaic.version = 11 : i64} {
  func.func @kernel(%arg0: i32, %arg1: i32, %arg2: memref<1x16x16x4xf32, #tpu.memory_space<vmem>>, %arg3: memref<4x16xbf16, #tpu.memory_space<vmem>>, %arg4: memref<1x16xf32, #tpu.memory_space<vmem>>, %arg5: memref<36x8xbf16, #tpu.memory_space<vmem>>, %arg6: memref<1x8xf32, #tpu.memory_space<vmem>>, %arg7: memref<100x8xbf16, #tpu.memory_space<vmem>>, %arg8: memref<1x8xf32, #tpu.memory_space<vmem>>, %arg9: memref<4x8xbf16, #tpu.memory_space<vmem>>, %arg10: memref<1x8xf32, #tpu.memory_space<vmem>>, %arg11: memref<1x8x16x32xf32, #tpu.memory_space<vmem>>, %arg12: memref<20x20x16xf32, #tpu.memory_space<vmem>>, %arg13: memref<18x18x4xf32, #tpu.memory_space<vmem>>) attributes {dimension_semantics = [#tpu.dimension_semantics<parallel>, #tpu.dimension_semantics<arbitrary>], iteration_bounds = array<i64: 2, 2>, scalar_prefetch = 0 : i64, scratch_operands = 2 : i64, tpu.core_type = #tpu.core_type<tc>, window_params = [{transform_indices = @transform_0, window_bounds = array<i64: 1, 16, 16, 4>}, {pipeline_mode = #tpu.pipeline_mode<synchronous>, transform_indices = @transform_1, window_bounds = array<i64: 4, 16>}, {pipeline_mode = #tpu.pipeline_mode<synchronous>, transform_indices = @transform_2, window_bounds = array<i64: 1, 16>}, {pipeline_mode = #tpu.pipeline_mode<synchronous>, transform_indices = @transform_3, window_bounds = array<i64: 36, 8>}, {pipeline_mode = #tpu.pipeline_mode<synchronous>, transform_indices = @transform_4, window_bounds = array<i64: 1, 8>}, {pipeline_mode = #tpu.pipeline_mode<synchronous>, transform_indices = @transform_5, window_bounds = array<i64: 100, 8>}, {pipeline_mode = #tpu.pipeline_mode<synchronous>, transform_indices = @transform_6, window_bounds = array<i64: 1, 8>}, {pipeline_mode = #tpu.pipeline_mode<synchronous>, transform_indices = @transform_7, window_bounds = array<i64: 4, 8>}, {pipeline_mode = #tpu.pipeline_mode<synchronous>, transform_indices = @transform_8, window_bounds = array<i64: 1, 8>}, {transform_indices = @transform_9, window_bounds = array<i64: 1, 8, 16, 32>}]} {
    %c0_i32 = arith.constant 0 : i32
    %0 = arith.cmpi eq, %arg1, %c0_i32 : i32
    %1 = arith.extui %0 : i1 to i32
    %c0_i32_0 = arith.constant 0 : i32
    %2 = arith.cmpi ne, %1, %c0_i32_0 : i32
    scf.if %2 {
      %cst_161 = arith.constant 0.000000e+00 : f32
      %198 = vector.broadcast %cst_161 : f32 to vector<20x20x16xf32>
      %c0_162 = arith.constant 0 : index
      %c0_163 = arith.constant 0 : index
      %c0_164 = arith.constant 0 : index
      %199 = vector.load %arg12[%c0_162, %c0_163, %c0_164] : memref<20x20x16xf32, #tpu.memory_space<vmem>>, vector<20x20x16xf32>
      tpu.vector_store %arg12[%c0_162, %c0_163, %c0_164], %198 {strides = array<i32>} : memref<20x20x16xf32, #tpu.memory_space<vmem>>, vector<20x20x16xf32>,
      %cst_165 = arith.constant -1.000000e+30 : f32
      %200 = vector.broadcast %cst_165 : f32 to vector<18x18x4xf32>
      %c0_166 = arith.constant 0 : index
      %c0_167 = arith.constant 0 : index
      %c0_168 = arith.constant 0 : index
      %201 = vector.load %arg13[%c0_166, %c0_167, %c0_168] : memref<18x18x4xf32, #tpu.memory_space<vmem>>, vector<18x18x4xf32>
      tpu.vector_store %arg13[%c0_166, %c0_167, %c0_168], %200 {strides = array<i32>} : memref<18x18x4xf32, #tpu.memory_space<vmem>>, vector<18x18x4xf32>,
      %c0_169 = arith.constant 0 : index
      %c0_170 = arith.constant 0 : index
      %c0_171 = arith.constant 0 : index
      %c0_172 = arith.constant 0 : index
      %202 = vector.load %arg2[%c0_169, %c0_170, %c0_171, %c0_172] : memref<1x16x16x4xf32, #tpu.memory_space<vmem>>, vector<1x16x16x4xf32>
      %203 = vector.shape_cast %202 : vector<1x16x16x4xf32> to vector<16x16x4xf32>
      %c1_173 = arith.constant 1 : index
      %c1_174 = arith.constant 1 : index
      %c0_175 = arith.constant 0 : index
      %204 = vector.load %arg13[%c1_173, %c1_174, %c0_175] : memref<18x18x4xf32, #tpu.memory_space<vmem>>, vector<16x16x4xf32>
      tpu.vector_store %arg13[%c1_173, %c1_174, %c0_175], %203 {strides = array<i32>} : memref<18x18x4xf32, #tpu.memory_space<vmem>>, vector<16x16x4xf32>,
      %205 = vector.shape_cast %203 : vector<16x16x4xf32> to vector<256x4xf32>
      %206 = arith.truncf %205 : vector<256x4xf32> to vector<256x4xbf16>
      %c0_176 = arith.constant 0 : index
      %c0_177 = arith.constant 0 : index
      %207 = vector.load %arg3[%c0_176, %c0_177] : memref<4x16xbf16, #tpu.memory_space<vmem>>, vector<4x16xbf16>
      %cst_178 = arith.constant dense<0.000000e+00> : vector<256x16xf32>
      %208 = tpu.matmul %206, %207, %cst_178 {dimension_numbers = #tpu.dot_dimension_numbers<[1], [0], [0], [1], [0, 0, 1, 1], [], []>} : vector<256x4xbf16>, vector<4x16xbf16>, vector<256x16xf32> -> vector<256x16xf32>
      %c0_179 = arith.constant 0 : index
      %c0_180 = arith.constant 0 : index
      %209 = vector.load %arg4[%c0_179, %c0_180] : memref<1x16xf32, #tpu.memory_space<vmem>>, vector<1x16xf32>
      %210 = vector.broadcast %209 : vector<1x16xf32> to vector<256x16xf32>
      %211 = arith.addf %208, %210 : vector<256x16xf32>
      %cst_181 = arith.constant 0.000000e+00 : f32
      %212 = vector.broadcast %cst_181 : f32 to vector<256x16xf32>
      %213 = arith.maximumf %211, %212 : vector<256x16xf32>
      %214 = vector.shape_cast %213 : vector<256x16xf32> to vector<16x16x16xf32>
      %c2_182 = arith.constant 2 : index
      %c2_183 = arith.constant 2 : index
      %c0_184 = arith.constant 0 : index
      %215 = vector.load %arg12[%c2_182, %c2_183, %c0_184] : memref<20x20x16xf32, #tpu.memory_space<vmem>>, vector<16x16x16xf32>
      tpu.vector_store %arg12[%c2_182, %c2_183, %c0_184], %214 {strides = array<i32>} : memref<20x20x16xf32, #tpu.memory_space<vmem>>, vector<16x16x16xf32>,
    } else {
    }
    %c8_i32 = arith.constant 8 : i32
    %3 = arith.muli %arg1, %c8_i32 : i32
    %c2_i32 = arith.constant 2 : i32
    %4 = arith.addi %c2_i32, %3 : i32
    %5 = arith.index_cast %4 : i32 to index
    %c2 = arith.constant 2 : index
    %c0 = arith.constant 0 : index
    %6 = vector.load %arg12[%5, %c2, %c0] : memref<20x20x16xf32, #tpu.memory_space<vmem>>, vector<8x16x8xf32>
    %c0_1 = arith.constant 0 : index
    %c0_2 = arith.constant 0 : index
    %c0_3 = arith.constant 0 : index
    %c0_4 = arith.constant 0 : index
    %7 = vector.load %arg11[%c0_1, %c0_2, %c0_3, %c0_4] : memref<1x8x16x32xf32, #tpu.memory_space<vmem>>, vector<1x8x16x8xf32>
    %8 = vector.shape_cast %7 : vector<1x8x16x8xf32> to vector<8x16x8xf32>
    %9 = vector.shape_cast %6 : vector<8x16x8xf32> to vector<1x8x16x8xf32>
    tpu.vector_store %arg11[%c0_1, %c0_2, %c0_3, %c0_4], %9 {strides = array<i32>} : memref<1x8x16x32xf32, #tpu.memory_space<vmem>>, vector<1x8x16x8xf32>,
    %c0_i32_5 = arith.constant 0 : i32
    %10 = arith.addi %3, %c0_i32_5 : i32
    %c1_i32 = arith.constant 1 : i32
    %11 = arith.addi %10, %c1_i32 : i32
    %12 = arith.index_cast %11 : i32 to index
    %c1 = arith.constant 1 : index
    %c8 = arith.constant 8 : index
    %13 = vector.load %arg12[%12, %c1, %c8] : memref<20x20x16xf32, #tpu.memory_space<vmem>>, vector<8x16x4xf32>
    %c0_i32_6 = arith.constant 0 : i32
    %14 = arith.addi %3, %c0_i32_6 : i32
    %c1_i32_7 = arith.constant 1 : i32
    %15 = arith.addi %14, %c1_i32_7 : i32
    %16 = arith.index_cast %15 : i32 to index
    %c2_8 = arith.constant 2 : index
    %c8_9 = arith.constant 8 : index
    %17 = vector.load %arg12[%16, %c2_8, %c8_9] : memref<20x20x16xf32, #tpu.memory_space<vmem>>, vector<8x16x4xf32>
    %c0_i32_10 = arith.constant 0 : i32
    %18 = arith.addi %3, %c0_i32_10 : i32
    %c1_i32_11 = arith.constant 1 : i32
    %19 = arith.addi %18, %c1_i32_11 : i32
    %20 = arith.index_cast %19 : i32 to index
    %c3 = arith.constant 3 : index
    %c8_12 = arith.constant 8 : index
    %21 = vector.load %arg12[%20, %c3, %c8_12] : memref<20x20x16xf32, #tpu.memory_space<vmem>>, vector<8x16x4xf32>
    %c1_i32_13 = arith.constant 1 : i32
    %22 = arith.addi %3, %c1_i32_13 : i32
    %c1_i32_14 = arith.constant 1 : i32
    %23 = arith.addi %22, %c1_i32_14 : i32
    %24 = arith.index_cast %23 : i32 to index
    %c1_15 = arith.constant 1 : index
    %c8_16 = arith.constant 8 : index
    %25 = vector.load %arg12[%24, %c1_15, %c8_16] : memref<20x20x16xf32, #tpu.memory_space<vmem>>, vector<8x16x4xf32>
    %c1_i32_17 = arith.constant 1 : i32
    %26 = arith.addi %3, %c1_i32_17 : i32
    %c1_i32_18 = arith.constant 1 : i32
    %27 = arith.addi %26, %c1_i32_18 : i32
    %28 = arith.index_cast %27 : i32 to index
    %c2_19 = arith.constant 2 : index
    %c8_20 = arith.constant 8 : index
    %29 = vector.load %arg12[%28, %c2_19, %c8_20] : memref<20x20x16xf32, #tpu.memory_space<vmem>>, vector<8x16x4xf32>
    %c1_i32_21 = arith.constant 1 : i32
    %30 = arith.addi %3, %c1_i32_21 : i32
    %c1_i32_22 = arith.constant 1 : i32
    %31 = arith.addi %30, %c1_i32_22 : i32
    %32 = arith.index_cast %31 : i32 to index
    %c3_23 = arith.constant 3 : index
    %c8_24 = arith.constant 8 : index
    %33 = vector.load %arg12[%32, %c3_23, %c8_24] : memref<20x20x16xf32, #tpu.memory_space<vmem>>, vector<8x16x4xf32>
    %c2_i32_25 = arith.constant 2 : i32
    %34 = arith.addi %3, %c2_i32_25 : i32
    %c1_i32_26 = arith.constant 1 : i32
    %35 = arith.addi %34, %c1_i32_26 : i32
    %36 = arith.index_cast %35 : i32 to index
    %c1_27 = arith.constant 1 : index
    %c8_28 = arith.constant 8 : index
    %37 = vector.load %arg12[%36, %c1_27, %c8_28] : memref<20x20x16xf32, #tpu.memory_space<vmem>>, vector<8x16x4xf32>
    %c2_i32_29 = arith.constant 2 : i32
    %38 = arith.addi %3, %c2_i32_29 : i32
    %c1_i32_30 = arith.constant 1 : i32
    %39 = arith.addi %38, %c1_i32_30 : i32
    %40 = arith.index_cast %39 : i32 to index
    %c2_31 = arith.constant 2 : index
    %c8_32 = arith.constant 8 : index
    %41 = vector.load %arg12[%40, %c2_31, %c8_32] : memref<20x20x16xf32, #tpu.memory_space<vmem>>, vector<8x16x4xf32>
    %c2_i32_33 = arith.constant 2 : i32
    %42 = arith.addi %3, %c2_i32_33 : i32
    %c1_i32_34 = arith.constant 1 : i32
    %43 = arith.addi %42, %c1_i32_34 : i32
    %44 = arith.index_cast %43 : i32 to index
    %c3_35 = arith.constant 3 : index
    %c8_36 = arith.constant 8 : index
    %45 = vector.load %arg12[%44, %c3_35, %c8_36] : memref<20x20x16xf32, #tpu.memory_space<vmem>>, vector<8x16x4xf32>
    %46 = tpu.concatenate %13, %17, %21, %25, %29, %33, %37, %41, %45 in 2 : vector<8x16x4xf32>, vector<8x16x4xf32>, vector<8x16x4xf32>, vector<8x16x4xf32>, vector<8x16x4xf32>, vector<8x16x4xf32>, vector<8x16x4xf32>, vector<8x16x4xf32>, vector<8x16x4xf32> -> vector<8x16x36xf32>
    %47 = vector.shape_cast %46 : vector<8x16x36xf32> to vector<128x36xf32>
    %48 = arith.truncf %47 : vector<128x36xf32> to vector<128x36xbf16>
    %c0_37 = arith.constant 0 : index
    %c0_38 = arith.constant 0 : index
    %49 = vector.load %arg5[%c0_37, %c0_38] : memref<36x8xbf16, #tpu.memory_space<vmem>>, vector<36x8xbf16>
    %cst = arith.constant dense<0.000000e+00> : vector<128x8xf32>
    %50 = tpu.matmul %48, %49, %cst {dimension_numbers = #tpu.dot_dimension_numbers<[1], [0], [0], [1], [0, 0, 1, 1], [], []>} : vector<128x36xbf16>, vector<36x8xbf16>, vector<128x8xf32> -> vector<128x8xf32>
    %c0_39 = arith.constant 0 : index
    %c0_40 = arith.constant 0 : index
    %51 = vector.load %arg6[%c0_39, %c0_40] : memref<1x8xf32, #tpu.memory_space<vmem>>, vector<1x8xf32>
    %52 = vector.broadcast %51 : vector<1x8xf32> to vector<128x8xf32>
    %53 = arith.addf %50, %52 : vector<128x8xf32>
    %cst_41 = arith.constant 0.000000e+00 : f32
    %54 = vector.broadcast %cst_41 : f32 to vector<128x8xf32>
    %55 = arith.maximumf %53, %54 : vector<128x8xf32>
    %56 = vector.shape_cast %55 : vector<128x8xf32> to vector<8x16x8xf32>
    %c0_42 = arith.constant 0 : index
    %c0_43 = arith.constant 0 : index
    %c0_44 = arith.constant 0 : index
    %c8_45 = arith.constant 8 : index
    %57 = vector.load %arg11[%c0_42, %c0_43, %c0_44, %c8_45] : memref<1x8x16x32xf32, #tpu.memory_space<vmem>>, vector<1x8x16x8xf32>
    %58 = vector.shape_cast %57 : vector<1x8x16x8xf32> to vector<8x16x8xf32>
    %59 = vector.shape_cast %56 : vector<8x16x8xf32> to vector<1x8x16x8xf32>
    tpu.vector_store %arg11[%c0_42, %c0_43, %c0_44, %c8_45], %59 {strides = array<i32>} : memref<1x8x16x32xf32, #tpu.memory_space<vmem>>, vector<1x8x16x8xf32>,
    %c0_i32_46 = arith.constant 0 : i32
    %60 = arith.addi %3, %c0_i32_46 : i32
    %61 = arith.index_cast %60 : i32 to index
    %c0_47 = arith.constant 0 : index
    %c12 = arith.constant 12 : index
    %62 = vector.load %arg12[%61, %c0_47, %c12] : memref<20x20x16xf32, #tpu.memory_space<vmem>>, vector<8x16x4xf32>
    %c0_i32_48 = arith.constant 0 : i32
    %63 = arith.addi %3, %c0_i32_48 : i32
    %64 = arith.index_cast %63 : i32 to index
    %c1_49 = arith.constant 1 : index
    %c12_50 = arith.constant 12 : index
    %65 = vector.load %arg12[%64, %c1_49, %c12_50] : memref<20x20x16xf32, #tpu.memory_space<vmem>>, vector<8x16x4xf32>
    %c0_i32_51 = arith.constant 0 : i32
    %66 = arith.addi %3, %c0_i32_51 : i32
    %67 = arith.index_cast %66 : i32 to index
    %c2_52 = arith.constant 2 : index
    %c12_53 = arith.constant 12 : index
    %68 = vector.load %arg12[%67, %c2_52, %c12_53] : memref<20x20x16xf32, #tpu.memory_space<vmem>>, vector<8x16x4xf32>
    %c0_i32_54 = arith.constant 0 : i32
    %69 = arith.addi %3, %c0_i32_54 : i32
    %70 = arith.index_cast %69 : i32 to index
    %c3_55 = arith.constant 3 : index
    %c12_56 = arith.constant 12 : index
    %71 = vector.load %arg12[%70, %c3_55, %c12_56] : memref<20x20x16xf32, #tpu.memory_space<vmem>>, vector<8x16x4xf32>
    %c0_i32_57 = arith.constant 0 : i32
    %72 = arith.addi %3, %c0_i32_57 : i32
    %73 = arith.index_cast %72 : i32 to index
    %c4 = arith.constant 4 : index
    %c12_58 = arith.constant 12 : index
    %74 = vector.load %arg12[%73, %c4, %c12_58] : memref<20x20x16xf32, #tpu.memory_space<vmem>>, vector<8x16x4xf32>
    %c1_i32_59 = arith.constant 1 : i32
    %75 = arith.addi %3, %c1_i32_59 : i32
    %76 = arith.index_cast %75 : i32 to index
    %c0_60 = arith.constant 0 : index
    %c12_61 = arith.constant 12 : index
    %77 = vector.load %arg12[%76, %c0_60, %c12_61] : memref<20x20x16xf32, #tpu.memory_space<vmem>>, vector<8x16x4xf32>
    %c1_i32_62 = arith.constant 1 : i32
    %78 = arith.addi %3, %c1_i32_62 : i32
    %79 = arith.index_cast %78 : i32 to index
    %c1_63 = arith.constant 1 : index
    %c12_64 = arith.constant 12 : index
    %80 = vector.load %arg12[%79, %c1_63, %c12_64] : memref<20x20x16xf32, #tpu.memory_space<vmem>>, vector<8x16x4xf32>
    %c1_i32_65 = arith.constant 1 : i32
    %81 = arith.addi %3, %c1_i32_65 : i32
    %82 = arith.index_cast %81 : i32 to index
    %c2_66 = arith.constant 2 : index
    %c12_67 = arith.constant 12 : index
    %83 = vector.load %arg12[%82, %c2_66, %c12_67] : memref<20x20x16xf32, #tpu.memory_space<vmem>>, vector<8x16x4xf32>
    %c1_i32_68 = arith.constant 1 : i32
    %84 = arith.addi %3, %c1_i32_68 : i32
    %85 = arith.index_cast %84 : i32 to index
    %c3_69 = arith.constant 3 : index
    %c12_70 = arith.constant 12 : index
    %86 = vector.load %arg12[%85, %c3_69, %c12_70] : memref<20x20x16xf32, #tpu.memory_space<vmem>>, vector<8x16x4xf32>
    %c1_i32_71 = arith.constant 1 : i32
    %87 = arith.addi %3, %c1_i32_71 : i32
    %88 = arith.index_cast %87 : i32 to index
    %c4_72 = arith.constant 4 : index
    %c12_73 = arith.constant 12 : index
    %89 = vector.load %arg12[%88, %c4_72, %c12_73] : memref<20x20x16xf32, #tpu.memory_space<vmem>>, vector<8x16x4xf32>
    %c2_i32_74 = arith.constant 2 : i32
    %90 = arith.addi %3, %c2_i32_74 : i32
    %91 = arith.index_cast %90 : i32 to index
    %c0_75 = arith.constant 0 : index
    %c12_76 = arith.constant 12 : index
    %92 = vector.load %arg12[%91, %c0_75, %c12_76] : memref<20x20x16xf32, #tpu.memory_space<vmem>>, vector<8x16x4xf32>
    %c2_i32_77 = arith.constant 2 : i32
    %93 = arith.addi %3, %c2_i32_77 : i32
    %94 = arith.index_cast %93 : i32 to index
    %c1_78 = arith.constant 1 : index
    %c12_79 = arith.constant 12 : index
    %95 = vector.load %arg12[%94, %c1_78, %c12_79] : memref<20x20x16xf32, #tpu.memory_space<vmem>>, vector<8x16x4xf32>
    %c2_i32_80 = arith.constant 2 : i32
    %96 = arith.addi %3, %c2_i32_80 : i32
    %97 = arith.index_cast %96 : i32 to index
    %c2_81 = arith.constant 2 : index
    %c12_82 = arith.constant 12 : index
    %98 = vector.load %arg12[%97, %c2_81, %c12_82] : memref<20x20x16xf32, #tpu.memory_space<vmem>>, vector<8x16x4xf32>
    %c2_i32_83 = arith.constant 2 : i32
    %99 = arith.addi %3, %c2_i32_83 : i32
    %100 = arith.index_cast %99 : i32 to index
    %c3_84 = arith.constant 3 : index
    %c12_85 = arith.constant 12 : index
    %101 = vector.load %arg12[%100, %c3_84, %c12_85] : memref<20x20x16xf32, #tpu.memory_space<vmem>>, vector<8x16x4xf32>
    %c2_i32_86 = arith.constant 2 : i32
    %102 = arith.addi %3, %c2_i32_86 : i32
    %103 = arith.index_cast %102 : i32 to index
    %c4_87 = arith.constant 4 : index
    %c12_88 = arith.constant 12 : index
    %104 = vector.load %arg12[%103, %c4_87, %c12_88] : memref<20x20x16xf32, #tpu.memory_space<vmem>>, vector<8x16x4xf32>
    %c3_i32 = arith.constant 3 : i32
    %105 = arith.addi %3, %c3_i32 : i32
    %106 = arith.index_cast %105 : i32 to index
    %c0_89 = arith.constant 0 : index
    %c12_90 = arith.constant 12 : index
    %107 = vector.load %arg12[%106, %c0_89, %c12_90] : memref<20x20x16xf32, #tpu.memory_space<vmem>>, vector<8x16x4xf32>
    %c3_i32_91 = arith.constant 3 : i32
    %108 = arith.addi %3, %c3_i32_91 : i32
    %109 = arith.index_cast %108 : i32 to index
    %c1_92 = arith.constant 1 : index
    %c12_93 = arith.constant 12 : index
    %110 = vector.load %arg12[%109, %c1_92, %c12_93] : memref<20x20x16xf32, #tpu.memory_space<vmem>>, vector<8x16x4xf32>
    %c3_i32_94 = arith.constant 3 : i32
    %111 = arith.addi %3, %c3_i32_94 : i32
    %112 = arith.index_cast %111 : i32 to index
    %c2_95 = arith.constant 2 : index
    %c12_96 = arith.constant 12 : index
    %113 = vector.load %arg12[%112, %c2_95, %c12_96] : memref<20x20x16xf32, #tpu.memory_space<vmem>>, vector<8x16x4xf32>
    %c3_i32_97 = arith.constant 3 : i32
    %114 = arith.addi %3, %c3_i32_97 : i32
    %115 = arith.index_cast %114 : i32 to index
    %c3_98 = arith.constant 3 : index
    %c12_99 = arith.constant 12 : index
    %116 = vector.load %arg12[%115, %c3_98, %c12_99] : memref<20x20x16xf32, #tpu.memory_space<vmem>>, vector<8x16x4xf32>
    %c3_i32_100 = arith.constant 3 : i32
    %117 = arith.addi %3, %c3_i32_100 : i32
    %118 = arith.index_cast %117 : i32 to index
    %c4_101 = arith.constant 4 : index
    %c12_102 = arith.constant 12 : index
    %119 = vector.load %arg12[%118, %c4_101, %c12_102] : memref<20x20x16xf32, #tpu.memory_space<vmem>>, vector<8x16x4xf32>
    %c4_i32 = arith.constant 4 : i32
    %120 = arith.addi %3, %c4_i32 : i32
    %121 = arith.index_cast %120 : i32 to index
    %c0_103 = arith.constant 0 : index
    %c12_104 = arith.constant 12 : index
    %122 = vector.load %arg12[%121, %c0_103, %c12_104] : memref<20x20x16xf32, #tpu.memory_space<vmem>>, vector<8x16x4xf32>
    %c4_i32_105 = arith.constant 4 : i32
    %123 = arith.addi %3, %c4_i32_105 : i32
    %124 = arith.index_cast %123 : i32 to index
    %c1_106 = arith.constant 1 : index
    %c12_107 = arith.constant 12 : index
    %125 = vector.load %arg12[%124, %c1_106, %c12_107] : memref<20x20x16xf32, #tpu.memory_space<vmem>>, vector<8x16x4xf32>
    %c4_i32_108 = arith.constant 4 : i32
    %126 = arith.addi %3, %c4_i32_108 : i32
    %127 = arith.index_cast %126 : i32 to index
    %c2_109 = arith.constant 2 : index
    %c12_110 = arith.constant 12 : index
    %128 = vector.load %arg12[%127, %c2_109, %c12_110] : memref<20x20x16xf32, #tpu.memory_space<vmem>>, vector<8x16x4xf32>
    %c4_i32_111 = arith.constant 4 : i32
    %129 = arith.addi %3, %c4_i32_111 : i32
    %130 = arith.index_cast %129 : i32 to index
    %c3_112 = arith.constant 3 : index
    %c12_113 = arith.constant 12 : index
    %131 = vector.load %arg12[%130, %c3_112, %c12_113] : memref<20x20x16xf32, #tpu.memory_space<vmem>>, vector<8x16x4xf32>
    %c4_i32_114 = arith.constant 4 : i32
    %132 = arith.addi %3, %c4_i32_114 : i32
    %133 = arith.index_cast %132 : i32 to index
    %c4_115 = arith.constant 4 : index
    %c12_116 = arith.constant 12 : index
    %134 = vector.load %arg12[%133, %c4_115, %c12_116] : memref<20x20x16xf32, #tpu.memory_space<vmem>>, vector<8x16x4xf32>
    %135 = tpu.concatenate %62, %65, %68, %71, %74, %77, %80, %83, %86, %89, %92, %95, %98, %101, %104, %107 in 2 : vector<8x16x4xf32>, vector<8x16x4xf32>, vector<8x16x4xf32>, vector<8x16x4xf32>, vector<8x16x4xf32>, vector<8x16x4xf32>, vector<8x16x4xf32>, vector<8x16x4xf32>, vector<8x16x4xf32>, vector<8x16x4xf32>, vector<8x16x4xf32>, vector<8x16x4xf32>, vector<8x16x4xf32>, vector<8x16x4xf32>, vector<8x16x4xf32>, vector<8x16x4xf32> -> vector<8x16x64xf32>
    %136 = tpu.concatenate %110, %113, %116, %119, %122, %125, %128, %131, %134 in 2 : vector<8x16x4xf32>, vector<8x16x4xf32>, vector<8x16x4xf32>, vector<8x16x4xf32>, vector<8x16x4xf32>, vector<8x16x4xf32>, vector<8x16x4xf32>, vector<8x16x4xf32>, vector<8x16x4xf32> -> vector<8x16x36xf32>
    %137 = tpu.concatenate %135, %136 in 2 : vector<8x16x64xf32>, vector<8x16x36xf32> -> vector<8x16x100xf32>
    %138 = vector.shape_cast %137 : vector<8x16x100xf32> to vector<128x100xf32>
    %139 = arith.truncf %138 : vector<128x100xf32> to vector<128x100xbf16>
    %c0_117 = arith.constant 0 : index
    %c0_118 = arith.constant 0 : index
    %140 = vector.load %arg7[%c0_117, %c0_118] : memref<100x8xbf16, #tpu.memory_space<vmem>>, vector<100x8xbf16>
    %cst_119 = arith.constant dense<0.000000e+00> : vector<128x8xf32>
    %141 = tpu.matmul %139, %140, %cst_119 {dimension_numbers = #tpu.dot_dimension_numbers<[1], [0], [0], [1], [0, 0, 1, 1], [], []>} : vector<128x100xbf16>, vector<100x8xbf16>, vector<128x8xf32> -> vector<128x8xf32>
    %c0_120 = arith.constant 0 : index
    %c0_121 = arith.constant 0 : index
    %142 = vector.load %arg8[%c0_120, %c0_121] : memref<1x8xf32, #tpu.memory_space<vmem>>, vector<1x8xf32>
    %143 = vector.broadcast %142 : vector<1x8xf32> to vector<128x8xf32>
    %144 = arith.addf %141, %143 : vector<128x8xf32>
    %cst_122 = arith.constant 0.000000e+00 : f32
    %145 = vector.broadcast %cst_122 : f32 to vector<128x8xf32>
    %146 = arith.maximumf %144, %145 : vector<128x8xf32>
    %147 = vector.shape_cast %146 : vector<128x8xf32> to vector<8x16x8xf32>
    %c0_123 = arith.constant 0 : index
    %c0_124 = arith.constant 0 : index
    %c0_125 = arith.constant 0 : index
    %c16 = arith.constant 16 : index
    %148 = vector.load %arg11[%c0_123, %c0_124, %c0_125, %c16] : memref<1x8x16x32xf32, #tpu.memory_space<vmem>>, vector<1x8x16x8xf32>
    %149 = vector.shape_cast %148 : vector<1x8x16x8xf32> to vector<8x16x8xf32>
    %150 = vector.shape_cast %147 : vector<8x16x8xf32> to vector<1x8x16x8xf32>
    tpu.vector_store %arg11[%c0_123, %c0_124, %c0_125, %c16], %150 {strides = array<i32>} : memref<1x8x16x32xf32, #tpu.memory_space<vmem>>, vector<1x8x16x8xf32>,
    %151 = arith.index_cast %3 : i32 to index
    %c0_126 = arith.constant 0 : index
    %c0_127 = arith.constant 0 : index
    %152 = vector.load %arg13[%151, %c0_126, %c0_127] : memref<18x18x4xf32, #tpu.memory_space<vmem>>, vector<8x16x4xf32>
    %c0_i32_128 = arith.constant 0 : i32
    %153 = arith.addi %3, %c0_i32_128 : i32
    %154 = arith.index_cast %153 : i32 to index
    %c1_129 = arith.constant 1 : index
    %c0_130 = arith.constant 0 : index
    %155 = vector.load %arg13[%154, %c1_129, %c0_130] : memref<18x18x4xf32, #tpu.memory_space<vmem>>, vector<8x16x4xf32>
    %156 = arith.maximumf %152, %155 : vector<8x16x4xf32>
    %c0_i32_131 = arith.constant 0 : i32
    %157 = arith.addi %3, %c0_i32_131 : i32
    %158 = arith.index_cast %157 : i32 to index
    %c2_132 = arith.constant 2 : index
    %c0_133 = arith.constant 0 : index
    %159 = vector.load %arg13[%158, %c2_132, %c0_133] : memref<18x18x4xf32, #tpu.memory_space<vmem>>, vector<8x16x4xf32>
    %160 = arith.maximumf %156, %159 : vector<8x16x4xf32>
    %c1_i32_134 = arith.constant 1 : i32
    %161 = arith.addi %3, %c1_i32_134 : i32
    %162 = arith.index_cast %161 : i32 to index
    %c0_135 = arith.constant 0 : index
    %c0_136 = arith.constant 0 : index
    %163 = vector.load %arg13[%162, %c0_135, %c0_136] : memref<18x18x4xf32, #tpu.memory_space<vmem>>, vector<8x16x4xf32>
    %164 = arith.maximumf %160, %163 : vector<8x16x4xf32>
    %c1_i32_137 = arith.constant 1 : i32
    %165 = arith.addi %3, %c1_i32_137 : i32
    %166 = arith.index_cast %165 : i32 to index
    %c1_138 = arith.constant 1 : index
    %c0_139 = arith.constant 0 : index
    %167 = vector.load %arg13[%166, %c1_138, %c0_139] : memref<18x18x4xf32, #tpu.memory_space<vmem>>, vector<8x16x4xf32>
    %168 = arith.maximumf %164, %167 : vector<8x16x4xf32>
    %c1_i32_140 = arith.constant 1 : i32
    %169 = arith.addi %3, %c1_i32_140 : i32
    %170 = arith.index_cast %169 : i32 to index
    %c2_141 = arith.constant 2 : index
    %c0_142 = arith.constant 0 : index
    %171 = vector.load %arg13[%170, %c2_141, %c0_142] : memref<18x18x4xf32, #tpu.memory_space<vmem>>, vector<8x16x4xf32>
    %172 = arith.maximumf %168, %171 : vector<8x16x4xf32>
    %c2_i32_143 = arith.constant 2 : i32
    %173 = arith.addi %3, %c2_i32_143 : i32
    %174 = arith.index_cast %173 : i32 to index
    %c0_144 = arith.constant 0 : index
    %c0_145 = arith.constant 0 : index
    %175 = vector.load %arg13[%174, %c0_144, %c0_145] : memref<18x18x4xf32, #tpu.memory_space<vmem>>, vector<8x16x4xf32>
    %176 = arith.maximumf %172, %175 : vector<8x16x4xf32>
    %c2_i32_146 = arith.constant 2 : i32
    %177 = arith.addi %3, %c2_i32_146 : i32
    %178 = arith.index_cast %177 : i32 to index
    %c1_147 = arith.constant 1 : index
    %c0_148 = arith.constant 0 : index
    %179 = vector.load %arg13[%178, %c1_147, %c0_148] : memref<18x18x4xf32, #tpu.memory_space<vmem>>, vector<8x16x4xf32>
    %180 = arith.maximumf %176, %179 : vector<8x16x4xf32>
    %c2_i32_149 = arith.constant 2 : i32
    %181 = arith.addi %3, %c2_i32_149 : i32
    %182 = arith.index_cast %181 : i32 to index
    %c2_150 = arith.constant 2 : index
    %c0_151 = arith.constant 0 : index
    %183 = vector.load %arg13[%182, %c2_150, %c0_151] : memref<18x18x4xf32, #tpu.memory_space<vmem>>, vector<8x16x4xf32>
    %184 = arith.maximumf %180, %183 : vector<8x16x4xf32>
    %185 = vector.shape_cast %184 : vector<8x16x4xf32> to vector<128x4xf32>
    %186 = arith.truncf %185 : vector<128x4xf32> to vector<128x4xbf16>
    %c0_152 = arith.constant 0 : index
    %c0_153 = arith.constant 0 : index
    %187 = vector.load %arg9[%c0_152, %c0_153] : memref<4x8xbf16, #tpu.memory_space<vmem>>, vector<4x8xbf16>
    %cst_154 = arith.constant dense<0.000000e+00> : vector<128x8xf32>
    %188 = tpu.matmul %186, %187, %cst_154 {dimension_numbers = #tpu.dot_dimension_numbers<[1], [0], [0], [1], [0, 0, 1, 1], [], []>} : vector<128x4xbf16>, vector<4x8xbf16>, vector<128x8xf32> -> vector<128x8xf32>
    %c0_155 = arith.constant 0 : index
    %c0_156 = arith.constant 0 : index
    %189 = vector.load %arg10[%c0_155, %c0_156] : memref<1x8xf32, #tpu.memory_space<vmem>>, vector<1x8xf32>
    %190 = vector.broadcast %189 : vector<1x8xf32> to vector<128x8xf32>
    %191 = arith.addf %188, %190 : vector<128x8xf32>
    %cst_157 = arith.constant 0.000000e+00 : f32
    %192 = vector.broadcast %cst_157 : f32 to vector<128x8xf32>
    %193 = arith.maximumf %191, %192 : vector<128x8xf32>
    %194 = vector.shape_cast %193 : vector<128x8xf32> to vector<8x16x8xf32>
    %c0_158 = arith.constant 0 : index
    %c0_159 = arith.constant 0 : index
    %c0_160 = arith.constant 0 : index
    %c24 = arith.constant 24 : index
    %195 = vector.load %arg11[%c0_158, %c0_159, %c0_160, %c24] : memref<1x8x16x32xf32, #tpu.memory_space<vmem>>, vector<1x8x16x8xf32>
    %196 = vector.shape_cast %195 : vector<1x8x16x8xf32> to vector<8x16x8xf32>
    %197 = vector.shape_cast %194 : vector<8x16x8xf32> to vector<1x8x16x8xf32>
    tpu.vector_store %arg11[%c0_158, %c0_159, %c0_160, %c24], %197 {strides = array<i32>} : memref<1x8x16x32xf32, #tpu.memory_space<vmem>>, vector<1x8x16x8xf32>,
    return
  }
  func.func @transform_0(%arg0: i32, %arg1: i32) -> (i32, i32, i32, i32) {
    %c0_i32 = arith.constant 0 : i32
    %c0_i32_0 = arith.constant 0 : i32
    %c0_i32_1 = arith.constant 0 : i32
    %c0_i32_2 = arith.constant 0 : i32
    return %arg0, %c0_i32, %c0_i32_0, %c0_i32_1 : i32, i32, i32, i32
  }
  func.func @transform_1(%arg0: i32, %arg1: i32) -> (i32, i32) {
    %c0_i32 = arith.constant 0 : i32
    %c0_i32_0 = arith.constant 0 : i32
    %c0_i32_1 = arith.constant 0 : i32
    return %c0_i32, %c0_i32_0 : i32, i32
  }
  func.func @transform_2(%arg0: i32, %arg1: i32) -> (i32, i32) {
    %c0_i32 = arith.constant 0 : i32
    %c0_i32_0 = arith.constant 0 : i32
    %c0_i32_1 = arith.constant 0 : i32
    return %c0_i32, %c0_i32_0 : i32, i32
  }
  func.func @transform_3(%arg0: i32, %arg1: i32) -> (i32, i32) {
    %c0_i32 = arith.constant 0 : i32
    %c0_i32_0 = arith.constant 0 : i32
    %c0_i32_1 = arith.constant 0 : i32
    return %c0_i32, %c0_i32_0 : i32, i32
  }
  func.func @transform_4(%arg0: i32, %arg1: i32) -> (i32, i32) {
    %c0_i32 = arith.constant 0 : i32
    %c0_i32_0 = arith.constant 0 : i32
    %c0_i32_1 = arith.constant 0 : i32
    return %c0_i32, %c0_i32_0 : i32, i32
  }
  func.func @transform_5(%arg0: i32, %arg1: i32) -> (i32, i32) {
    %c0_i32 = arith.constant 0 : i32
    %c0_i32_0 = arith.constant 0 : i32
    %c0_i32_1 = arith.constant 0 : i32
    return %c0_i32, %c0_i32_0 : i32, i32
  }
  func.func @transform_6(%arg0: i32, %arg1: i32) -> (i32, i32) {
    %c0_i32 = arith.constant 0 : i32
    %c0_i32_0 = arith.constant 0 : i32
    %c0_i32_1 = arith.constant 0 : i32
    return %c0_i32, %c0_i32_0 : i32, i32
  }
  func.func @transform_7(%arg0: i32, %arg1: i32) -> (i32, i32) {
    %c0_i32 = arith.constant 0 : i32
    %c0_i32_0 = arith.constant 0 : i32
    %c0_i32_1 = arith.constant 0 : i32
    return %c0_i32, %c0_i32_0 : i32, i32
  }
  func.func @transform_8(%arg0: i32, %arg1: i32) -> (i32, i32) {
    %c0_i32 = arith.constant 0 : i32
    %c0_i32_0 = arith.constant 0 : i32
    %c0_i32_1 = arith.constant 0 : i32
    return %c0_i32, %c0_i32_0 : i32, i32
  }
  func.func @transform_9(%arg0: i32, %arg1: i32) -> (i32, i32, i32, i32) {
    %c0_i32 = arith.constant 0 : i32
    %c0_i32_0 = arith.constant 0 : i32
    %c0_i32_1 = arith.constant 0 : i32
    return %arg0, %arg1, %c0_i32, %c0_i32_0 : i32, i32, i32, i32
  }
}

</mosaic_0001>

<llo_original>
// kernel: inception_forward.1
$region0: #{inception_forward.1}
  #allocation0 [shape = 'u32[]', space=smem, size = 0x4, offset = 0x4, fixed_abs, tag = 'smem constant byte address 0x4 - core index']
  #allocation1 [shape = 'u32[144,128]{1,0:T(1,128)}', space=vmem, size = 0x12000, scoped, tag = 'internal scratch']
  #allocation2 [shape = 'f32[20,20,16]{2,1,0:T(8,128)}', space=vmem, size = 0x3c000, scoped, tag = 'scratch operand']
  #allocation3 [shape = 'f32[18,18,4]{2,1,0:T(8,128)}', space=vmem, size = 0x36000, scoped, tag = 'scratch operand']
  %s0 = inlined_call_operand.vmem [shape: f32[2,16,16,4], index: 0, kind: input, shape index: {}]
  %s1 = inlined_call_operand.vmem [shape: bf16[4,16], index: 1, kind: input, shape index: {}]
  %s2 = inlined_call_operand.vmem [shape: f32[1,16], index: 2, kind: input, shape index: {}]
  %s3 = inlined_call_operand.vmem [shape: bf16[36,8], index: 3, kind: input, shape index: {}]
  %s4 = inlined_call_operand.vmem [shape: f32[1,8], index: 4, kind: input, shape index: {}]
  %s5 = inlined_call_operand.vmem [shape: bf16[100,8], index: 5, kind: input, shape index: {}]
  %s6 = inlined_call_operand.vmem [shape: f32[1,8], index: 6, kind: input, shape index: {}]
  %s7 = inlined_call_operand.vmem [shape: bf16[4,8], index: 7, kind: input, shape index: {}]
  %s8 = inlined_call_operand.vmem [shape: f32[1,8], index: 8, kind: input, shape index: {}]
  %s9 = inlined_call_operand.hbm [shape: f32[2,16,16,32], index: 9, kind: output, shape index: {}]
  %s10 = sld [smem:[#allocation0]]
  $region73: #{inception_forward.1} parent=0
    _
  %s12 = ssub.s32 1, %s10
  %s13 = scalar_select 0, %s12, %s10
  $region1: #{inception_forward.1} parent=0
    #allocation4 [shape = 'u8[131072]{0}', space=vmem, size = 0x20000, scoped, tag = 'output window, operand 0']
    #allocation5 [shape = 's32[2]{0}', space=sflag, size = 0x8, scoped, tag = 'scoped memory for inception_forward.1']
    %14 = vsyncpa [#allocation5], 0
    %s15 = scalar_lea.sflag [#allocation5], 1
    %16 = vsyncpa %s15, 0
    loop: start=0, step=1, limit=6
    $region2: #{inception_forward.1} parent=1 // loop_pre_header
      _
    $region3: #{inception_forward.1} parent=1 // loop_header
      %s18 = sphi 0, %s22
      %p19 = scmp.ge.s32.totalorder %s18, 6
      %s25 = sphi 0, %s37
      %s26 = sphi 0, %s33
      %s27 = sphi 0, %s25
      %s28 = sphi 0, %s26
      %s29 = sphi 0, %s27
      %s30 = sphi 0, %s28
      %s40 = sphi 0, %s42
      %s43 = sphi 0, %s40
      %s44 = sphi 0, %s43
      %s60 = sphi 0, %s44
      %s64 = sphi 0, %s64
      %s66 = sphi 0, %s64
      %s67 = sphi 0, %s66
      %s81 = sphi 0, %s67
      %s85 = sphi 0, %s85
      %s87 = sphi 0, %s85
      %s88 = sphi 0, %s87
      %s102 = sphi 0, %s88
      %s106 = sphi 0, %s106
      %s108 = sphi 0, %s106
      %s109 = sphi 0, %s108
      %s123 = sphi 0, %s109
      %s127 = sphi 0, %s127
      %s129 = sphi 0, %s127
      %s130 = sphi 0, %s129
      %s144 = sphi 0, %s130
      %s148 = sphi 0, %s148
      %s150 = sphi 0, %s148
      %s151 = sphi 0, %s150
      %s165 = sphi 0, %s151
      %s169 = sphi 0, %s169
      %s171 = sphi 0, %s169
      %s172 = sphi 0, %s171
      %s186 = sphi 0, %s172
      %s190 = sphi 0, %s190
      %s192 = sphi 0, %s190
      %s193 = sphi 0, %s192
      %s207 = sphi 0, %s193
      %s211 = sphi 0, %s211
      %s213 = sphi 0, %s211
      %s214 = sphi 0, %s213
      %s228 = sphi 0, %s214
      %s236 = sphi 0, %s238
      %s239 = sphi 0, %s236
      %s240 = sphi 0, %s239
      %s256 = sphi 0, %s240
    $region4: #{inception_forward.1} parent=1 // loop_header_branch
      %21 = sbr.rel (%p19) target = $region8
    $region5: #{inception_forward.1} parent=1 // loop_body
      %s23 = ssub.s32 %s18, 1
      %s24 = ssub.s32 %s18, 2
      %s31 = sadd.s32 1, %s26
      %p32 = scmp.ge.s32.totalorder %s31, 2
      %s33 = scalar_select %p32, 0, %s31
      %s34 = sadd.s32 1, %s25
      %s35 = scalar_select %p32, %s34, %s25
      %p36 = scmp.ge.s32.totalorder %s35, 2
      %s37 = scalar_select %p36, 0, %s35
      %s38 = ssub.s32 %s25, %s37
      %p39 = scmp.eq.s32.totalorder %s38, 0
      %s41 = sadd.s32 %s40, 1
      %s42 = scalar_select %p39, %s40, %s41
      %p45 = pneg %p39
      %p46 = scmp.eq.s32.totalorder %s18, 3
      %p47 = por %p45, %p46
      %p48 = scmp.ne.s32.totalorder %s40, %s43
      %p49 = scmp.eq.s32.totalorder %s18, 0
      %p50 = por %p48, %p49
      %p51 = scmp.ne.s32.totalorder %s40, %s43
      %p52 = scmp.eq.s32.totalorder %s23, 3
      %p53 = por %p51, %p52
      %p54 = scmp.ne.s32.totalorder %s43, %s44
      %p55 = scmp.eq.s32.totalorder %s23, 0
      %p56 = por %p54, %p55
      %p57 = scmp.ne.s32.totalorder %s43, %s44
      %p58 = scmp.eq.s32.totalorder %s24, 3
      %p59 = por %p57, %p58
      %p61 = scmp.ne.s32.totalorder %s44, %s60
      %p62 = scmp.eq.s32.totalorder %s24, 0
      %p63 = por %p61, %p62
      %s65 = sadd.s32 %s64, 1
      %p68 = scmp.eq.s32.totalorder %s18, 3
      %p69 = scmp.ne.s32.totalorder %s64, %s66
      %p70 = scmp.eq.s32.totalorder %s18, 0
      %p71 = por %p69, %p70
      %p72 = scmp.ne.s32.totalorder %s64, %s66
      %p73 = scmp.eq.s32.totalorder %s23, 3
      %p74 = por %p72, %p73
      %p75 = scmp.ne.s32.totalorder %s66, %s67
      %p76 = scmp.eq.s32.totalorder %s23, 0
      %p77 = por %p75, %p76
      %p78 = scmp.ne.s32.totalorder %s66, %s67
      %p79 = scmp.eq.s32.totalorder %s24, 3
      %p80 = por %p78, %p79
      %p82 = scmp.ne.s32.totalorder %s67, %s81
      %p83 = scmp.eq.s32.totalorder %s24, 0
      %p84 = por %p82, %p83
      %s86 = sadd.s32 %s85, 1
      %p89 = scmp.eq.s32.totalorder %s18, 3
      %p90 = scmp.ne.s32.totalorder %s85, %s87
      %p91 = scmp.eq.s32.totalorder %s18, 0
      %p92 = por %p90, %p91
      %p93 = scmp.ne.s32.totalorder %s85, %s87
      %p94 = scmp.eq.s32.totalorder %s23, 3
      %p95 = por %p93, %p94
      %p96 = scmp.ne.s32.totalorder %s87, %s88
      %p97 = scmp.eq.s32.totalorder %s23, 0
      %p98 = por %p96, %p97
      %p99 = scmp.ne.s32.totalorder %s87, %s88
      %p100 = scmp.eq.s32.totalorder %s24, 3
      %p101 = por %p99, %p100
      %p103 = scmp.ne.s32.totalorder %s88, %s102
      %p104 = scmp.eq.s32.totalorder %s24, 0
      %p105 = por %p103, %p104
      %s107 = sadd.s32 %s106, 1
      %p110 = scmp.eq.s32.totalorder %s18, 3
      %p111 = scmp.ne.s32.totalorder %s106, %s108
      %p112 = scmp.eq.s32.totalorder %s18, 0
      %p113 = por %p111, %p112
      %p114 = scmp.ne.s32.totalorder %s106, %s108
      %p115 = scmp.eq.s32.totalorder %s23, 3
      %p116 = por %p114, %p115
      %p117 = scmp.ne.s32.totalorder %s108, %s109
      %p118 = scmp.eq.s32.totalorder %s23, 0
      %p119 = por %p117, %p118
      %p120 = scmp.ne.s32.totalorder %s108, %s109
      %p121 = scmp.eq.s32.totalorder %s24, 3
      %p122 = por %p120, %p121
      %p124 = scmp.ne.s32.totalorder %s109, %s123
      %p125 = scmp.eq.s32.totalorder %s24, 0
      %p126 = por %p124, %p125
      %s128 = sadd.s32 %s127, 1
      %p131 = scmp.eq.s32.totalorder %s18, 3
      %p132 = scmp.ne.s32.totalorder %s127, %s129
      %p133 = scmp.eq.s32.totalorder %s18, 0
      %p134 = por %p132, %p133
      %p135 = scmp.ne.s32.totalorder %s127, %s129
      %p136 = scmp.eq.s32.totalorder %s23, 3
      %p137 = por %p135, %p136
      %p138 = scmp.ne.s32.totalorder %s129, %s130
      %p139 = scmp.eq.s32.totalorder %s23, 0
      %p140 = por %p138, %p139
      %p141 = scmp.ne.s32.totalorder %s129, %s130
      %p142 = scmp.eq.s32.totalorder %s24, 3
      %p143 = por %p141, %p142
      %p145 = scmp.ne.s32.totalorder %s130, %s144
      %p146 = scmp.eq.s32.totalorder %s24, 0
      %p147 = por %p145, %p146
      %s149 = sadd.s32 %s148, 1
      %p152 = scmp.eq.s32.totalorder %s18, 3
      %p153 = scmp.ne.s32.totalorder %s148, %s150
      %p154 = scmp.eq.s32.totalorder %s18, 0
      %p155 = por %p153, %p154
      %p156 = scmp.ne.s32.totalorder %s148, %s150
      %p157 = scmp.eq.s32.totalorder %s23, 3
      %p158 = por %p156, %p157
      %p159 = scmp.ne.s32.totalorder %s150, %s151
      %p160 = scmp.eq.s32.totalorder %s23, 0
      %p161 = por %p159, %p160
      %p162 = scmp.ne.s32.totalorder %s150, %s151
      %p163 = scmp.eq.s32.totalorder %s24, 3
      %p164 = por %p162, %p163
      %p166 = scmp.ne.s32.totalorder %s151, %s165
      %p167 = scmp.eq.s32.totalorder %s24, 0
      %p168 = por %p166, %p167
      %s170 = sadd.s32 %s169, 1
      %p173 = scmp.eq.s32.totalorder %s18, 3
      %p174 = scmp.ne.s32.totalorder %s169, %s171
      %p175 = scmp.eq.s32.totalorder %s18, 0
      %p176 = por %p174, %p175
      %p177 = scmp.ne.s32.totalorder %s169, %s171
      %p178 = scmp.eq.s32.totalorder %s23, 3
      %p179 = por %p177, %p178
      %p180 = scmp.ne.s32.totalorder %s171, %s172
      %p181 = scmp.eq.s32.totalorder %s23, 0
      %p182 = por %p180, %p181
      %p183 = scmp.ne.s32.totalorder %s171, %s172
      %p184 = scmp.eq.s32.totalorder %s24, 3
      %p185 = por %p183, %p184
      %p187 = scmp.ne.s32.totalorder %s172, %s186
      %p188 = scmp.eq.s32.totalorder %s24, 0
      %p189 = por %p187, %p188
      %s191 = sadd.s32 %s190, 1
      %p194 = scmp.eq.s32.totalorder %s18, 3
      %p195 = scmp.ne.s32.totalorder %s190, %s192
      %p196 = scmp.eq.s32.totalorder %s18, 0
      %p197 = por %p195, %p196
      %p198 = scmp.ne.s32.totalorder %s190, %s192
      %p199 = scmp.eq.s32.totalorder %s23, 3
      %p200 = por %p198, %p199
      %p201 = scmp.ne.s32.totalorder %s192, %s193
      %p202 = scmp.eq.s32.totalorder %s23, 0
      %p203 = por %p201, %p202
      %p204 = scmp.ne.s32.totalorder %s192, %s193
      %p205 = scmp.eq.s32.totalorder %s24, 3
      %p206 = por %p204, %p205
      %p208 = scmp.ne.s32.totalorder %s193, %s207
      %p209 = scmp.eq.s32.totalorder %s24, 0
      %p210 = por %p208, %p209
      %s212 = sadd.s32 %s211, 1
      %p215 = scmp.eq.s32.totalorder %s18, 3
      %p216 = scmp.ne.s32.totalorder %s211, %s213
      %p217 = scmp.eq.s32.totalorder %s18, 0
      %p218 = por %p216, %p217
      %p219 = scmp.ne.s32.totalorder %s211, %s213
      %p220 = scmp.eq.s32.totalorder %s23, 3
      %p221 = por %p219, %p220
      %p222 = scmp.ne.s32.totalorder %s213, %s214
      %p223 = scmp.eq.s32.totalorder %s23, 0
      %p224 = por %p222, %p223
      %p225 = scmp.ne.s32.totalorder %s213, %s214
      %p226 = scmp.eq.s32.totalorder %s24, 3
      %p227 = por %p225, %p226
      %p229 = scmp.ne.s32.totalorder %s214, %s228
      %p230 = scmp.eq.s32.totalorder %s24, 0
      %p231 = por %p229, %p230
      %s232 = ssub.s32 %s25, %s37
      %s233 = ssub.s32 %s26, %s33
      %s234 = sor.u32 %s232, %s233
      %p235 = scmp.eq.s32.totalorder %s234, 0
      %s237 = sadd.s32 %s236, 1
      %s238 = scalar_select %p235, %s236, %s237
      %p241 = pneg %p235
      %p242 = scmp.eq.s32.totalorder %s18, 3
      %p243 = por %p241, %p242
      %p244 = scmp.ne.s32.totalorder %s236, %s239
      %p245 = scmp.eq.s32.totalorder %s18, 0
      %p246 = por %p244, %p245
      %p247 = scmp.ne.s32.totalorder %s236, %s239
      %p248 = scmp.eq.s32.totalorder %s23, 3
      %p249 = por %p247, %p248
      %p250 = scmp.ne.s32.totalorder %s239, %s240
      %p251 = scmp.eq.s32.totalorder %s23, 0
      %p252 = por %p250, %p251
      %p253 = scmp.ne.s32.totalorder %s239, %s240
      %p254 = scmp.eq.s32.totalorder %s24, 3
      %p255 = por %p253, %p254
      %p257 = scmp.ne.s32.totalorder %s240, %s256
      %p258 = scmp.eq.s32.totalorder %s24, 0
      %p259 = por %p257, %p258
      %p260 = scmp.le.s32.totalorder 1, %s18
      %p261 = scmp.lt.s32.totalorder %s18, 5
      %p262 = pnand %p260, %p261
      %p263 = pneg %p262
      // Predicated region
      $region9: #{inception_forward.1} parent=5 // pred_check
        _
      $region10: #{inception_forward.1} parent=5 // pred_check_branch
        %265 = sbr.rel (%p262) target = $region12
      $region11: #{inception_forward.1} parent=5 // pred_region
        %s266 = ssub.s32 %s18, 1
        // Predicated region
        $region13: #{inception_forward.1} parent=11 // pred_check
          %p267 = pneg %p77
        $region14: #{inception_forward.1} parent=11 // pred_check_branch
          %269 = sbr.rel (%p267) target = $region16
        $region15: #{inception_forward.1} parent=11 // pred_region
          _
        $region16: #{inception_forward.1} parent=11 // pred_fallthru
          _
        // Predicated region
        $region17: #{inception_forward.1} parent=11 // pred_check
          %p270 = pneg %p98
        $region18: #{inception_forward.1} parent=11 // pred_check_branch
          %272 = sbr.rel (%p270) target = $region20
        $region19: #{inception_forward.1} parent=11 // pred_region
          _
        $region20: #{inception_forward.1} parent=11 // pred_fallthru
          _
        // Predicated region
        $region21: #{inception_forward.1} parent=11 // pred_check
          %p273 = pneg %p119
        $region22: #{inception_forward.1} parent=11 // pred_check_branch
          %275 = sbr.rel (%p273) target = $region24
        $region23: #{inception_forward.1} parent=11 // pred_region
          _
        $region24: #{inception_forward.1} parent=11 // pred_fallthru
          _
        // Predicated region
        $region25: #{inception_forward.1} parent=11 // pred_check
          %p276 = pneg %p140
        $region26: #{inception_forward.1} parent=11 // pred_check_branch
          %278 = sbr.rel (%p276) target = $region28
        $region27: #{inception_forward.1} parent=11 // pred_region
          _
        $region28: #{inception_forward.1} parent=11 // pred_fallthru
          _
        // Predicated region
        $region29: #{inception_forward.1} parent=11 // pred_check
          %p279 = pneg %p161
        $region30: #{inception_forward.1} parent=11 // pred_check_branch
          %281 = sbr.rel (%p279) target = $region32
        $region31: #{inception_forward.1} parent=11 // pred_region
          _
        $region32: #{inception_forward.1} parent=11 // pred_fallthru
          _
        // Predicated region
        $region33: #{inception_forward.1} parent=11 // pred_check
          %p282 = pneg %p182
        $region34: #{inception_forward.1} parent=11 // pred_check_branch
          %284 = sbr.rel (%p282) target = $region36
        $region35: #{inception_forward.1} parent=11 // pred_region
          _
        $region36: #{inception_forward.1} parent=11 // pred_fallthru
          _
        // Predicated region
        $region37: #{inception_forward.1} parent=11 // pred_check
          %p285 = pneg %p203
        $region38: #{inception_forward.1} parent=11 // pred_check_branch
          %287 = sbr.rel (%p285) target = $region40
        $region39: #{inception_forward.1} parent=11 // pred_region
          _
        $region40: #{inception_forward.1} parent=11 // pred_fallthru
          _
        // Predicated region
        $region41: #{inception_forward.1} parent=11 // pred_check
          %p288 = pneg %p224
        $region42: #{inception_forward.1} parent=11 // pred_check_branch
          %290 = sbr.rel (%p288) target = $region44
        $region43: #{inception_forward.1} parent=11 // pred_region
          _
        $region44: #{inception_forward.1} parent=11 // pred_fallthru
          _
      $region12: #{inception_forward.1} parent=5 // pred_fallthru
        _
      %p291 = scmp.lt.s32.totalorder %s18, 4
      // Predicated region
      $region45: #{inception_forward.1} parent=5 // pred_check
        %p292 = pneg %p291
      $region46: #{inception_forward.1} parent=5 // pred_check_branch
        %294 = sbr.rel (%p292) target = $region48
      $region47: #{inception_forward.1} parent=5 // pred_region
        // Predicated region
        $region49: #{inception_forward.1} parent=47 // pred_check
          %p295 = pneg %p50
        $region50: #{inception_forward.1} parent=47 // pred_check_branch
          %297 = sbr.rel (%p295) target = $region52
        $region51: #{inception_forward.1} parent=47 // pred_region
          %p298 = scmp.lt.s32.totalorder %s25, 1
          %s299 = scalar_select %p298, %s25, 1
          %s300 = smul.addr %s299, 32
          %s301 = smul.addr %s300, 8
          %s302 = scalar_lea.vmem %s0, %s301
        $region52: #{inception_forward.1} parent=47 // pred_fallthru
          _
      $region48: #{inception_forward.1} parent=5 // pred_fallthru
        _
      %p303 = scmp.le.s32.totalorder 1, %s18
      %p304 = scmp.lt.s32.totalorder %s18, 5
      %p305 = pnand %p303, %p304
      %p306 = pneg %p305
      // Predicated region
      $region53: #{inception_forward.1} parent=5 // pred_check
        _
      $region54: #{inception_forward.1} parent=5 // pred_check_branch
        %308 = sbr.rel (%p305) target = $region56
      $region55: #{inception_forward.1} parent=5 // pred_region
        %s309 = ssub.s32 %s18, 1
        %p310 = scmp.lt.s32.totalorder %s27, 1
        %s311 = scalar_select %p310, %s27, 1
        %s312 = smul.addr %s311, 32
        %s313 = smul.addr %s312, 8
        %s314 = scalar_lea.vmem %s0, %s313
        %p315 = pneg %p56
        %p316 = pneg %p53
        %p317 = pneg %p77
        %p318 = pneg %p74
        %p319 = pneg %p98
        %p320 = pneg %p95
        %p321 = pneg %p119
        %p322 = pneg %p116
        %p323 = pneg %p140
        %p324 = pneg %p137
        %p325 = pneg %p161
        %p326 = pneg %p158
        %p327 = pneg %p182
        %p328 = pneg %p179
        %p329 = pneg %p203
        %p330 = pneg %p200
        %p331 = pneg %p224
        %p332 = pneg %p221
        %p333 = pneg %p252
        %p334 = pneg %p249
        %s335 = sand.u32 %s239, 1
        %s336 = scalar_lea.sflag [#allocation5], %s335
        %s337 = sand.u32 %s239, 1
        %s338 = smul.addr %s337, 128
        %s339 = scalar_lea.vmem [#allocation4], %s338
        %p340 = scmp.lt.s32.totalorder %s27, 1
        %s341 = scalar_select %p340, %s27, 1
        %s342 = smul.addr %s341, 32
        %s343 = smul.addr %s342, 8
        %s344 = scalar_lea.vmem %s0, %s343
        %s345 = smul.u32 8, %s28
        %p347 = scmp.eq.s32.totalorder %s28, 0
        // Predicated region
        $region57: #{inception_forward.1} parent=55 // pred_check
          %p348 = pneg %p347
        $region58: #{inception_forward.1} parent=55 // pred_check_branch
          %350 = sbr.rel (%p348) target = $region60
        $region59: #{inception_forward.1} parent=55 // pred_region
          %vm351 = vcmask 130048
          %352 = vst.msk [vmem:[#allocation2] sm:$0xff] %vm351, 0.0
          %353 = vst.msk [vmem:[#allocation2 + $0x8] sm:$0xff] %vm351, 0.0
          %vm354 = vcmask 125952
          %355 = vst.msk [vmem:[#allocation2 + $0x10] sm:$0xf] %vm354, 0.0
          %356 = vst.msk [vmem:[#allocation2 + $0x18] sm:$0xff] %vm351, 0.0
          %357 = vst.msk [vmem:[#allocation2 + $0x20] sm:$0xff] %vm351, 0.0
          %358 = vst.msk [vmem:[#allocation2 + $0x28] sm:$0xf] %vm354, 0.0
          %359 = vst.msk [vmem:[#allocation2 + $0x30] sm:$0xff] %vm351, 0.0
          %360 = vst.msk [vmem:[#allocation2 + $0x38] sm:$0xff] %vm351, 0.0
          %361 = vst.msk [vmem:[#allocation2 + $0x40] sm:$0xf] %vm354, 0.0
          %362 = vst.msk [vmem:[#allocation2 + $0x48] sm:$0xff] %vm351, 0.0
          %363 = vst.msk [vmem:[#allocation2 + $0x50] sm:$0xff] %vm351, 0.0
          %364 = vst.msk [vmem:[#allocation2 + $0x58] sm:$0xf] %vm354, 0.0
          %365 = vst.msk [vmem:[#allocation2 + $0x60] sm:$0xff] %vm351, 0.0
          %366 = vst.msk [vmem:[#allocation2 + $0x68] sm:$0xff] %vm351, 0.0
          %367 = vst.msk [vmem:[#allocation2 + $0x70] sm:$0xf] %vm354, 0.0
          %368 = vst.msk [vmem:[#allocation2 + $0x78] sm:$0xff] %vm351, 0.0
          %369 = vst.msk [vmem:[#allocation2 + $0x80] sm:$0xff] %vm351, 0.0
          %370 = vst.msk [vmem:[#allocation2 + $0x88] sm:$0xf] %vm354, 0.0
          %371 = vst.msk [vmem:[#allocation2 + $0x90] sm:$0xff] %vm351, 0.0
          %372 = vst.msk [vmem:[#allocation2 + $0x98] sm:$0xff] %vm351, 0.0
          %373 = vst.msk [vmem:[#allocation2 + $0xa0] sm:$0xf] %vm354, 0.0
          %374 = vst.msk [vmem:[#allocation2 + $0xa8] sm:$0xff] %vm351, 0.0
          %375 = vst.msk [vmem:[#allocation2 + $0xb0] sm:$0xff] %vm351, 0.0
          %376 = vst.msk [vmem:[#allocation2 + $0xb8] sm:$0xf] %vm354, 0.0
          %377 = vst.msk [vmem:[#allocation2 + $0xc0] sm:$0xff] %vm351, 0.0
          %378 = vst.msk [vmem:[#allocation2 + $0xc8] sm:$0xff] %vm351, 0.0
          %379 = vst.msk [vmem:[#allocation2 + $0xd0] sm:$0xf] %vm354, 0.0
          %380 = vst.msk [vmem:[#allocation2 + $0xd8] sm:$0xff] %vm351, 0.0
          %381 = vst.msk [vmem:[#allocation2 + $0xe0] sm:$0xff] %vm351, 0.0
          %382 = vst.msk [vmem:[#allocation2 + $0xe8] sm:$0xf] %vm354, 0.0
          %383 = vst.msk [vmem:[#allocation2 + $0xf0] sm:$0xff] %vm351, 0.0
          %384 = vst.msk [vmem:[#allocation2 + $0xf8] sm:$0xff] %vm351, 0.0
          %385 = vst.msk [vmem:[#allocation2 + $0x100] sm:$0xf] %vm354, 0.0
          %386 = vst.msk [vmem:[#allocation2 + $0x108] sm:$0xff] %vm351, 0.0
          %387 = vst.msk [vmem:[#allocation2 + $0x110] sm:$0xff] %vm351, 0.0
          %388 = vst.msk [vmem:[#allocation2 + $0x118] sm:$0xf] %vm354, 0.0
          %389 = vst.msk [vmem:[#allocation2 + $0x120] sm:$0xff] %vm351, 0.0
          %390 = vst.msk [vmem:[#allocation2 + $0x128] sm:$0xff] %vm351, 0.0
          %391 = vst.msk [vmem:[#allocation2 + $0x130] sm:$0xf] %vm354, 0.0
          %392 = vst.msk [vmem:[#allocation2 + $0x138] sm:$0xff] %vm351, 0.0
          %393 = vst.msk [vmem:[#allocation2 + $0x140] sm:$0xff] %vm351, 0.0
          %394 = vst.msk [vmem:[#allocation2 + $0x148] sm:$0xf] %vm354, 0.0
          %395 = vst.msk [vmem:[#allocation2 + $0x150] sm:$0xff] %vm351, 0.0
          %396 = vst.msk [vmem:[#allocation2 + $0x158] sm:$0xff] %vm351, 0.0
          %397 = vst.msk [vmem:[#allocation2 + $0x160] sm:$0xf] %vm354, 0.0
          %398 = vst.msk [vmem:[#allocation2 + $0x168] sm:$0xff] %vm351, 0.0
          %399 = vst.msk [vmem:[#allocation2 + $0x170] sm:$0xff] %vm351, 0.0
          %400 = vst.msk [vmem:[#allocation2 + $0x178] sm:$0xf] %vm354, 0.0
          %401 = vst.msk [vmem:[#allocation2 + $0x180] sm:$0xff] %vm351, 0.0
          %402 = vst.msk [vmem:[#allocation2 + $0x188] sm:$0xff] %vm351, 0.0
          %403 = vst.msk [vmem:[#allocation2 + $0x190] sm:$0xf] %vm354, 0.0
          %404 = vst.msk [vmem:[#allocation2 + $0x198] sm:$0xff] %vm351, 0.0
          %405 = vst.msk [vmem:[#allocation2 + $0x1a0] sm:$0xff] %vm351, 0.0
          %406 = vst.msk [vmem:[#allocation2 + $0x1a8] sm:$0xf] %vm354, 0.0
          %407 = vst.msk [vmem:[#allocation2 + $0x1b0] sm:$0xff] %vm351, 0.0
          %408 = vst.msk [vmem:[#allocation2 + $0x1b8] sm:$0xff] %vm351, 0.0
          %409 = vst.msk [vmem:[#allocation2 + $0x1c0] sm:$0xf] %vm354, 0.0
          %410 = vst.msk [vmem:[#allocation2 + $0x1c8] sm:$0xff] %vm351, 0.0
          %411 = vst.msk [vmem:[#allocation2 + $0x1d0] sm:$0xff] %vm351, 0.0
          %412 = vst.msk [vmem:[#allocation2 + $0x1d8] sm:$0xf] %vm354, 0.0
          %vm413 = vcmask 31744
          %414 = vst.msk [vmem:[#allocation3] sm:$0xff] %vm413, -1e+30
          %415 = vst.msk [vmem:[#allocation3 + $0x8] sm:$0xff] %vm413, -1e+30
          %vm416 = vcmask 25600
          %417 = vst.msk [vmem:[#allocation3 + $0x10] sm:$0x3] %vm416, -1e+30
          %418 = vst.msk [vmem:[#allocation3 + $0x18] sm:$0xff] %vm413, -1e+30
          %419 = vst.msk [vmem:[#allocation3 + $0x20] sm:$0xff] %vm413, -1e+30
          %420 = vst.msk [vmem:[#allocation3 + $0x28] sm:$0x3] %vm416, -1e+30
          %421 = vst.msk [vmem:[#allocation3 + $0x30] sm:$0xff] %vm413, -1e+30
          %422 = vst.msk [vmem:[#allocation3 + $0x38] sm:$0xff] %vm413, -1e+30
          %423 = vst.msk [vmem:[#allocation3 + $0x40] sm:$0x3] %vm416, -1e+30
          %424 = vst.msk [vmem:[#allocation3 + $0x48] sm:$0xff] %vm413, -1e+30
          %425 = vst.msk [vmem:[#allocation3 + $0x50] sm:$0xff] %vm413, -1e+30
          %426 = vst.msk [vmem:[#allocation3 + $0x58] sm:$0x3] %vm416, -1e+30
          %427 = vst.msk [vmem:[#allocation3 + $0x60] sm:$0xff] %vm413, -1e+30
          %428 = vst.msk [vmem:[#allocation3 + $0x68] sm:$0xff] %vm413, -1e+30
          %429 = vst.msk [vmem:[#allocation3 + $0x70] sm:$0x3] %vm416, -1e+30
          %430 = vst.msk [vmem:[#allocation3 + $0x78] sm:$0xff] %vm413, -1e+30
          %431 = vst.msk [vmem:[#allocation3 + $0x80] sm:$0xff] %vm413, -1e+30
          %432 = vst.msk [vmem:[#allocation3 + $0x88] sm:$0x3] %vm416, -1e+30
          %433 = vst.msk [vmem:[#allocation3 + $0x90] sm:$0xff] %vm413, -1e+30
          %434 = vst.msk [vmem:[#allocation3 + $0x98] sm:$0xff] %vm413, -1e+30
          %435 = vst.msk [vmem:[#allocation3 + $0xa0] sm:$0x3] %vm416, -1e+30
          %436 = vst.msk [vmem:[#allocation3 + $0xa8] sm:$0xff] %vm413, -1e+30
          %437 = vst.msk [vmem:[#allocation3 + $0xb0] sm:$0xff] %vm413, -1e+30
          %438 = vst.msk [vmem:[#allocation3 + $0xb8] sm:$0x3] %vm416, -1e+30
          %439 = vst.msk [vmem:[#allocation3 + $0xc0] sm:$0xff] %vm413, -1e+30
          %440 = vst.msk [vmem:[#allocation3 + $0xc8] sm:$0xff] %vm413, -1e+30
          %441 = vst.msk [vmem:[#allocation3 + $0xd0] sm:$0x3] %vm416, -1e+30
          %442 = vst.msk [vmem:[#allocation3 + $0xd8] sm:$0xff] %vm413, -1e+30
          %443 = vst.msk [vmem:[#allocation3 + $0xe0] sm:$0xff] %vm413, -1e+30
          %444 = vst.msk [vmem:[#allocation3 + $0xe8] sm:$0x3] %vm416, -1e+30
          %445 = vst.msk [vmem:[#allocation3 + $0xf0] sm:$0xff] %vm413, -1e+30
          %446 = vst.msk [vmem:[#allocation3 + $0xf8] sm:$0xff] %vm413, -1e+30
          %447 = vst.msk [vmem:[#allocation3 + $0x100] sm:$0x3] %vm416, -1e+30
          %448 = vst.msk [vmem:[#allocation3 + $0x108] sm:$0xff] %vm413, -1e+30
          %449 = vst.msk [vmem:[#allocation3 + $0x110] sm:$0xff] %vm413, -1e+30
          %450 = vst.msk [vmem:[#allocation3 + $0x118] sm:$0x3] %vm416, -1e+30
          %451 = vst.msk [vmem:[#allocation3 + $0x120] sm:$0xff] %vm413, -1e+30
          %452 = vst.msk [vmem:[#allocation3 + $0x128] sm:$0xff] %vm413, -1e+30
          %453 = vst.msk [vmem:[#allocation3 + $0x130] sm:$0x3] %vm416, -1e+30
          %454 = vst.msk [vmem:[#allocation3 + $0x138] sm:$0xff] %vm413, -1e+30
          %455 = vst.msk [vmem:[#allocation3 + $0x140] sm:$0xff] %vm413, -1e+30
          %456 = vst.msk [vmem:[#allocation3 + $0x148] sm:$0x3] %vm416, -1e+30
          %457 = vst.msk [vmem:[#allocation3 + $0x150] sm:$0xff] %vm413, -1e+30
          %458 = vst.msk [vmem:[#allocation3 + $0x158] sm:$0xff] %vm413, -1e+30
          %459 = vst.msk [vmem:[#allocation3 + $0x160] sm:$0x3] %vm416, -1e+30
          %460 = vst.msk [vmem:[#allocation3 + $0x168] sm:$0xff] %vm413, -1e+30
          %461 = vst.msk [vmem:[#allocation3 + $0x170] sm:$0xff] %vm413, -1e+30
          %462 = vst.msk [vmem:[#allocation3 + $0x178] sm:$0x3] %vm416, -1e+30
          %463 = vst.msk [vmem:[#allocation3 + $0x180] sm:$0xff] %vm413, -1e+30
          %464 = vst.msk [vmem:[#allocation3 + $0x188] sm:$0xff] %vm413, -1e+30
          %465 = vst.msk [vmem:[#allocation3 + $0x190] sm:$0x3] %vm416, -1e+30
          %466 = vst.msk [vmem:[#allocation3 + $0x198] sm:$0xff] %vm413, -1e+30
          %467 = vst.msk [vmem:[#allocation3 + $0x1a0] sm:$0xff] %vm413, -1e+30
          %468 = vst.msk [vmem:[#allocation3 + $0x1a8] sm:$0x3] %vm416, -1e+30
          %v469 = vld [vmem:[%s344] sm:$0xff]
          %v470 = vld [vmem:[%s344 + $0x8] sm:$0xff]
          %v471 = vld [vmem:[%s344 + $0x10] sm:$0xff]
          %v472 = vld [vmem:[%s344 + $0x18] sm:$0xff]
          %v473 = vld [vmem:[%s344 + $0x20] sm:$0xff]
          %v474 = vld [vmem:[%s344 + $0x28] sm:$0xff]
          %v475 = vld [vmem:[%s344 + $0x30] sm:$0xff]
          %v476 = vld [vmem:[%s344 + $0x38] sm:$0xff]
          %v477 = vld [vmem:[%s344 + $0x40] sm:$0xff]
          %v478 = vld [vmem:[%s344 + $0x48] sm:$0xff]
          %v479 = vld [vmem:[%s344 + $0x50] sm:$0xff]
          %v480 = vld [vmem:[%s344 + $0x58] sm:$0xff]
          %v481 = vld [vmem:[%s344 + $0x60] sm:$0xff]
          %v482 = vld [vmem:[%s344 + $0x68] sm:$0xff]
          %v483 = vld [vmem:[%s344 + $0x70] sm:$0xff]
          %v484 = vld [vmem:[%s344 + $0x78] sm:$0xff]
          %v485 = vld [vmem:[%s344 + $0x80] sm:$0xff]
          %v486 = vld [vmem:[%s344 + $0x88] sm:$0xff]
          %v487 = vld [vmem:[%s344 + $0x90] sm:$0xff]
          %v488 = vld [vmem:[%s344 + $0x98] sm:$0xff]
          %v489 = vld [vmem:[%s344 + $0xa0] sm:$0xff]
          %v490 = vld [vmem:[%s344 + $0xa8] sm:$0xff]
          %v491 = vld [vmem:[%s344 + $0xb0] sm:$0xff]
          %v492 = vld [vmem:[%s344 + $0xb8] sm:$0xff]
          %v493 = vld [vmem:[%s344 + $0xc0] sm:$0xff]
          %v494 = vld [vmem:[%s344 + $0xc8] sm:$0xff]
          %v495 = vld [vmem:[%s344 + $0xd0] sm:$0xff]
          %v496 = vld [vmem:[%s344 + $0xd8] sm:$0xff]
          %v497 = vld [vmem:[%s344 + $0xe0] sm:$0xff]
          %v498 = vld [vmem:[%s344 + $0xe8] sm:$0xff]
          %v499 = vld [vmem:[%s344 + $0xf0] sm:$0xff]
          %v500 = vld [vmem:[%s344 + $0xf8] sm:$0xff]
          %s501 = scalar_lea.vmem [#allocation3], 24
          %502 = vst.msk [vmem:[%s501 + $0x1] sm:$0xff] %vm413, %v469
          %503 = vst.msk [vmem:[%s501 + $0x9] sm:$0xff] %vm413, %v470
          %504 = vst.msk [vmem:[%s501 + $0x19] sm:$0xff] %vm413, %v471
          %505 = vst.msk [vmem:[%s501 + $0x21] sm:$0xff] %vm413, %v472
          %506 = vst.msk [vmem:[%s501 + $0x31] sm:$0xff] %vm413, %v473
          %507 = vst.msk [vmem:[%s501 + $0x39] sm:$0xff] %vm413, %v474
          %508 = vst.msk [vmem:[%s501 + $0x49] sm:$0xff] %vm413, %v475
          %509 = vst.msk [vmem:[%s501 + $0x51] sm:$0xff] %vm413, %v476
          %510 = vst.msk [vmem:[%s501 + $0x61] sm:$0xff] %vm413, %v477
          %511 = vst.msk [vmem:[%s501 + $0x69] sm:$0xff] %vm413, %v478
          %512 = vst.msk [vmem:[%s501 + $0x79] sm:$0xff] %vm413, %v479
          %513 = vst.msk [vmem:[%s501 + $0x81] sm:$0xff] %vm413, %v480
          %514 = vst.msk [vmem:[%s501 + $0x91] sm:$0xff] %vm413, %v481
          %515 = vst.msk [vmem:[%s501 + $0x99] sm:$0xff] %vm413, %v482
          %516 = vst.msk [vmem:[%s501 + $0xa9] sm:$0xff] %vm413, %v483
          %517 = vst.msk [vmem:[%s501 + $0xb1] sm:$0xff] %vm413, %v484
          %518 = vst.msk [vmem:[%s501 + $0xc1] sm:$0xff] %vm413, %v485
          %519 = vst.msk [vmem:[%s501 + $0xc9] sm:$0xff] %vm413, %v486
          %520 = vst.msk [vmem:[%s501 + $0xd9] sm:$0xff] %vm413, %v487
          %521 = vst.msk [vmem:[%s501 + $0xe1] sm:$0xff] %vm413, %v488
          %522 = vst.msk [vmem:[%s501 + $0xf1] sm:$0xff] %vm413, %v489
          %523 = vst.msk [vmem:[%s501 + $0xf9] sm:$0xff] %vm413, %v490
          %524 = vst.msk [vmem:[%s501 + $0x109] sm:$0xff] %vm413, %v491
          %525 = vst.msk [vmem:[%s501 + $0x111] sm:$0xff] %vm413, %v492
          %526 = vst.msk [vmem:[%s501 + $0x121] sm:$0xff] %vm413, %v493
          %527 = vst.msk [vmem:[%s501 + $0x129] sm:$0xff] %vm413, %v494
          %528 = vst.msk [vmem:[%s501 + $0x139] sm:$0xff] %vm413, %v495
          %529 = vst.msk [vmem:[%s501 + $0x141] sm:$0xff] %vm413, %v496
          %530 = vst.msk [vmem:[%s501 + $0x151] sm:$0xff] %vm413, %v497
          %531 = vst.msk [vmem:[%s501 + $0x159] sm:$0xff] %vm413, %v498
          %532 = vst.msk [vmem:[%s501 + $0x169] sm:$0xff] %vm413, %v499
          %533 = vst.msk [vmem:[%s501 + $0x171] sm:$0xff] %vm413, %v500
          %v534 = vpack.c.bf16 %v470, %v469
          %v535 = vpack.c.bf16 %v472, %v471
          %v536 = vpack.c.bf16 %v474, %v473
          %v537 = vpack.c.bf16 %v476, %v475
          %v538 = vpack.c.bf16 %v478, %v477
          %v539 = vpack.c.bf16 %v480, %v479
          %v540 = vpack.c.bf16 %v482, %v481
          %v541 = vpack.c.bf16 %v484, %v483
          %v542 = vpack.c.bf16 %v486, %v485
          %v543 = vpack.c.bf16 %v488, %v487
          %v544 = vpack.c.bf16 %v490, %v489
          %v545 = vpack.c.bf16 %v492, %v491
          %v546 = vpack.c.bf16 %v494, %v493
          %v547 = vpack.c.bf16 %v496, %v495
          %v548 = vpack.c.bf16 %v498, %v497
          %v549 = vpack.c.bf16 %v500, %v499
          %v550 = vld [vmem:[%s1] sm:$0x3]
          %v551 = vld [vmem:[%s2] sm:$0x1]
          %v553 = vlaneseq
          %v554 = vshrl.u32 %v553, 7
          %v555 = vsub.s32 0, %v554
          %v556 = vrot.slane %v551, %v555
          %v559 = vsel %vm413, %v534, 0
          %v562 = vsel %vm413, %v535, 0
          %v565 = vsel %vm413, %v536, 0
          %v568 = vsel %vm413, %v537, 0
          %v571 = vsel %vm413, %v538, 0
          %v574 = vsel %vm413, %v539, 0
          %v577 = vsel %vm413, %v540, 0
          %v580 = vsel %vm413, %v541, 0
          %v583 = vsel %vm413, %v542, 0
          %v586 = vsel %vm413, %v543, 0
          %v589 = vsel %vm413, %v544, 0
          %v592 = vsel %vm413, %v545, 0
          %v595 = vsel %vm413, %v546, 0
          %v598 = vsel %vm413, %v547, 0
          %v601 = vsel %vm413, %v548, 0
          %v604 = vsel %vm413, %v549, 0
          %vm606 = vcmask 1041408
          %v608 = vsel %vm606, %v550, 0
          %610 = vmatprep.subr.bf16.mxu0 0
          %611 = vmatpush1.bf16.msra.mxu0 %v608
          %612 = vmatprep.subr.bf16.mxu0 0
          %613 = vmatpush1.bf16.msra.mxu0 0
          %614 = vmatprep.subr.bf16.mxu0 0
          %615 = vmatpush1.bf16.msra.mxu0 0
          %616 = vmatprep.subr.bf16.mxu0 0
          %617 = vmatpush1.bf16.msra.mxu0 0
          %618 = vmatprep.subr.bf16.mxu0 0
          %619 = vmatpush1.bf16.msra.mxu0 0
          %620 = vmatprep.subr.bf16.mxu0 0
          %621 = vmatpush1.bf16.msra.mxu0 0
          %622 = vmatprep.subr.bf16.mxu0 0
          %623 = vmatpush1.bf16.msra.mxu0 0
          %624 = vmatprep.subr.bf16.mxu0 0
          %625 = vmatpush1.bf16.msra.mxu0 0
          %626 = vmatprep.subr.bf16.mxu0 0
          %627 = vmatpush1.bf16.msra.mxu0 0
          %628 = vmatprep.subr.bf16.mxu0 0
          %629 = vmatpush1.bf16.msra.mxu0 0
          %630 = vmatprep.subr.bf16.mxu0 0
          %631 = vmatpush1.bf16.msra.mxu0 0
          %632 = vmatprep.subr.bf16.mxu0 0
          %633 = vmatpush1.bf16.msra.mxu0 0
          %634 = vmatprep.subr.bf16.mxu0 0
          %635 = vmatpush1.bf16.msra.mxu0 0
          %636 = vmatprep.subr.bf16.mxu0 0
          %637 = vmatpush1.bf16.msra.mxu0 0
          %638 = vmatprep.subr.bf16.mxu0 0
          %639 = vmatpush1.bf16.msra.mxu0 0
          %640 = vmatprep.subr.bf16.mxu0 0
          %641 = vmatpush1.bf16.msra.mxu0 0
          %642 = vmatprep.mubr.bf16.mxu0 0
          %643 = vmatmul.mubr.bf16.gmra.mrb[0].mxu0 %v559
          %v644 = vpop.f32.mrb[0].mxu0
          %v645 = vadd.f32 %v556, %v644
          %v646 = vpop.f32.mrb[0].mxu0
          %v647 = vpop.f32.mrb[0].mxu0
          %v648 = vadd.f32 %v556, %v647
          %v649 = vpop.f32.mrb[0].mxu0
          %650 = vmatprep.mubr.bf16.mxu0 0
          %651 = vmatmul.mubr.bf16.gmra.mrb[0].mxu0 %v562
          %v652 = vpop.f32.mrb[0].mxu0
          %v653 = vadd.f32 %v556, %v652
          %v654 = vpop.f32.mrb[0].mxu0
          %v655 = vpop.f32.mrb[0].mxu0
          %v656 = vadd.f32 %v556, %v655
          %v657 = vpop.f32.mrb[0].mxu0
          %658 = vmatprep.mubr.bf16.mxu0 0
          %659 = vmatmul.mubr.bf16.gmra.mrb[0].mxu0 %v565
          %v660 = vpop.f32.mrb[0].mxu0
          %v661 = vadd.f32 %v556, %v660
          %v662 = vpop.f32.mrb[0].mxu0
          %v663 = vpop.f32.mrb[0].mxu0
          %v664 = vadd.f32 %v556, %v663
          %v665 = vpop.f32.mrb[0].mxu0
          %666 = vmatprep.mubr.bf16.mxu0 0
          %667 = vmatmul.mubr.bf16.gmra.mrb[0].mxu0 %v568
          %v668 = vpop.f32.mrb[0].mxu0
          %v669 = vadd.f32 %v556, %v668
          %v670 = vpop.f32.mrb[0].mxu0
          %v671 = vpop.f32.mrb[0].mxu0
          %v672 = vadd.f32 %v556, %v671
          %v673 = vpop.f32.mrb[0].mxu0
          %674 = vmatprep.mubr.bf16.mxu0 0
          %675 = vmatmul.mubr.bf16.gmra.mrb[0].mxu0 %v571
          %v676 = vpop.f32.mrb[0].mxu0
          %v677 = vadd.f32 %v556, %v676
          %v678 = vpop.f32.mrb[0].mxu0
          %v679 = vpop.f32.mrb[0].mxu0
          %v680 = vadd.f32 %v556, %v679
          %v681 = vpop.f32.mrb[0].mxu0
          %682 = vmatprep.mubr.bf16.mxu0 0
          %683 = vmatmul.mubr.bf16.gmra.mrb[0].mxu0 %v574
          %v684 = vpop.f32.mrb[0].mxu0
          %v685 = vadd.f32 %v556, %v684
          %v686 = vpop.f32.mrb[0].mxu0
          %v687 = vpop.f32.mrb[0].mxu0
          %v688 = vadd.f32 %v556, %v687
          %v689 = vpop.f32.mrb[0].mxu0
          %690 = vmatprep.mubr.bf16.mxu0 0
          %691 = vmatmul.mubr.bf16.gmra.mrb[0].mxu0 %v577
          %v692 = vpop.f32.mrb[0].mxu0
          %v693 = vadd.f32 %v556, %v692
          %v694 = vpop.f32.mrb[0].mxu0
          %v695 = vpop.f32.mrb[0].mxu0
          %v696 = vadd.f32 %v556, %v695
          %v697 = vpop.f32.mrb[0].mxu0
          %698 = vmatprep.mubr.bf16.mxu0 0
          %699 = vmatmul.mubr.bf16.gmra.mrb[0].mxu0 %v580
          %v700 = vpop.f32.mrb[0].mxu0
          %v701 = vadd.f32 %v556, %v700
          %v702 = vpop.f32.mrb[0].mxu0
          %v703 = vpop.f32.mrb[0].mxu0
          %v704 = vadd.f32 %v556, %v703
          %v705 = vpop.f32.mrb[0].mxu0
          %706 = vmatprep.mubr.bf16.mxu0 0
          %707 = vmatmul.mubr.bf16.gmra.mrb[0].mxu0 %v583
          %v708 = vpop.f32.mrb[0].mxu0
          %v709 = vadd.f32 %v556, %v708
          %v710 = vpop.f32.mrb[0].mxu0
          %v711 = vpop.f32.mrb[0].mxu0
          %v712 = vadd.f32 %v556, %v711
          %v713 = vpop.f32.mrb[0].mxu0
          %714 = vmatprep.mubr.bf16.mxu0 0
          %715 = vmatmul.mubr.bf16.gmra.mrb[0].mxu0 %v586
          %v716 = vpop.f32.mrb[0].mxu0
          %v717 = vadd.f32 %v556, %v716
          %v718 = vpop.f32.mrb[0].mxu0
          %v719 = vpop.f32.mrb[0].mxu0
          %v720 = vadd.f32 %v556, %v719
          %v721 = vpop.f32.mrb[0].mxu0
          %722 = vmatprep.mubr.bf16.mxu0 0
          %723 = vmatmul.mubr.bf16.gmra.mrb[0].mxu0 %v589
          %v724 = vpop.f32.mrb[0].mxu0
          %v725 = vadd.f32 %v556, %v724
          %v726 = vpop.f32.mrb[0].mxu0
          %v727 = vpop.f32.mrb[0].mxu0
          %v728 = vadd.f32 %v556, %v727
          %v729 = vpop.f32.mrb[0].mxu0
          %730 = vmatprep.mubr.bf16.mxu0 0
          %731 = vmatmul.mubr.bf16.gmra.mrb[0].mxu0 %v592
          %v732 = vpop.f32.mrb[0].mxu0
          %v733 = vadd.f32 %v556, %v732
          %v734 = vpop.f32.mrb[0].mxu0
          %v735 = vpop.f32.mrb[0].mxu0
          %v736 = vadd.f32 %v556, %v735
          %v737 = vpop.f32.mrb[0].mxu0
          %738 = vmatprep.mubr.bf16.mxu0 0
          %739 = vmatmul.mubr.bf16.gmra.mrb[0].mxu0 %v595
          %v740 = vpop.f32.mrb[0].mxu0
          %v741 = vadd.f32 %v556, %v740
          %v742 = vpop.f32.mrb[0].mxu0
          %v743 = vpop.f32.mrb[0].mxu0
          %v744 = vadd.f32 %v556, %v743
          %v745 = vpop.f32.mrb[0].mxu0
          %746 = vmatprep.mubr.bf16.mxu0 0
          %747 = vmatmul.mubr.bf16.gmra.mrb[0].mxu0 %v598
          %v748 = vpop.f32.mrb[0].mxu0
          %v749 = vadd.f32 %v556, %v748
          %v750 = vpop.f32.mrb[0].mxu0
          %v751 = vpop.f32.mrb[0].mxu0
          %v752 = vadd.f32 %v556, %v751
          %v753 = vpop.f32.mrb[0].mxu0
          %754 = vmatprep.mubr.bf16.mxu0 0
          %755 = vmatmul.mubr.bf16.gmra.mrb[0].mxu0 %v601
          %v756 = vpop.f32.mrb[0].mxu0
          %v757 = vadd.f32 %v556, %v756
          %v758 = vpop.f32.mrb[0].mxu0
          %v759 = vpop.f32.mrb[0].mxu0
          %v760 = vadd.f32 %v556, %v759
          %v761 = vpop.f32.mrb[0].mxu0
          %762 = vmatprep.mubr.bf16.mxu0 0
          %763 = vmatmul.mubr.bf16.gmra.mrb[0].mxu0 %v604
          %v764 = vpop.f32.mrb[0].mxu0
          %v765 = vadd.f32 %v556, %v764
          %v766 = vpop.f32.mrb[0].mxu0
          %v767 = vpop.f32.mrb[0].mxu0
          %v768 = vadd.f32 %v556, %v767
          %v769 = vpop.f32.mrb[0].mxu0
          %770 = vdwg.mxu0
          %v771 = vmax.f32 %v645, 0.0
          %v772 = vmax.f32 %v648, 0.0
          %v773 = vmax.f32 %v653, 0.0
          %v774 = vmax.f32 %v656, 0.0
          %v775 = vmax.f32 %v661, 0.0
          %v776 = vmax.f32 %v664, 0.0
          %v777 = vmax.f32 %v669, 0.0
          %v778 = vmax.f32 %v672, 0.0
          %v779 = vmax.f32 %v677, 0.0
          %v780 = vmax.f32 %v680, 0.0
          %v781 = vmax.f32 %v685, 0.0
          %v782 = vmax.f32 %v688, 0.0
          %v783 = vmax.f32 %v693, 0.0
          %v784 = vmax.f32 %v696, 0.0
          %v785 = vmax.f32 %v701, 0.0
          %v786 = vmax.f32 %v704, 0.0
          %v787 = vmax.f32 %v709, 0.0
          %v788 = vmax.f32 %v712, 0.0
          %v789 = vmax.f32 %v717, 0.0
          %v790 = vmax.f32 %v720, 0.0
          %v791 = vmax.f32 %v725, 0.0
          %v792 = vmax.f32 %v728, 0.0
          %v793 = vmax.f32 %v733, 0.0
          %v794 = vmax.f32 %v736, 0.0
          %v795 = vmax.f32 %v741, 0.0
          %v796 = vmax.f32 %v744, 0.0
          %v797 = vmax.f32 %v749, 0.0
          %v798 = vmax.f32 %v752, 0.0
          %v799 = vmax.f32 %v757, 0.0
          %v800 = vmax.f32 %v760, 0.0
          %v801 = vmax.f32 %v765, 0.0
          %v802 = vmax.f32 %v768, 0.0
          %s803 = scalar_lea.vmem [#allocation2], 48
          %804 = vst.msk [vmem:[%s803 + $0x2] sm:$0xff] %vm351, %v771
          %805 = vst.msk [vmem:[%s803 + $0xa] sm:$0xff] %vm351, %v772
          %806 = vst.msk [vmem:[%s803 + $0x1a] sm:$0xff] %vm351, %v773
          %807 = vst.msk [vmem:[%s803 + $0x22] sm:$0xff] %vm351, %v774
          %808 = vst.msk [vmem:[%s803 + $0x32] sm:$0xff] %vm351, %v775
          %809 = vst.msk [vmem:[%s803 + $0x3a] sm:$0xff] %vm351, %v776
          %810 = vst.msk [vmem:[%s803 + $0x4a] sm:$0xff] %vm351, %v777
          %811 = vst.msk [vmem:[%s803 + $0x52] sm:$0xff] %vm351, %v778
          %812 = vst.msk [vmem:[%s803 + $0x62] sm:$0xff] %vm351, %v779
          %813 = vst.msk [vmem:[%s803 + $0x6a] sm:$0xff] %vm351, %v780
          %814 = vst.msk [vmem:[%s803 + $0x7a] sm:$0xff] %vm351, %v781
          %815 = vst.msk [vmem:[%s803 + $0x82] sm:$0xff] %vm351, %v782
          %816 = vst.msk [vmem:[%s803 + $0x92] sm:$0xff] %vm351, %v783
          %817 = vst.msk [vmem:[%s803 + $0x9a] sm:$0xff] %vm351, %v784
          %818 = vst.msk [vmem:[%s803 + $0xaa] sm:$0xff] %vm351, %v785
          %819 = vst.msk [vmem:[%s803 + $0xb2] sm:$0xff] %vm351, %v786
          %820 = vst.msk [vmem:[%s803 + $0xc2] sm:$0xff] %vm351, %v787
          %821 = vst.msk [vmem:[%s803 + $0xca] sm:$0xff] %vm351, %v788
          %822 = vst.msk [vmem:[%s803 + $0xda] sm:$0xff] %vm351, %v789
          %823 = vst.msk [vmem:[%s803 + $0xe2] sm:$0xff] %vm351, %v790
          %824 = vst.msk [vmem:[%s803 + $0xf2] sm:$0xff] %vm351, %v791
          %825 = vst.msk [vmem:[%s803 + $0xfa] sm:$0xff] %vm351, %v792
          %826 = vst.msk [vmem:[%s803 + $0x10a] sm:$0xff] %vm351, %v793
          %827 = vst.msk [vmem:[%s803 + $0x112] sm:$0xff] %vm351, %v794
          %828 = vst.msk [vmem:[%s803 + $0x122] sm:$0xff] %vm351, %v795
          %829 = vst.msk [vmem:[%s803 + $0x12a] sm:$0xff] %vm351, %v796
          %830 = vst.msk [vmem:[%s803 + $0x13a] sm:$0xff] %vm351, %v797
          %831 = vst.msk [vmem:[%s803 + $0x142] sm:$0xff] %vm351, %v798
          %832 = vst.msk [vmem:[%s803 + $0x152] sm:$0xff] %vm351, %v799
          %833 = vst.msk [vmem:[%s803 + $0x15a] sm:$0xff] %vm351, %v800
          %834 = vst.msk [vmem:[%s803 + $0x16a] sm:$0xff] %vm351, %v801
          %835 = vst.msk [vmem:[%s803 + $0x172] sm:$0xff] %vm351, %v802
        $region60: #{inception_forward.1} parent=55 // pred_fallthru
          _
        %s836 = smul.u32 %s28, 8
        %s837 = sadd.s32 %s836, 2
        %s838 = smul.u32 %s837, 24
        %s839 = scalar_lea.vmem [#allocation2], %s838
        %v840 = vld [vmem:[%s839 + $0x2] sm:$0xff]
        %v841 = vld [vmem:[%s839 + $0xa] sm:$0xff]
        %v842 = vld [vmem:[%s839 + $0x1a] sm:$0xff]
        %v843 = vld [vmem:[%s839 + $0x22] sm:$0xff]
        %v844 = vld [vmem:[%s839 + $0x32] sm:$0xff]
        %v845 = vld [vmem:[%s839 + $0x3a] sm:$0xff]
        %v846 = vld [vmem:[%s839 + $0x4a] sm:$0xff]
        %v847 = vld [vmem:[%s839 + $0x52] sm:$0xff]
        %v848 = vld [vmem:[%s839 + $0x62] sm:$0xff]
        %v849 = vld [vmem:[%s839 + $0x6a] sm:$0xff]
        %v850 = vld [vmem:[%s839 + $0x7a] sm:$0xff]
        %v851 = vld [vmem:[%s839 + $0x82] sm:$0xff]
        %v852 = vld [vmem:[%s839 + $0x92] sm:$0xff]
        %v853 = vld [vmem:[%s839 + $0x9a] sm:$0xff]
        %v854 = vld [vmem:[%s839 + $0xaa] sm:$0xff]
        %v855 = vld [vmem:[%s839 + $0xb2] sm:$0xff]
        %vm856 = vcmask 64512
        %857 = vst.msk [vmem:[%s339] sm:$0xff] %vm856, %v840
        %858 = vst.msk [vmem:[%s339 + $0x8] sm:$0xff] %vm856, %v841
        %859 = vst.msk [vmem:[%s339 + $0x10] sm:$0xff] %vm856, %v842
        %860 = vst.msk [vmem:[%s339 + $0x18] sm:$0xff] %vm856, %v843
        %861 = vst.msk [vmem:[%s339 + $0x20] sm:$0xff] %vm856, %v844
        %862 = vst.msk [vmem:[%s339 + $0x28] sm:$0xff] %vm856, %v845
        %863 = vst.msk [vmem:[%s339 + $0x30] sm:$0xff] %vm856, %v846
        %864 = vst.msk [vmem:[%s339 + $0x38] sm:$0xff] %vm856, %v847
        %865 = vst.msk [vmem:[%s339 + $0x40] sm:$0xff] %vm856, %v848
        %866 = vst.msk [vmem:[%s339 + $0x48] sm:$0xff] %vm856, %v849
        %867 = vst.msk [vmem:[%s339 + $0x50] sm:$0xff] %vm856, %v850
        %868 = vst.msk [vmem:[%s339 + $0x58] sm:$0xff] %vm856, %v851
        %869 = vst.msk [vmem:[%s339 + $0x60] sm:$0xff] %vm856, %v852
        %870 = vst.msk [vmem:[%s339 + $0x68] sm:$0xff] %vm856, %v853
        %871 = vst.msk [vmem:[%s339 + $0x70] sm:$0xff] %vm856, %v854
        %872 = vst.msk [vmem:[%s339 + $0x78] sm:$0xff] %vm856, %v855
        %s873 = sadd.s32 %s836, 1
        %s874 = smul.u32 %s873, 24
        %s875 = scalar_lea.vmem [#allocation2], %s874
        %v876 = vld [vmem:[%s875 + $0x1] sm:$0xff]
        %v877 = vld [vmem:[%s875 + $0x9] sm:$0xff]
        %v878 = vld [vmem:[%s875 + $0x19] sm:$0xff]
        %v879 = vld [vmem:[%s875 + $0x21] sm:$0xff]
        %v880 = vld [vmem:[%s875 + $0x31] sm:$0xff]
        %v881 = vld [vmem:[%s875 + $0x39] sm:$0xff]
        %v882 = vld [vmem:[%s875 + $0x49] sm:$0xff]
        %v883 = vld [vmem:[%s875 + $0x51] sm:$0xff]
        %v884 = vld [vmem:[%s875 + $0x61] sm:$0xff]
        %v885 = vld [vmem:[%s875 + $0x69] sm:$0xff]
        %v886 = vld [vmem:[%s875 + $0x79] sm:$0xff]
        %v887 = vld [vmem:[%s875 + $0x81] sm:$0xff]
        %v888 = vld [vmem:[%s875 + $0x91] sm:$0xff]
        %v889 = vld [vmem:[%s875 + $0x99] sm:$0xff]
        %v890 = vld [vmem:[%s875 + $0xa9] sm:$0xff]
        %v891 = vld [vmem:[%s875 + $0xb1] sm:$0xff]
        %v892 = vld [vmem:[%s875 + $0x2] sm:$0xff]
        %v893 = vld [vmem:[%s875 + $0xa] sm:$0xff]
        %v894 = vld [vmem:[%s875 + $0x1a] sm:$0xff]
        %v895 = vld [vmem:[%s875 + $0x22] sm:$0xff]
        %v896 = vld [vmem:[%s875 + $0x32] sm:$0xff]
        %v897 = vld [vmem:[%s875 + $0x3a] sm:$0xff]
        %v898 = vld [vmem:[%s875 + $0x4a] sm:$0xff]
        %v899 = vld [vmem:[%s875 + $0x52] sm:$0xff]
        %v900 = vld [vmem:[%s875 + $0x62] sm:$0xff]
        %v901 = vld [vmem:[%s875 + $0x6a] sm:$0xff]
        %v902 = vld [vmem:[%s875 + $0x7a] sm:$0xff]
        %v903 = vld [vmem:[%s875 + $0x82] sm:$0xff]
        %v904 = vld [vmem:[%s875 + $0x92] sm:$0xff]
        %v905 = vld [vmem:[%s875 + $0x9a] sm:$0xff]
        %v906 = vld [vmem:[%s875 + $0xaa] sm:$0xff]
        %v907 = vld [vmem:[%s875 + $0xb2] sm:$0xff]
        %v908 = vld [vmem:[%s875 + $0x3] sm:$0xff]
        %v909 = vld [vmem:[%s875 + $0xb] sm:$0xff]
        %v910 = vld [vmem:[%s875 + $0x1b] sm:$0xff]
        %v911 = vld [vmem:[%s875 + $0x23] sm:$0xff]
        %v912 = vld [vmem:[%s875 + $0x33] sm:$0xff]
        %v913 = vld [vmem:[%s875 + $0x3b] sm:$0xff]
        %v914 = vld [vmem:[%s875 + $0x4b] sm:$0xff]
        %v915 = vld [vmem:[%s875 + $0x53] sm:$0xff]
        %v916 = vld [vmem:[%s875 + $0x63] sm:$0xff]
        %v917 = vld [vmem:[%s875 + $0x6b] sm:$0xff]
        %v918 = vld [vmem:[%s875 + $0x7b] sm:$0xff]
        %v919 = vld [vmem:[%s875 + $0x83] sm:$0xff]
        %v920 = vld [vmem:[%s875 + $0x93] sm:$0xff]
        %v921 = vld [vmem:[%s875 + $0x9b] sm:$0xff]
        %v922 = vld [vmem:[%s875 + $0xab] sm:$0xff]
        %v923 = vld [vmem:[%s875 + $0xb3] sm:$0xff]
        %v924 = vld [vmem:[%s839 + $0x1] sm:$0xff]
        %v925 = vld [vmem:[%s839 + $0x9] sm:$0xff]
        %v926 = vld [vmem:[%s839 + $0x19] sm:$0xff]
        %v927 = vld [vmem:[%s839 + $0x21] sm:$0xff]
        %v928 = vld [vmem:[%s839 + $0x31] sm:$0xff]
        %v929 = vld [vmem:[%s839 + $0x39] sm:$0xff]
        %v930 = vld [vmem:[%s839 + $0x49] sm:$0xff]
        %v931 = vld [vmem:[%s839 + $0x51] sm:$0xff]
        %v932 = vld [vmem:[%s839 + $0x61] sm:$0xff]
        %v933 = vld [vmem:[%s839 + $0x69] sm:$0xff]
        %v934 = vld [vmem:[%s839 + $0x79] sm:$0xff]
        %v935 = vld [vmem:[%s839 + $0x81] sm:$0xff]
        %v936 = vld [vmem:[%s839 + $0x91] sm:$0xff]
        %v937 = vld [vmem:[%s839 + $0x99] sm:$0xff]
        %v938 = vld [vmem:[%s839 + $0xa9] sm:$0xff]
        %v939 = vld [vmem:[%s839 + $0xb1] sm:$0xff]
        %v940 = vld [vmem:[%s839 + $0x2] sm:$0xff]
        %v941 = vld [vmem:[%s839 + $0xa] sm:$0xff]
        %v942 = vld [vmem:[%s839 + $0x1a] sm:$0xff]
        %v943 = vld [vmem:[%s839 + $0x22] sm:$0xff]
        %v944 = vld [vmem:[%s839 + $0x32] sm:$0xff]
        %v945 = vld [vmem:[%s839 + $0x3a] sm:$0xff]
        %v946 = vld [vmem:[%s839 + $0x4a] sm:$0xff]
        %v947 = vld [vmem:[%s839 + $0x52] sm:$0xff]
        %v948 = vld [vmem:[%s839 + $0x62] sm:$0xff]
        %v949 = vld [vmem:[%s839 + $0x6a] sm:$0xff]
        %v950 = vld [vmem:[%s839 + $0x7a] sm:$0xff]
        %v951 = vld [vmem:[%s839 + $0x82] sm:$0xff]
        %v952 = vld [vmem:[%s839 + $0x92] sm:$0xff]
        %v953 = vld [vmem:[%s839 + $0x9a] sm:$0xff]
        %v954 = vld [vmem:[%s839 + $0xaa] sm:$0xff]
        %v955 = vld [vmem:[%s839 + $0xb2] sm:$0xff]
        %v956 = vld [vmem:[%s839 + $0x3] sm:$0xff]
        %v957 = vld [vmem:[%s839 + $0xb] sm:$0xff]
        %v958 = vld [vmem:[%s839 + $0x1b] sm:$0xff]
        %v959 = vld [vmem:[%s839 + $0x23] sm:$0xff]
        %v960 = vld [vmem:[%s839 + $0x33] sm:$0xff]
        %v961 = vld [vmem:[%s839 + $0x3b] sm:$0xff]
        %v962 = vld [vmem:[%s839 + $0x4b] sm:$0xff]
        %v963 = vld [vmem:[%s839 + $0x53] sm:$0xff]
        %v964 = vld [vmem:[%s839 + $0x63] sm:$0xff]
        %v965 = vld [vmem:[%s839 + $0x6b] sm:$0xff]
        %v966 = vld [vmem:[%s839 + $0x7b] sm:$0xff]
        %v967 = vld [vmem:[%s839 + $0x83] sm:$0xff]
        %v968 = vld [vmem:[%s839 + $0x93] sm:$0xff]
        %v969 = vld [vmem:[%s839 + $0x9b] sm:$0xff]
        %v970 = vld [vmem:[%s839 + $0xab] sm:$0xff]
        %v971 = vld [vmem:[%s839 + $0xb3] sm:$0xff]
        %s972 = sadd.s32 %s836, 3
        %s973 = smul.u32 %s972, 24
        %s974 = scalar_lea.vmem [#allocation2], %s973
        %v975 = vld [vmem:[%s974 + $0x1] sm:$0xff]
        %v976 = vld [vmem:[%s974 + $0x9] sm:$0xff]
        %v977 = vld [vmem:[%s974 + $0x19] sm:$0xff]
        %v978 = vld [vmem:[%s974 + $0x21] sm:$0xff]
        %v979 = vld [vmem:[%s974 + $0x31] sm:$0xff]
        %v980 = vld [vmem:[%s974 + $0x39] sm:$0xff]
        %v981 = vld [vmem:[%s974 + $0x49] sm:$0xff]
        %v982 = vld [vmem:[%s974 + $0x51] sm:$0xff]
        %v983 = vld [vmem:[%s974 + $0x61] sm:$0xff]
        %v984 = vld [vmem:[%s974 + $0x69] sm:$0xff]
        %v985 = vld [vmem:[%s974 + $0x79] sm:$0xff]
        %v986 = vld [vmem:[%s974 + $0x81] sm:$0xff]
        %v987 = vld [vmem:[%s974 + $0x91] sm:$0xff]
        %v988 = vld [vmem:[%s974 + $0x99] sm:$0xff]
        %v989 = vld [vmem:[%s974 + $0xa9] sm:$0xff]
        %v990 = vld [vmem:[%s974 + $0xb1] sm:$0xff]
        %v991 = vld [vmem:[%s974 + $0x2] sm:$0xff]
        %v992 = vld [vmem:[%s974 + $0xa] sm:$0xff]
        %v993 = vld [vmem:[%s974 + $0x1a] sm:$0xff]
        %v994 = vld [vmem:[%s974 + $0x22] sm:$0xff]
        %v995 = vld [vmem:[%s974 + $0x32] sm:$0xff]
        %v996 = vld [vmem:[%s974 + $0x3a] sm:$0xff]
        %v997 = vld [vmem:[%s974 + $0x4a] sm:$0xff]
        %v998 = vld [vmem:[%s974 + $0x52] sm:$0xff]
        %v999 = vld [vmem:[%s974 + $0x62] sm:$0xff]
        %v1000 = vld [vmem:[%s974 + $0x6a] sm:$0xff]
        %v1001 = vld [vmem:[%s974 + $0x7a] sm:$0xff]
        %v1002 = vld [vmem:[%s974 + $0x82] sm:$0xff]
        %v1003 = vld [vmem:[%s974 + $0x92] sm:$0xff]
        %v1004 = vld [vmem:[%s974 + $0x9a] sm:$0xff]
        %v1005 = vld [vmem:[%s974 + $0xaa] sm:$0xff]
        %v1006 = vld [vmem:[%s974 + $0xb2] sm:$0xff]
        %v1007 = vld [vmem:[%s974 + $0x3] sm:$0xff]
        %v1008 = vld [vmem:[%s974 + $0xb] sm:$0xff]
        %v1009 = vld [vmem:[%s974 + $0x1b] sm:$0xff]
        %v1010 = vld [vmem:[%s974 + $0x23] sm:$0xff]
        %v1011 = vld [vmem:[%s974 + $0x33] sm:$0xff]
        %v1012 = vld [vmem:[%s974 + $0x3b] sm:$0xff]
        %v1013 = vld [vmem:[%s974 + $0x4b] sm:$0xff]
        %v1014 = vld [vmem:[%s974 + $0x53] sm:$0xff]
        %v1015 = vld [vmem:[%s974 + $0x63] sm:$0xff]
        %v1016 = vld [vmem:[%s974 + $0x6b] sm:$0xff]
        %v1017 = vld [vmem:[%s974 + $0x7b] sm:$0xff]
        %v1018 = vld [vmem:[%s974 + $0x83] sm:$0xff]
        %v1019 = vld [vmem:[%s974 + $0x93] sm:$0xff]
        %v1020 = vld [vmem:[%s974 + $0x9b] sm:$0xff]
        %v1021 = vld [vmem:[%s974 + $0xab] sm:$0xff]
        %v1022 = vld [vmem:[%s974 + $0xb3] sm:$0xff]
        %1039 = vrot.lane.b32.xlu0 %v876, 120
        %v1040 = vpop.permute.xlu0 %1039
        %1041 = vrot.lane.b32.xlu0 %v877, 120
        %v1042 = vpop.permute.xlu0 %1041
        %1043 = vrot.lane.b32.xlu0 %v878, 120
        %v1044 = vpop.permute.xlu0 %1043
        %1045 = vrot.lane.b32.xlu0 %v879, 120
        %v1046 = vpop.permute.xlu0 %1045
        %1047 = vrot.lane.b32.xlu0 %v880, 120
        %v1048 = vpop.permute.xlu0 %1047
        %1049 = vrot.lane.b32.xlu0 %v881, 120
        %v1050 = vpop.permute.xlu0 %1049
        %1051 = vrot.lane.b32.xlu0 %v882, 120
        %v1052 = vpop.permute.xlu0 %1051
        %1053 = vrot.lane.b32.xlu0 %v883, 120
        %v1054 = vpop.permute.xlu0 %1053
        %1055 = vrot.lane.b32.xlu0 %v884, 120
        %v1056 = vpop.permute.xlu0 %1055
        %1057 = vrot.lane.b32.xlu0 %v885, 120
        %v1058 = vpop.permute.xlu0 %1057
        %1059 = vrot.lane.b32.xlu0 %v886, 120
        %v1060 = vpop.permute.xlu0 %1059
        %1061 = vrot.lane.b32.xlu0 %v887, 120
        %v1062 = vpop.permute.xlu0 %1061
        %1063 = vrot.lane.b32.xlu0 %v888, 120
        %v1064 = vpop.permute.xlu0 %1063
        %1065 = vrot.lane.b32.xlu0 %v889, 120
        %v1066 = vpop.permute.xlu0 %1065
        %1067 = vrot.lane.b32.xlu0 %v890, 120
        %v1068 = vpop.permute.xlu0 %1067
        %1069 = vrot.lane.b32.xlu0 %v891, 120
        %v1070 = vpop.permute.xlu0 %1069
        %1103 = vrot.lane.b32.xlu0 %v892, 124
        %v1104 = vpop.permute.xlu0 %1103
        %1105 = vrot.lane.b32.xlu0 %v893, 124
        %v1106 = vpop.permute.xlu0 %1105
        %1107 = vrot.lane.b32.xlu0 %v894, 124
        %v1108 = vpop.permute.xlu0 %1107
        %1109 = vrot.lane.b32.xlu0 %v895, 124
        %v1110 = vpop.permute.xlu0 %1109
        %1111 = vrot.lane.b32.xlu0 %v896, 124
        %v1112 = vpop.permute.xlu0 %1111
        %1113 = vrot.lane.b32.xlu0 %v897, 124
        %v1114 = vpop.permute.xlu0 %1113
        %1115 = vrot.lane.b32.xlu0 %v898, 124
        %v1116 = vpop.permute.xlu0 %1115
        %1117 = vrot.lane.b32.xlu0 %v899, 124
        %v1118 = vpop.permute.xlu0 %1117
        %1119 = vrot.lane.b32.xlu0 %v900, 124
        %v1120 = vpop.permute.xlu0 %1119
        %1121 = vrot.lane.b32.xlu0 %v901, 124
        %v1122 = vpop.permute.xlu0 %1121
        %1123 = vrot.lane.b32.xlu0 %v902, 124
        %v1124 = vpop.permute.xlu0 %1123
        %1125 = vrot.lane.b32.xlu0 %v903, 124
        %v1126 = vpop.permute.xlu0 %1125
        %1127 = vrot.lane.b32.xlu0 %v904, 124
        %v1128 = vpop.permute.xlu0 %1127
        %1129 = vrot.lane.b32.xlu0 %v905, 124
        %v1130 = vpop.permute.xlu0 %1129
        %1131 = vrot.lane.b32.xlu0 %v906, 124
        %v1132 = vpop.permute.xlu0 %1131
        %1133 = vrot.lane.b32.xlu0 %v907, 124
        %v1134 = vpop.permute.xlu0 %1133
        %1167 = vrot.lane.b32.xlu0 %v924, 4
        %v1168 = vpop.permute.xlu0 %1167
        %1169 = vrot.lane.b32.xlu0 %v925, 4
        %v1170 = vpop.permute.xlu0 %1169
        %1171 = vrot.lane.b32.xlu0 %v926, 4
        %v1172 = vpop.permute.xlu0 %1171
        %1173 = vrot.lane.b32.xlu0 %v927, 4
        %v1174 = vpop.permute.xlu0 %1173
        %1175 = vrot.lane.b32.xlu0 %v928, 4
        %v1176 = vpop.permute.xlu0 %1175
        %1177 = vrot.lane.b32.xlu0 %v929, 4
        %v1178 = vpop.permute.xlu0 %1177
        %1179 = vrot.lane.b32.xlu0 %v930, 4
        %v1180 = vpop.permute.xlu0 %1179
        %1181 = vrot.lane.b32.xlu0 %v931, 4
        %v1182 = vpop.permute.xlu0 %1181
        %1183 = vrot.lane.b32.xlu0 %v932, 4
        %v1184 = vpop.permute.xlu0 %1183
        %1185 = vrot.lane.b32.xlu0 %v933, 4
        %v1186 = vpop.permute.xlu0 %1185
        %1187 = vrot.lane.b32.xlu0 %v934, 4
        %v1188 = vpop.permute.xlu0 %1187
        %1189 = vrot.lane.b32.xlu0 %v935, 4
        %v1190 = vpop.permute.xlu0 %1189
        %1191 = vrot.lane.b32.xlu0 %v936, 4
        %v1192 = vpop.permute.xlu0 %1191
        %1193 = vrot.lane.b32.xlu0 %v937, 4
        %v1194 = vpop.permute.xlu0 %1193
        %1195 = vrot.lane.b32.xlu0 %v938, 4
        %v1196 = vpop.permute.xlu0 %1195
        %1197 = vrot.lane.b32.xlu0 %v939, 4
        %v1198 = vpop.permute.xlu0 %1197
        %1231 = vrot.lane.b32.xlu0 %v940, 8
        %v1232 = vpop.permute.xlu0 %1231
        %1233 = vrot.lane.b32.xlu0 %v941, 8
        %v1234 = vpop.permute.xlu0 %1233
        %1235 = vrot.lane.b32.xlu0 %v942, 8
        %v1236 = vpop.permute.xlu0 %1235
        %1237 = vrot.lane.b32.xlu0 %v943, 8
        %v1238 = vpop.permute.xlu0 %1237
        %1239 = vrot.lane.b32.xlu0 %v944, 8
        %v1240 = vpop.permute.xlu0 %1239
        %1241 = vrot.lane.b32.xlu0 %v945, 8
        %v1242 = vpop.permute.xlu0 %1241
        %1243 = vrot.lane.b32.xlu0 %v946, 8
        %v1244 = vpop.permute.xlu0 %1243
        %1245 = vrot.lane.b32.xlu0 %v947, 8
        %v1246 = vpop.permute.xlu0 %1245
        %1247 = vrot.lane.b32.xlu0 %v948, 8
        %v1248 = vpop.permute.xlu0 %1247
        %1249 = vrot.lane.b32.xlu0 %v949, 8
        %v1250 = vpop.permute.xlu0 %1249
        %1251 = vrot.lane.b32.xlu0 %v950, 8
        %v1252 = vpop.permute.xlu0 %1251
        %1253 = vrot.lane.b32.xlu0 %v951, 8
        %v1254 = vpop.permute.xlu0 %1253
        %1255 = vrot.lane.b32.xlu0 %v952, 8
        %v1256 = vpop.permute.xlu0 %1255
        %1257 = vrot.lane.b32.xlu0 %v953, 8
        %v1258 = vpop.permute.xlu0 %1257
        %1259 = vrot.lane.b32.xlu0 %v954, 8
        %v1260 = vpop.permute.xlu0 %1259
        %1261 = vrot.lane.b32.xlu0 %v955, 8
        %v1262 = vpop.permute.xlu0 %1261
        %1295 = vrot.lane.b32.xlu0 %v956, 12
        %v1296 = vpop.permute.xlu0 %1295
        %1297 = vrot.lane.b32.xlu0 %v957, 12
        %v1298 = vpop.permute.xlu0 %1297
        %1299 = vrot.lane.b32.xlu0 %v958, 12
        %v1300 = vpop.permute.xlu0 %1299
        %1301 = vrot.lane.b32.xlu0 %v959, 12
        %v1302 = vpop.permute.xlu0 %1301
        %1303 = vrot.lane.b32.xlu0 %v960, 12
        %v1304 = vpop.permute.xlu0 %1303
        %1305 = vrot.lane.b32.xlu0 %v961, 12
        %v1306 = vpop.permute.xlu0 %1305
        %1307 = vrot.lane.b32.xlu0 %v962, 12
        %v1308 = vpop.permute.xlu0 %1307
        %1309 = vrot.lane.b32.xlu0 %v963, 12
        %v1310 = vpop.permute.xlu0 %1309
        %1311 = vrot.lane.b32.xlu0 %v964, 12
        %v1312 = vpop.permute.xlu0 %1311
        %1313 = vrot.lane.b32.xlu0 %v965, 12
        %v1314 = vpop.permute.xlu0 %1313
        %1315 = vrot.lane.b32.xlu0 %v966, 12
        %v1316 = vpop.permute.xlu0 %1315
        %1317 = vrot.lane.b32.xlu0 %v967, 12
        %v1318 = vpop.permute.xlu0 %1317
        %1319 = vrot.lane.b32.xlu0 %v968, 12
        %v1320 = vpop.permute.xlu0 %1319
        %1321 = vrot.lane.b32.xlu0 %v969, 12
        %v1322 = vpop.permute.xlu0 %1321
        %1323 = vrot.lane.b32.xlu0 %v970, 12
        %v1324 = vpop.permute.xlu0 %1323
        %1325 = vrot.lane.b32.xlu0 %v971, 12
        %v1326 = vpop.permute.xlu0 %1325
        %1359 = vrot.lane.b32.xlu0 %v975, 16
        %v1360 = vpop.permute.xlu0 %1359
        %1361 = vrot.lane.b32.xlu0 %v976, 16
        %v1362 = vpop.permute.xlu0 %1361
        %1363 = vrot.lane.b32.xlu0 %v977, 16
        %v1364 = vpop.permute.xlu0 %1363
        %1365 = vrot.lane.b32.xlu0 %v978, 16
        %v1366 = vpop.permute.xlu0 %1365
        %1367 = vrot.lane.b32.xlu0 %v979, 16
        %v1368 = vpop.permute.xlu0 %1367
        %1369 = vrot.lane.b32.xlu0 %v980, 16
        %v1370 = vpop.permute.xlu0 %1369
        %1371 = vrot.lane.b32.xlu0 %v981, 16
        %v1372 = vpop.permute.xlu0 %1371
        %1373 = vrot.lane.b32.xlu0 %v982, 16
        %v1374 = vpop.permute.xlu0 %1373
        %1375 = vrot.lane.b32.xlu0 %v983, 16
        %v1376 = vpop.permute.xlu0 %1375
        %1377 = vrot.lane.b32.xlu0 %v984, 16
        %v1378 = vpop.permute.xlu0 %1377
        %1379 = vrot.lane.b32.xlu0 %v985, 16
        %v1380 = vpop.permute.xlu0 %1379
        %1381 = vrot.lane.b32.xlu0 %v986, 16
        %v1382 = vpop.permute.xlu0 %1381
        %1383 = vrot.lane.b32.xlu0 %v987, 16
        %v1384 = vpop.permute.xlu0 %1383
        %1385 = vrot.lane.b32.xlu0 %v988, 16
        %v1386 = vpop.permute.xlu0 %1385
        %1387 = vrot.lane.b32.xlu0 %v989, 16
        %v1388 = vpop.permute.xlu0 %1387
        %1389 = vrot.lane.b32.xlu0 %v990, 16
        %v1390 = vpop.permute.xlu0 %1389
        %1423 = vrot.lane.b32.xlu0 %v991, 20
        %v1424 = vpop.permute.xlu0 %1423
        %1425 = vrot.lane.b32.xlu0 %v992, 20
        %v1426 = vpop.permute.xlu0 %1425
        %1427 = vrot.lane.b32.xlu0 %v993, 20
        %v1428 = vpop.permute.xlu0 %1427
        %1429 = vrot.lane.b32.xlu0 %v994, 20
        %v1430 = vpop.permute.xlu0 %1429
        %1431 = vrot.lane.b32.xlu0 %v995, 20
        %v1432 = vpop.permute.xlu0 %1431
        %1433 = vrot.lane.b32.xlu0 %v996, 20
        %v1434 = vpop.permute.xlu0 %1433
        %1435 = vrot.lane.b32.xlu0 %v997, 20
        %v1436 = vpop.permute.xlu0 %1435
        %1437 = vrot.lane.b32.xlu0 %v998, 20
        %v1438 = vpop.permute.xlu0 %1437
        %1439 = vrot.lane.b32.xlu0 %v999, 20
        %v1440 = vpop.permute.xlu0 %1439
        %1441 = vrot.lane.b32.xlu0 %v1000, 20
        %v1442 = vpop.permute.xlu0 %1441
        %1443 = vrot.lane.b32.xlu0 %v1001, 20
        %v1444 = vpop.permute.xlu0 %1443
        %1445 = vrot.lane.b32.xlu0 %v1002, 20
        %v1446 = vpop.permute.xlu0 %1445
        %1447 = vrot.lane.b32.xlu0 %v1003, 20
        %v1448 = vpop.permute.xlu0 %1447
        %1449 = vrot.lane.b32.xlu0 %v1004, 20
        %v1450 = vpop.permute.xlu0 %1449
        %1451 = vrot.lane.b32.xlu0 %v1005, 20
        %v1452 = vpop.permute.xlu0 %1451
        %1453 = vrot.lane.b32.xlu0 %v1006, 20
        %v1454 = vpop.permute.xlu0 %1453
        %1487 = vrot.lane.b32.xlu0 %v1007, 24
        %v1488 = vpop.permute.xlu0 %1487
        %1489 = vrot.lane.b32.xlu0 %v1008, 24
        %v1490 = vpop.permute.xlu0 %1489
        %1491 = vrot.lane.b32.xlu0 %v1009, 24
        %v1492 = vpop.permute.xlu0 %1491
        %1493 = vrot.lane.b32.xlu0 %v1010, 24
        %v1494 = vpop.permute.xlu0 %1493
        %1495 = vrot.lane.b32.xlu0 %v1011, 24
        %v1496 = vpop.permute.xlu0 %1495
        %1497 = vrot.lane.b32.xlu0 %v1012, 24
        %v1498 = vpop.permute.xlu0 %1497
        %1499 = vrot.lane.b32.xlu0 %v1013, 24
        %v1500 = vpop.permute.xlu0 %1499
        %1501 = vrot.lane.b32.xlu0 %v1014, 24
        %v1502 = vpop.permute.xlu0 %1501
        %1503 = vrot.lane.b32.xlu0 %v1015, 24
        %v1504 = vpop.permute.xlu0 %1503
        %1505 = vrot.lane.b32.xlu0 %v1016, 24
        %v1506 = vpop.permute.xlu0 %1505
        %1507 = vrot.lane.b32.xlu0 %v1017, 24
        %v1508 = vpop.permute.xlu0 %1507
        %1509 = vrot.lane.b32.xlu0 %v1018, 24
        %v1510 = vpop.permute.xlu0 %1509
        %1511 = vrot.lane.b32.xlu0 %v1019, 24
        %v1512 = vpop.permute.xlu0 %1511
        %1513 = vrot.lane.b32.xlu0 %v1020, 24
        %v1514 = vpop.permute.xlu0 %1513
        %1515 = vrot.lane.b32.xlu0 %v1021, 24
        %v1516 = vpop.permute.xlu0 %1515
        %1517 = vrot.lane.b32.xlu0 %v1022, 24
        %v1518 = vpop.permute.xlu0 %1517
        %vm1535 = vcmask 31744
        %v1536 = vsel %vm1535, %v1040, %v1104
        %v1537 = vsel %vm1535, %v1042, %v1106
        %v1538 = vsel %vm1535, %v1044, %v1108
        %v1539 = vsel %vm1535, %v1046, %v1110
        %v1540 = vsel %vm1535, %v1048, %v1112
        %v1541 = vsel %vm1535, %v1050, %v1114
        %v1542 = vsel %vm1535, %v1052, %v1116
        %v1543 = vsel %vm1535, %v1054, %v1118
        %v1544 = vsel %vm1535, %v1056, %v1120
        %v1545 = vsel %vm1535, %v1058, %v1122
        %v1546 = vsel %vm1535, %v1060, %v1124
        %v1547 = vsel %vm1535, %v1062, %v1126
        %v1548 = vsel %vm1535, %v1064, %v1128
        %v1549 = vsel %vm1535, %v1066, %v1130
        %v1550 = vsel %vm1535, %v1068, %v1132
        %v1551 = vsel %vm1535, %v1070, %v1134
        %v1552 = vsel %vm856, %v1536, %v908
        %v1553 = vsel %vm856, %v1537, %v909
        %v1554 = vsel %vm856, %v1538, %v910
        %v1555 = vsel %vm856, %v1539, %v911
        %v1556 = vsel %vm856, %v1540, %v912
        %v1557 = vsel %vm856, %v1541, %v913
        %v1558 = vsel %vm856, %v1542, %v914
        %v1559 = vsel %vm856, %v1543, %v915
        %v1560 = vsel %vm856, %v1544, %v916
        %v1561 = vsel %vm856, %v1545, %v917
        %v1562 = vsel %vm856, %v1546, %v918
        %v1563 = vsel %vm856, %v1547, %v919
        %v1564 = vsel %vm856, %v1548, %v920
        %v1565 = vsel %vm856, %v1549, %v921
        %v1566 = vsel %vm856, %v1550, %v922
        %v1567 = vsel %vm856, %v1551, %v923
        %vm1568 = vcmask 97280
        %v1569 = vsel %vm1568, %v1552, %v1168
        %v1570 = vsel %vm1568, %v1553, %v1170
        %v1571 = vsel %vm1568, %v1554, %v1172
        %v1572 = vsel %vm1568, %v1555, %v1174
        %v1573 = vsel %vm1568, %v1556, %v1176
        %v1574 = vsel %vm1568, %v1557, %v1178
        %v1575 = vsel %vm1568, %v1558, %v1180
        %v1576 = vsel %vm1568, %v1559, %v1182
        %v1577 = vsel %vm1568, %v1560, %v1184
        %v1578 = vsel %vm1568, %v1561, %v1186
        %v1579 = vsel %vm1568, %v1562, %v1188
        %v1580 = vsel %vm1568, %v1563, %v1190
        %v1581 = vsel %vm1568, %v1564, %v1192
        %v1582 = vsel %vm1568, %v1565, %v1194
        %v1583 = vsel %vm1568, %v1566, %v1196
        %v1584 = vsel %vm1568, %v1567, %v1198
        %vm1585 = vcmask 130048
        %v1586 = vsel %vm1585, %v1569, %v1232
        %v1587 = vsel %vm1585, %v1570, %v1234
        %v1588 = vsel %vm1585, %v1571, %v1236
        %v1589 = vsel %vm1585, %v1572, %v1238
        %v1590 = vsel %vm1585, %v1573, %v1240
        %v1591 = vsel %vm1585, %v1574, %v1242
        %v1592 = vsel %vm1585, %v1575, %v1244
        %v1593 = vsel %vm1585, %v1576, %v1246
        %v1594 = vsel %vm1585, %v1577, %v1248
        %v1595 = vsel %vm1585, %v1578, %v1250
        %v1596 = vsel %vm1585, %v1579, %v1252
        %v1597 = vsel %vm1585, %v1580, %v1254
        %v1598 = vsel %vm1585, %v1581, %v1256
        %v1599 = vsel %vm1585, %v1582, %v1258
        %v1600 = vsel %vm1585, %v1583, %v1260
        %v1601 = vsel %vm1585, %v1584, %v1262
        %vm1602 = vcmask 162816
        %v1603 = vsel %vm1602, %v1586, %v1296
        %v1604 = vsel %vm1602, %v1587, %v1298
        %v1605 = vsel %vm1602, %v1588, %v1300
        %v1606 = vsel %vm1602, %v1589, %v1302
        %v1607 = vsel %vm1602, %v1590, %v1304
        %v1608 = vsel %vm1602, %v1591, %v1306
        %v1609 = vsel %vm1602, %v1592, %v1308
        %v1610 = vsel %vm1602, %v1593, %v1310
        %v1611 = vsel %vm1602, %v1594, %v1312
        %v1612 = vsel %vm1602, %v1595, %v1314
        %v1613 = vsel %vm1602, %v1596, %v1316
        %v1614 = vsel %vm1602, %v1597, %v1318
        %v1615 = vsel %vm1602, %v1598, %v1320
        %v1616 = vsel %vm1602, %v1599, %v1322
        %v1617 = vsel %vm1602, %v1600, %v1324
        %v1618 = vsel %vm1602, %v1601, %v1326
        %vm1619 = vcmask 195584
        %v1620 = vsel %vm1619, %v1603, %v1360
        %v1621 = vsel %vm1619, %v1604, %v1362
        %v1622 = vsel %vm1619, %v1605, %v1364
        %v1623 = vsel %vm1619, %v1606, %v1366
        %v1624 = vsel %vm1619, %v1607, %v1368
        %v1625 = vsel %vm1619, %v1608, %v1370
        %v1626 = vsel %vm1619, %v1609, %v1372
        %v1627 = vsel %vm1619, %v1610, %v1374
        %v1628 = vsel %vm1619, %v1611, %v1376
        %v1629 = vsel %vm1619, %v1612, %v1378
        %v1630 = vsel %vm1619, %v1613, %v1380
        %v1631 = vsel %vm1619, %v1614, %v1382
        %v1632 = vsel %vm1619, %v1615, %v1384
        %v1633 = vsel %vm1619, %v1616, %v1386
        %v1634 = vsel %vm1619, %v1617, %v1388
        %v1635 = vsel %vm1619, %v1618, %v1390
        %vm1636 = vcmask 228352
        %v1637 = vsel %vm1636, %v1620, %v1424
        %v1638 = vsel %vm1636, %v1621, %v1426
        %v1639 = vsel %vm1636, %v1622, %v1428
        %v1640 = vsel %vm1636, %v1623, %v1430
        %v1641 = vsel %vm1636, %v1624, %v1432
        %v1642 = vsel %vm1636, %v1625, %v1434
        %v1643 = vsel %vm1636, %v1626, %v1436
        %v1644 = vsel %vm1636, %v1627, %v1438
        %v1645 = vsel %vm1636, %v1628, %v1440
        %v1646 = vsel %vm1636, %v1629, %v1442
        %v1647 = vsel %vm1636, %v1630, %v1444
        %v1648 = vsel %vm1636, %v1631, %v1446
        %v1649 = vsel %vm1636, %v1632, %v1448
        %v1650 = vsel %vm1636, %v1633, %v1450
        %v1651 = vsel %vm1636, %v1634, %v1452
        %v1652 = vsel %vm1636, %v1635, %v1454
        %vm1653 = vcmask 261120
        %v1654 = vsel %vm1653, %v1637, %v1488
        %v1655 = vsel %vm1653, %v1638, %v1490
        %v1656 = vsel %vm1653, %v1639, %v1492
        %v1657 = vsel %vm1653, %v1640, %v1494
        %v1658 = vsel %vm1653, %v1641, %v1496
        %v1659 = vsel %vm1653, %v1642, %v1498
        %v1660 = vsel %vm1653, %v1643, %v1500
        %v1661 = vsel %vm1653, %v1644, %v1502
        %v1662 = vsel %vm1653, %v1645, %v1504
        %v1663 = vsel %vm1653, %v1646, %v1506
        %v1664 = vsel %vm1653, %v1647, %v1508
        %v1665 = vsel %vm1653, %v1648, %v1510
        %v1666 = vsel %vm1653, %v1649, %v1512
        %v1667 = vsel %vm1653, %v1650, %v1514
        %v1668 = vsel %vm1653, %v1651, %v1516
        %v1669 = vsel %vm1653, %v1652, %v1518
        %v1670 = vpack.c.bf16 %v1655, %v1654
        %v1671 = vpack.c.bf16 %v1657, %v1656
        %v1672 = vpack.c.bf16 %v1659, %v1658
        %v1673 = vpack.c.bf16 %v1661, %v1660
        %v1674 = vpack.c.bf16 %v1663, %v1662
        %v1675 = vpack.c.bf16 %v1665, %v1664
        %v1676 = vpack.c.bf16 %v1667, %v1666
        %v1677 = vpack.c.bf16 %v1669, %v1668
        %v1678 = vld [vmem:[%s3] sm:$0xf]
        %v1679 = vld [vmem:[%s3 + $0x4] sm:$0xf]
        %v1680 = vld [vmem:[%s3 + $0x8] sm:$0xf]
        %v1681 = vld [vmem:[%s3 + $0xc] sm:$0xf]
        %v1682 = vld [vmem:[%s3 + $0x10] sm:$0x3]
        %v1683 = vld [vmem:[%s4] sm:$0x1]
        %v1685 = vlaneseq
        %v1686 = vshrl.u32 %v1685, 7
        %v1687 = vsub.s32 0, %v1686
        %v1688 = vrot.slane %v1683, %v1687
        %v1695 = vunpack.c.l.b16 %v1678
        %v1696 = vunpack.c.l.b16 %v1679
        %v1697 = vunpack.c.l.b16 %v1680
        %v1698 = vunpack.c.l.b16 %v1681
        %v1699 = vunpack.c.l.b16 %v1682
        %v1700 = vpack.c.b16 %v1696, %v1695
        %v1701 = vpack.c.b16 %v1698, %v1697
        %v1702 = vpack.c.b16 %v1699, %v1699
        %vm1705 = vcmask 293888
        %v1707 = vsel %vm1705, %v1670, 0
        %v1710 = vsel %vm1705, %v1671, 0
        %v1713 = vsel %vm1705, %v1672, 0
        %v1716 = vsel %vm1705, %v1673, 0
        %v1719 = vsel %vm1705, %v1674, 0
        %v1722 = vsel %vm1705, %v1675, 0
        %v1725 = vsel %vm1705, %v1676, 0
        %v1728 = vsel %vm1705, %v1677, 0
        %vm1730 = vcmask 1041408
        %v1732 = vsel %vm1730, %v1702, 0
        %1734 = vmatprep.subr.bf16.mxu0 0
        %1735 = vmatpush1.bf16.msra.mxu0 %v1700
        %1736 = vmatprep.subr.bf16.mxu0 0
        %1737 = vmatpush1.bf16.msra.mxu0 %v1701
        %1738 = vmatprep.subr.bf16.mxu0 0
        %1739 = vmatpush1.bf16.msra.mxu0 %v1732
        %1740 = vmatprep.subr.bf16.mxu0 0
        %1741 = vmatpush1.bf16.msra.mxu0 0
        %1742 = vmatprep.subr.bf16.mxu0 0
        %1743 = vmatpush1.bf16.msra.mxu0 0
        %1744 = vmatprep.subr.bf16.mxu0 0
        %1745 = vmatpush1.bf16.msra.mxu0 0
        %1746 = vmatprep.subr.bf16.mxu0 0
        %1747 = vmatpush1.bf16.msra.mxu0 0
        %1748 = vmatprep.subr.bf16.mxu0 0
        %1749 = vmatpush1.bf16.msra.mxu0 0
        %1750 = vmatprep.subr.bf16.mxu0 0
        %1751 = vmatpush1.bf16.msra.mxu0 0
        %1752 = vmatprep.subr.bf16.mxu0 0
        %1753 = vmatpush1.bf16.msra.mxu0 0
        %1754 = vmatprep.subr.bf16.mxu0 0
        %1755 = vmatpush1.bf16.msra.mxu0 0
        %1756 = vmatprep.subr.bf16.mxu0 0
        %1757 = vmatpush1.bf16.msra.mxu0 0
        %1758 = vmatprep.subr.bf16.mxu0 0
        %1759 = vmatpush1.bf16.msra.mxu0 0
        %1760 = vmatprep.subr.bf16.mxu0 0
        %1761 = vmatpush1.bf16.msra.mxu0 0
        %1762 = vmatprep.subr.bf16.mxu0 0
        %1763 = vmatpush1.bf16.msra.mxu0 0
        %1764 = vmatprep.subr.bf16.mxu0 0
        %1765 = vmatpush1.bf16.msra.mxu0 0
        %1766 = vmatprep.mubr.bf16.mxu0 0
        %1767 = vmatmul.mubr.bf16.gmra.mrb[0].mxu0 %v1707
        %v1768 = vpop.f32.mrb[0].mxu0
        %v1769 = vadd.f32 %v1688, %v1768
        %v1770 = vpop.f32.mrb[0].mxu0
        %v1771 = vpop.f32.mrb[0].mxu0
        %v1772 = vadd.f32 %v1688, %v1771
        %v1773 = vpop.f32.mrb[0].mxu0
        %1774 = vmatprep.mubr.bf16.mxu0 0
        %1775 = vmatmul.mubr.bf16.gmra.mrb[0].mxu0 %v1710
        %v1776 = vpop.f32.mrb[0].mxu0
        %v1777 = vadd.f32 %v1688, %v1776
        %v1778 = vpop.f32.mrb[0].mxu0
        %v1779 = vpop.f32.mrb[0].mxu0
        %v1780 = vadd.f32 %v1688, %v1779
        %v1781 = vpop.f32.mrb[0].mxu0
        %1782 = vmatprep.mubr.bf16.mxu0 0
        %1783 = vmatmul.mubr.bf16.gmra.mrb[0].mxu0 %v1713
        %v1784 = vpop.f32.mrb[0].mxu0
        %v1785 = vadd.f32 %v1688, %v1784
        %v1786 = vpop.f32.mrb[0].mxu0
        %v1787 = vpop.f32.mrb[0].mxu0
        %v1788 = vadd.f32 %v1688, %v1787
        %v1789 = vpop.f32.mrb[0].mxu0
        %1790 = vmatprep.mubr.bf16.mxu0 0
        %1791 = vmatmul.mubr.bf16.gmra.mrb[0].mxu0 %v1716
        %v1792 = vpop.f32.mrb[0].mxu0
        %v1793 = vadd.f32 %v1688, %v1792
        %v1794 = vpop.f32.mrb[0].mxu0
        %v1795 = vpop.f32.mrb[0].mxu0
        %v1796 = vadd.f32 %v1688, %v1795
        %v1797 = vpop.f32.mrb[0].mxu0
        %1798 = vmatprep.mubr.bf16.mxu0 0
        %1799 = vmatmul.mubr.bf16.gmra.mrb[0].mxu0 %v1719
        %v1800 = vpop.f32.mrb[0].mxu0
        %v1801 = vadd.f32 %v1688, %v1800
        %v1802 = vpop.f32.mrb[0].mxu0
        %v1803 = vpop.f32.mrb[0].mxu0
        %v1804 = vadd.f32 %v1688, %v1803
        %v1805 = vpop.f32.mrb[0].mxu0
        %1806 = vmatprep.mubr.bf16.mxu0 0
        %1807 = vmatmul.mubr.bf16.gmra.mrb[0].mxu0 %v1722
        %v1808 = vpop.f32.mrb[0].mxu0
        %v1809 = vadd.f32 %v1688, %v1808
        %v1810 = vpop.f32.mrb[0].mxu0
        %v1811 = vpop.f32.mrb[0].mxu0
        %v1812 = vadd.f32 %v1688, %v1811
        %v1813 = vpop.f32.mrb[0].mxu0
        %1814 = vmatprep.mubr.bf16.mxu0 0
        %1815 = vmatmul.mubr.bf16.gmra.mrb[0].mxu0 %v1725
        %v1816 = vpop.f32.mrb[0].mxu0
        %v1817 = vadd.f32 %v1688, %v1816
        %v1818 = vpop.f32.mrb[0].mxu0
        %v1819 = vpop.f32.mrb[0].mxu0
        %v1820 = vadd.f32 %v1688, %v1819
        %v1821 = vpop.f32.mrb[0].mxu0
        %1822 = vmatprep.mubr.bf16.mxu0 0
        %1823 = vmatmul.mubr.bf16.gmra.mrb[0].mxu0 %v1728
        %v1824 = vpop.f32.mrb[0].mxu0
        %v1825 = vadd.f32 %v1688, %v1824
        %v1826 = vpop.f32.mrb[0].mxu0
        %v1827 = vpop.f32.mrb[0].mxu0
        %v1828 = vadd.f32 %v1688, %v1827
        %v1829 = vpop.f32.mrb[0].mxu0
        %1830 = vdwg.mxu0
        %v1831 = vmax.f32 %v1769, 0.0
        %v1832 = vmax.f32 %v1772, 0.0
        %v1833 = vmax.f32 %v1777, 0.0
        %v1834 = vmax.f32 %v1780, 0.0
        %v1835 = vmax.f32 %v1785, 0.0
        %v1836 = vmax.f32 %v1788, 0.0
        %v1837 = vmax.f32 %v1793, 0.0
        %v1838 = vmax.f32 %v1796, 0.0
        %v1839 = vmax.f32 %v1801, 0.0
        %v1840 = vmax.f32 %v1804, 0.0
        %v1841 = vmax.f32 %v1809, 0.0
        %v1842 = vmax.f32 %v1812, 0.0
        %v1843 = vmax.f32 %v1817, 0.0
        %v1844 = vmax.f32 %v1820, 0.0
        %v1845 = vmax.f32 %v1825, 0.0
        %v1846 = vmax.f32 %v1828, 0.0
        %1863 = vrot.lane.b32.xlu0 %v1831, 8
        %v1864 = vpop.permute.xlu0 %1863
        %1865 = vrot.lane.b32.xlu0 %v1832, 8
        %v1866 = vpop.permute.xlu0 %1865
        %1867 = vrot.lane.b32.xlu0 %v1833, 8
        %v1868 = vpop.permute.xlu0 %1867
        %1869 = vrot.lane.b32.xlu0 %v1834, 8
        %v1870 = vpop.permute.xlu0 %1869
        %1871 = vrot.lane.b32.xlu0 %v1835, 8
        %v1872 = vpop.permute.xlu0 %1871
        %1873 = vrot.lane.b32.xlu0 %v1836, 8
        %v1874 = vpop.permute.xlu0 %1873
        %1875 = vrot.lane.b32.xlu0 %v1837, 8
        %v1876 = vpop.permute.xlu0 %1875
        %1877 = vrot.lane.b32.xlu0 %v1838, 8
        %v1878 = vpop.permute.xlu0 %1877
        %1879 = vrot.lane.b32.xlu0 %v1839, 8
        %v1880 = vpop.permute.xlu0 %1879
        %1881 = vrot.lane.b32.xlu0 %v1840, 8
        %v1882 = vpop.permute.xlu0 %1881
        %1883 = vrot.lane.b32.xlu0 %v1841, 8
        %v1884 = vpop.permute.xlu0 %1883
        %1885 = vrot.lane.b32.xlu0 %v1842, 8
        %v1886 = vpop.permute.xlu0 %1885
        %1887 = vrot.lane.b32.xlu0 %v1843, 8
        %v1888 = vpop.permute.xlu0 %1887
        %1889 = vrot.lane.b32.xlu0 %v1844, 8
        %v1890 = vpop.permute.xlu0 %1889
        %1891 = vrot.lane.b32.xlu0 %v1845, 8
        %v1892 = vpop.permute.xlu0 %1891
        %1893 = vrot.lane.b32.xlu0 %v1846, 8
        %v1894 = vpop.permute.xlu0 %1893
        %vm1911 = vcmask 130112
        %1912 = vst.msk [vmem:[%s339] sm:$0xff] %vm1911, %v1864
        %1913 = vst.msk [vmem:[%s339 + $0x8] sm:$0xff] %vm1911, %v1866
        %1914 = vst.msk [vmem:[%s339 + $0x10] sm:$0xff] %vm1911, %v1868
        %1915 = vst.msk [vmem:[%s339 + $0x18] sm:$0xff] %vm1911, %v1870
        %1916 = vst.msk [vmem:[%s339 + $0x20] sm:$0xff] %vm1911, %v1872
        %1917 = vst.msk [vmem:[%s339 + $0x28] sm:$0xff] %vm1911, %v1874
        %1918 = vst.msk [vmem:[%s339 + $0x30] sm:$0xff] %vm1911, %v1876
        %1919 = vst.msk [vmem:[%s339 + $0x38] sm:$0xff] %vm1911, %v1878
        %1920 = vst.msk [vmem:[%s339 + $0x40] sm:$0xff] %vm1911, %v1880
        %1921 = vst.msk [vmem:[%s339 + $0x48] sm:$0xff] %vm1911, %v1882
        %1922 = vst.msk [vmem:[%s339 + $0x50] sm:$0xff] %vm1911, %v1884
        %1923 = vst.msk [vmem:[%s339 + $0x58] sm:$0xff] %vm1911, %v1886
        %1924 = vst.msk [vmem:[%s339 + $0x60] sm:$0xff] %vm1911, %v1888
        %1925 = vst.msk [vmem:[%s339 + $0x68] sm:$0xff] %vm1911, %v1890
        %1926 = vst.msk [vmem:[%s339 + $0x70] sm:$0xff] %vm1911, %v1892
        %1927 = vst.msk [vmem:[%s339 + $0x78] sm:$0xff] %vm1911, %v1894
        %s1928 = smul.u32 %s836, 24
        %s1929 = scalar_lea.vmem [#allocation2], %s1928
        %v1930 = vld [vmem:[%s1929] sm:$0xff]
        %v1931 = vld [vmem:[%s1929 + $0x8] sm:$0xff]
        %v1932 = vld [vmem:[%s1929 + $0x18] sm:$0xff]
        %v1933 = vld [vmem:[%s1929 + $0x20] sm:$0xff]
        %v1934 = vld [vmem:[%s1929 + $0x30] sm:$0xff]
        %v1935 = vld [vmem:[%s1929 + $0x38] sm:$0xff]
        %v1936 = vld [vmem:[%s1929 + $0x48] sm:$0xff]
        %v1937 = vld [vmem:[%s1929 + $0x50] sm:$0xff]
        %v1938 = vld [vmem:[%s1929 + $0x60] sm:$0xff]
        %v1939 = vld [vmem:[%s1929 + $0x68] sm:$0xff]
        %v1940 = vld [vmem:[%s1929 + $0x78] sm:$0xff]
        %v1941 = vld [vmem:[%s1929 + $0x80] sm:$0xff]
        %v1942 = vld [vmem:[%s1929 + $0x90] sm:$0xff]
        %v1943 = vld [vmem:[%s1929 + $0x98] sm:$0xff]
        %v1944 = vld [vmem:[%s1929 + $0xa8] sm:$0xff]
        %v1945 = vld [vmem:[%s1929 + $0xb0] sm:$0xff]
        %v1946 = vld [vmem:[%s1929 + $0x1] sm:$0xff]
        %v1947 = vld [vmem:[%s1929 + $0x9] sm:$0xff]
        %v1948 = vld [vmem:[%s1929 + $0x19] sm:$0xff]
        %v1949 = vld [vmem:[%s1929 + $0x21] sm:$0xff]
        %v1950 = vld [vmem:[%s1929 + $0x31] sm:$0xff]
        %v1951 = vld [vmem:[%s1929 + $0x39] sm:$0xff]
        %v1952 = vld [vmem:[%s1929 + $0x49] sm:$0xff]
        %v1953 = vld [vmem:[%s1929 + $0x51] sm:$0xff]
        %v1954 = vld [vmem:[%s1929 + $0x61] sm:$0xff]
        %v1955 = vld [vmem:[%s1929 + $0x69] sm:$0xff]
        %v1956 = vld [vmem:[%s1929 + $0x79] sm:$0xff]
        %v1957 = vld [vmem:[%s1929 + $0x81] sm:$0xff]
        %v1958 = vld [vmem:[%s1929 + $0x91] sm:$0xff]
        %v1959 = vld [vmem:[%s1929 + $0x99] sm:$0xff]
        %v1960 = vld [vmem:[%s1929 + $0xa9] sm:$0xff]
        %v1961 = vld [vmem:[%s1929 + $0xb1] sm:$0xff]
        %v1962 = vld [vmem:[%s1929 + $0x2] sm:$0xff]
        %v1963 = vld [vmem:[%s1929 + $0xa] sm:$0xff]
        %v1964 = vld [vmem:[%s1929 + $0x1a] sm:$0xff]
        %v1965 = vld [vmem:[%s1929 + $0x22] sm:$0xff]
        %v1966 = vld [vmem:[%s1929 + $0x32] sm:$0xff]
        %v1967 = vld [vmem:[%s1929 + $0x3a] sm:$0xff]
        %v1968 = vld [vmem:[%s1929 + $0x4a] sm:$0xff]
        %v1969 = vld [vmem:[%s1929 + $0x52] sm:$0xff]
        %v1970 = vld [vmem:[%s1929 + $0x62] sm:$0xff]
        %v1971 = vld [vmem:[%s1929 + $0x6a] sm:$0xff]
        %v1972 = vld [vmem:[%s1929 + $0x7a] sm:$0xff]
        %v1973 = vld [vmem:[%s1929 + $0x82] sm:$0xff]
        %v1974 = vld [vmem:[%s1929 + $0x92] sm:$0xff]
        %v1975 = vld [vmem:[%s1929 + $0x9a] sm:$0xff]
        %v1976 = vld [vmem:[%s1929 + $0xaa] sm:$0xff]
        %v1977 = vld [vmem:[%s1929 + $0xb2] sm:$0xff]
        %v1978 = vld [vmem:[%s1929 + $0x3] sm:$0xff]
        %v1979 = vld [vmem:[%s1929 + $0xb] sm:$0xff]
        %v1980 = vld [vmem:[%s1929 + $0x1b] sm:$0xff]
        %v1981 = vld [vmem:[%s1929 + $0x23] sm:$0xff]
        %v1982 = vld [vmem:[%s1929 + $0x33] sm:$0xff]
        %v1983 = vld [vmem:[%s1929 + $0x3b] sm:$0xff]
        %v1984 = vld [vmem:[%s1929 + $0x4b] sm:$0xff]
        %v1985 = vld [vmem:[%s1929 + $0x53] sm:$0xff]
        %v1986 = vld [vmem:[%s1929 + $0x63] sm:$0xff]
        %v1987 = vld [vmem:[%s1929 + $0x6b] sm:$0xff]
        %v1988 = vld [vmem:[%s1929 + $0x7b] sm:$0xff]
        %v1989 = vld [vmem:[%s1929 + $0x83] sm:$0xff]
        %v1990 = vld [vmem:[%s1929 + $0x93] sm:$0xff]
        %v1991 = vld [vmem:[%s1929 + $0x9b] sm:$0xff]
        %v1992 = vld [vmem:[%s1929 + $0xab] sm:$0xff]
        %v1993 = vld [vmem:[%s1929 + $0xb3] sm:$0xff]
        %v1994 = vld [vmem:[%s1929 + $0x4] sm:$0xff]
        %v1995 = vld [vmem:[%s1929 + $0xc] sm:$0xff]
        %v1996 = vld [vmem:[%s1929 + $0x1c] sm:$0xff]
        %v1997 = vld [vmem:[%s1929 + $0x24] sm:$0xff]
        %v1998 = vld [vmem:[%s1929 + $0x34] sm:$0xff]
        %v1999 = vld [vmem:[%s1929 + $0x3c] sm:$0xff]
        %v2000 = vld [vmem:[%s1929 + $0x4c] sm:$0xff]
        %v2001 = vld [vmem:[%s1929 + $0x54] sm:$0xff]
        %v2002 = vld [vmem:[%s1929 + $0x64] sm:$0xff]
        %v2003 = vld [vmem:[%s1929 + $0x6c] sm:$0xff]
        %v2004 = vld [vmem:[%s1929 + $0x7c] sm:$0xff]
        %v2005 = vld [vmem:[%s1929 + $0x84] sm:$0xff]
        %v2006 = vld [vmem:[%s1929 + $0x94] sm:$0xff]
        %v2007 = vld [vmem:[%s1929 + $0x9c] sm:$0xff]
        %v2008 = vld [vmem:[%s1929 + $0xac] sm:$0xff]
        %v2009 = vld [vmem:[%s1929 + $0xb4] sm:$0xff]
        %v2010 = vld [vmem:[%s875] sm:$0xff]
        %v2011 = vld [vmem:[%s875 + $0x8] sm:$0xff]
        %v2012 = vld [vmem:[%s875 + $0x18] sm:$0xff]
        %v2013 = vld [vmem:[%s875 + $0x20] sm:$0xff]
        %v2014 = vld [vmem:[%s875 + $0x30] sm:$0xff]
        %v2015 = vld [vmem:[%s875 + $0x38] sm:$0xff]
        %v2016 = vld [vmem:[%s875 + $0x48] sm:$0xff]
        %v2017 = vld [vmem:[%s875 + $0x50] sm:$0xff]
        %v2018 = vld [vmem:[%s875 + $0x60] sm:$0xff]
        %v2019 = vld [vmem:[%s875 + $0x68] sm:$0xff]
        %v2020 = vld [vmem:[%s875 + $0x78] sm:$0xff]
        %v2021 = vld [vmem:[%s875 + $0x80] sm:$0xff]
        %v2022 = vld [vmem:[%s875 + $0x90] sm:$0xff]
        %v2023 = vld [vmem:[%s875 + $0x98] sm:$0xff]
        %v2024 = vld [vmem:[%s875 + $0xa8] sm:$0xff]
        %v2025 = vld [vmem:[%s875 + $0xb0] sm:$0xff]
        %v2026 = vld [vmem:[%s875 + $0x1] sm:$0xff]
        %v2027 = vld [vmem:[%s875 + $0x9] sm:$0xff]
        %v2028 = vld [vmem:[%s875 + $0x19] sm:$0xff]
        %v2029 = vld [vmem:[%s875 + $0x21] sm:$0xff]
        %v2030 = vld [vmem:[%s875 + $0x31] sm:$0xff]
        %v2031 = vld [vmem:[%s875 + $0x39] sm:$0xff]
        %v2032 = vld [vmem:[%s875 + $0x49] sm:$0xff]
        %v2033 = vld [vmem:[%s875 + $0x51] sm:$0xff]
        %v2034 = vld [vmem:[%s875 + $0x61] sm:$0xff]
        %v2035 = vld [vmem:[%s875 + $0x69] sm:$0xff]
        %v2036 = vld [vmem:[%s875 + $0x79] sm:$0xff]
        %v2037 = vld [vmem:[%s875 + $0x81] sm:$0xff]
        %v2038 = vld [vmem:[%s875 + $0x91] sm:$0xff]
        %v2039 = vld [vmem:[%s875 + $0x99] sm:$0xff]
        %v2040 = vld [vmem:[%s875 + $0xa9] sm:$0xff]
        %v2041 = vld [vmem:[%s875 + $0xb1] sm:$0xff]
        %v2042 = vld [vmem:[%s875 + $0x2] sm:$0xff]
        %v2043 = vld [vmem:[%s875 + $0xa] sm:$0xff]
        %v2044 = vld [vmem:[%s875 + $0x1a] sm:$0xff]
        %v2045 = vld [vmem:[%s875 + $0x22] sm:$0xff]
        %v2046 = vld [vmem:[%s875 + $0x32] sm:$0xff]
        %v2047 = vld [vmem:[%s875 + $0x3a] sm:$0xff]
        %v2048 = vld [vmem:[%s875 + $0x4a] sm:$0xff]
        %v2049 = vld [vmem:[%s875 + $0x52] sm:$0xff]
        %v2050 = vld [vmem:[%s875 + $0x62] sm:$0xff]
        %v2051 = vld [vmem:[%s875 + $0x6a] sm:$0xff]
        %v2052 = vld [vmem:[%s875 + $0x7a] sm:$0xff]
        %v2053 = vld [vmem:[%s875 + $0x82] sm:$0xff]
        %v2054 = vld [vmem:[%s875 + $0x92] sm:$0xff]
        %v2055 = vld [vmem:[%s875 + $0x9a] sm:$0xff]
        %v2056 = vld [vmem:[%s875 + $0xaa] sm:$0xff]
        %v2057 = vld [vmem:[%s875 + $0xb2] sm:$0xff]
        %v2058 = vld [vmem:[%s875 + $0x3] sm:$0xff]
        %v2059 = vld [vmem:[%s875 + $0xb] sm:$0xff]
        %v2060 = vld [vmem:[%s875 + $0x1b] sm:$0xff]
        %v2061 = vld [vmem:[%s875 + $0x23] sm:$0xff]
        %v2062 = vld [vmem:[%s875 + $0x33] sm:$0xff]
        %v2063 = vld [vmem:[%s875 + $0x3b] sm:$0xff]
        %v2064 = vld [vmem:[%s875 + $0x4b] sm:$0xff]
        %v2065 = vld [vmem:[%s875 + $0x53] sm:$0xff]
        %v2066 = vld [vmem:[%s875 + $0x63] sm:$0xff]
        %v2067 = vld [vmem:[%s875 + $0x6b] sm:$0xff]
        %v2068 = vld [vmem:[%s875 + $0x7b] sm:$0xff]
        %v2069 = vld [vmem:[%s875 + $0x83] sm:$0xff]
        %v2070 = vld [vmem:[%s875 + $0x93] sm:$0xff]
        %v2071 = vld [vmem:[%s875 + $0x9b] sm:$0xff]
        %v2072 = vld [vmem:[%s875 + $0xab] sm:$0xff]
        %v2073 = vld [vmem:[%s875 + $0xb3] sm:$0xff]
        %v2074 = vld [vmem:[%s875 + $0x4] sm:$0xff]
        %v2075 = vld [vmem:[%s875 + $0xc] sm:$0xff]
        %v2076 = vld [vmem:[%s875 + $0x1c] sm:$0xff]
        %v2077 = vld [vmem:[%s875 + $0x24] sm:$0xff]
        %v2078 = vld [vmem:[%s875 + $0x34] sm:$0xff]
        %v2079 = vld [vmem:[%s875 + $0x3c] sm:$0xff]
        %v2080 = vld [vmem:[%s875 + $0x4c] sm:$0xff]
        %v2081 = vld [vmem:[%s875 + $0x54] sm:$0xff]
        %v2082 = vld [vmem:[%s875 + $0x64] sm:$0xff]
        %v2083 = vld [vmem:[%s875 + $0x6c] sm:$0xff]
        %v2084 = vld [vmem:[%s875 + $0x7c] sm:$0xff]
        %v2085 = vld [vmem:[%s875 + $0x84] sm:$0xff]
        %v2086 = vld [vmem:[%s875 + $0x94] sm:$0xff]
        %v2087 = vld [vmem:[%s875 + $0x9c] sm:$0xff]
        %v2088 = vld [vmem:[%s875 + $0xac] sm:$0xff]
        %v2089 = vld [vmem:[%s875 + $0xb4] sm:$0xff]
        %v2090 = vld [vmem:[%s839] sm:$0xff]
        %v2091 = vld [vmem:[%s839 + $0x8] sm:$0xff]
        %v2092 = vld [vmem:[%s839 + $0x18] sm:$0xff]
        %v2093 = vld [vmem:[%s839 + $0x20] sm:$0xff]
        %v2094 = vld [vmem:[%s839 + $0x30] sm:$0xff]
        %v2095 = vld [vmem:[%s839 + $0x38] sm:$0xff]
        %v2096 = vld [vmem:[%s839 + $0x48] sm:$0xff]
        %v2097 = vld [vmem:[%s839 + $0x50] sm:$0xff]
        %v2098 = vld [vmem:[%s839 + $0x60] sm:$0xff]
        %v2099 = vld [vmem:[%s839 + $0x68] sm:$0xff]
        %v2100 = vld [vmem:[%s839 + $0x78] sm:$0xff]
        %v2101 = vld [vmem:[%s839 + $0x80] sm:$0xff]
        %v2102 = vld [vmem:[%s839 + $0x90] sm:$0xff]
        %v2103 = vld [vmem:[%s839 + $0x98] sm:$0xff]
        %v2104 = vld [vmem:[%s839 + $0xa8] sm:$0xff]
        %v2105 = vld [vmem:[%s839 + $0xb0] sm:$0xff]
        %v2106 = vld [vmem:[%s839 + $0x1] sm:$0xff]
        %v2107 = vld [vmem:[%s839 + $0x9] sm:$0xff]
        %v2108 = vld [vmem:[%s839 + $0x19] sm:$0xff]
        %v2109 = vld [vmem:[%s839 + $0x21] sm:$0xff]
        %v2110 = vld [vmem:[%s839 + $0x31] sm:$0xff]
        %v2111 = vld [vmem:[%s839 + $0x39] sm:$0xff]
        %v2112 = vld [vmem:[%s839 + $0x49] sm:$0xff]
        %v2113 = vld [vmem:[%s839 + $0x51] sm:$0xff]
        %v2114 = vld [vmem:[%s839 + $0x61] sm:$0xff]
        %v2115 = vld [vmem:[%s839 + $0x69] sm:$0xff]
        %v2116 = vld [vmem:[%s839 + $0x79] sm:$0xff]
        %v2117 = vld [vmem:[%s839 + $0x81] sm:$0xff]
        %v2118 = vld [vmem:[%s839 + $0x91] sm:$0xff]
        %v2119 = vld [vmem:[%s839 + $0x99] sm:$0xff]
        %v2120 = vld [vmem:[%s839 + $0xa9] sm:$0xff]
        %v2121 = vld [vmem:[%s839 + $0xb1] sm:$0xff]
        %v2122 = vld [vmem:[%s839 + $0x2] sm:$0xff]
        %v2123 = vld [vmem:[%s839 + $0xa] sm:$0xff]
        %v2124 = vld [vmem:[%s839 + $0x1a] sm:$0xff]
        %v2125 = vld [vmem:[%s839 + $0x22] sm:$0xff]
        %v2126 = vld [vmem:[%s839 + $0x32] sm:$0xff]
        %v2127 = vld [vmem:[%s839 + $0x3a] sm:$0xff]
        %v2128 = vld [vmem:[%s839 + $0x4a] sm:$0xff]
        %v2129 = vld [vmem:[%s839 + $0x52] sm:$0xff]
        %v2130 = vld [vmem:[%s839 + $0x62] sm:$0xff]
        %v2131 = vld [vmem:[%s839 + $0x6a] sm:$0xff]
        %v2132 = vld [vmem:[%s839 + $0x7a] sm:$0xff]
        %v2133 = vld [vmem:[%s839 + $0x82] sm:$0xff]
        %v2134 = vld [vmem:[%s839 + $0x92] sm:$0xff]
        %v2135 = vld [vmem:[%s839 + $0x9a] sm:$0xff]
        %v2136 = vld [vmem:[%s839 + $0xaa] sm:$0xff]
        %v2137 = vld [vmem:[%s839 + $0xb2] sm:$0xff]
        %v2138 = vld [vmem:[%s839 + $0x3] sm:$0xff]
        %v2139 = vld [vmem:[%s839 + $0xb] sm:$0xff]
        %v2140 = vld [vmem:[%s839 + $0x1b] sm:$0xff]
        %v2141 = vld [vmem:[%s839 + $0x23] sm:$0xff]
        %v2142 = vld [vmem:[%s839 + $0x33] sm:$0xff]
        %v2143 = vld [vmem:[%s839 + $0x3b] sm:$0xff]
        %v2144 = vld [vmem:[%s839 + $0x4b] sm:$0xff]
        %v2145 = vld [vmem:[%s839 + $0x53] sm:$0xff]
        %v2146 = vld [vmem:[%s839 + $0x63] sm:$0xff]
        %v2147 = vld [vmem:[%s839 + $0x6b] sm:$0xff]
        %v2148 = vld [vmem:[%s839 + $0x7b] sm:$0xff]
        %v2149 = vld [vmem:[%s839 + $0x83] sm:$0xff]
        %v2150 = vld [vmem:[%s839 + $0x93] sm:$0xff]
        %v2151 = vld [vmem:[%s839 + $0x9b] sm:$0xff]
        %v2152 = vld [vmem:[%s839 + $0xab] sm:$0xff]
        %v2153 = vld [vmem:[%s839 + $0xb3] sm:$0xff]
        %v2154 = vld [vmem:[%s839 + $0x4] sm:$0xff]
        %v2155 = vld [vmem:[%s839 + $0xc] sm:$0xff]
        %v2156 = vld [vmem:[%s839 + $0x1c] sm:$0xff]
        %v2157 = vld [vmem:[%s839 + $0x24] sm:$0xff]
        %v2158 = vld [vmem:[%s839 + $0x34] sm:$0xff]
        %v2159 = vld [vmem:[%s839 + $0x3c] sm:$0xff]
        %v2160 = vld [vmem:[%s839 + $0x4c] sm:$0xff]
        %v2161 = vld [vmem:[%s839 + $0x54] sm:$0xff]
        %v2162 = vld [vmem:[%s839 + $0x64] sm:$0xff]
        %v2163 = vld [vmem:[%s839 + $0x6c] sm:$0xff]
        %v2164 = vld [vmem:[%s839 + $0x7c] sm:$0xff]
        %v2165 = vld [vmem:[%s839 + $0x84] sm:$0xff]
        %v2166 = vld [vmem:[%s839 + $0x94] sm:$0xff]
        %v2167 = vld [vmem:[%s839 + $0x9c] sm:$0xff]
        %v2168 = vld [vmem:[%s839 + $0xac] sm:$0xff]
        %v2169 = vld [vmem:[%s839 + $0xb4] sm:$0xff]
        %v2170 = vld [vmem:[%s974] sm:$0xff]
        %v2171 = vld [vmem:[%s974 + $0x8] sm:$0xff]
        %v2172 = vld [vmem:[%s974 + $0x18] sm:$0xff]
        %v2173 = vld [vmem:[%s974 + $0x20] sm:$0xff]
        %v2174 = vld [vmem:[%s974 + $0x30] sm:$0xff]
        %v2175 = vld [vmem:[%s974 + $0x38] sm:$0xff]
        %v2176 = vld [vmem:[%s974 + $0x48] sm:$0xff]
        %v2177 = vld [vmem:[%s974 + $0x50] sm:$0xff]
        %v2178 = vld [vmem:[%s974 + $0x60] sm:$0xff]
        %v2179 = vld [vmem:[%s974 + $0x68] sm:$0xff]
        %v2180 = vld [vmem:[%s974 + $0x78] sm:$0xff]
        %v2181 = vld [vmem:[%s974 + $0x80] sm:$0xff]
        %v2182 = vld [vmem:[%s974 + $0x90] sm:$0xff]
        %v2183 = vld [vmem:[%s974 + $0x98] sm:$0xff]
        %v2184 = vld [vmem:[%s974 + $0xa8] sm:$0xff]
        %v2185 = vld [vmem:[%s974 + $0xb0] sm:$0xff]
        %v2186 = vld [vmem:[%s974 + $0x1] sm:$0xff]
        %v2187 = vld [vmem:[%s974 + $0x9] sm:$0xff]
        %v2188 = vld [vmem:[%s974 + $0x19] sm:$0xff]
        %v2189 = vld [vmem:[%s974 + $0x21] sm:$0xff]
        %v2190 = vld [vmem:[%s974 + $0x31] sm:$0xff]
        %v2191 = vld [vmem:[%s974 + $0x39] sm:$0xff]
        %v2192 = vld [vmem:[%s974 + $0x49] sm:$0xff]
        %v2193 = vld [vmem:[%s974 + $0x51] sm:$0xff]
        %v2194 = vld [vmem:[%s974 + $0x61] sm:$0xff]
        %v2195 = vld [vmem:[%s974 + $0x69] sm:$0xff]
        %v2196 = vld [vmem:[%s974 + $0x79] sm:$0xff]
        %v2197 = vld [vmem:[%s974 + $0x81] sm:$0xff]
        %v2198 = vld [vmem:[%s974 + $0x91] sm:$0xff]
        %v2199 = vld [vmem:[%s974 + $0x99] sm:$0xff]
        %v2200 = vld [vmem:[%s974 + $0xa9] sm:$0xff]
        %v2201 = vld [vmem:[%s974 + $0xb1] sm:$0xff]
        %v2202 = vld [vmem:[%s974 + $0x2] sm:$0xff]
        %v2203 = vld [vmem:[%s974 + $0xa] sm:$0xff]
        %v2204 = vld [vmem:[%s974 + $0x1a] sm:$0xff]
        %v2205 = vld [vmem:[%s974 + $0x22] sm:$0xff]
        %v2206 = vld [vmem:[%s974 + $0x32] sm:$0xff]
        %v2207 = vld [vmem:[%s974 + $0x3a] sm:$0xff]
        %v2208 = vld [vmem:[%s974 + $0x4a] sm:$0xff]
        %v2209 = vld [vmem:[%s974 + $0x52] sm:$0xff]
        %v2210 = vld [vmem:[%s974 + $0x62] sm:$0xff]
        %v2211 = vld [vmem:[%s974 + $0x6a] sm:$0xff]
        %v2212 = vld [vmem:[%s974 + $0x7a] sm:$0xff]
        %v2213 = vld [vmem:[%s974 + $0x82] sm:$0xff]
        %v2214 = vld [vmem:[%s974 + $0x92] sm:$0xff]
        %v2215 = vld [vmem:[%s974 + $0x9a] sm:$0xff]
        %v2216 = vld [vmem:[%s974 + $0xaa] sm:$0xff]
        %v2217 = vld [vmem:[%s974 + $0xb2] sm:$0xff]
        %v2218 = vld [vmem:[%s974 + $0x3] sm:$0xff]
        %v2219 = vld [vmem:[%s974 + $0xb] sm:$0xff]
        %v2220 = vld [vmem:[%s974 + $0x1b] sm:$0xff]
        %v2221 = vld [vmem:[%s974 + $0x23] sm:$0xff]
        %v2222 = vld [vmem:[%s974 + $0x33] sm:$0xff]
        %v2223 = vld [vmem:[%s974 + $0x3b] sm:$0xff]
        %v2224 = vld [vmem:[%s974 + $0x4b] sm:$0xff]
        %v2225 = vld [vmem:[%s974 + $0x53] sm:$0xff]
        %v2226 = vld [vmem:[%s974 + $0x63] sm:$0xff]
        %v2227 = vld [vmem:[%s974 + $0x6b] sm:$0xff]
        %v2228 = vld [vmem:[%s974 + $0x7b] sm:$0xff]
        %v2229 = vld [vmem:[%s974 + $0x83] sm:$0xff]
        %v2230 = vld [vmem:[%s974 + $0x93] sm:$0xff]
        %v2231 = vld [vmem:[%s974 + $0x9b] sm:$0xff]
        %v2232 = vld [vmem:[%s974 + $0xab] sm:$0xff]
        %v2233 = vld [vmem:[%s974 + $0xb3] sm:$0xff]
        %v2234 = vld [vmem:[%s974 + $0x4] sm:$0xff]
        %v2235 = vld [vmem:[%s974 + $0xc] sm:$0xff]
        %v2236 = vld [vmem:[%s974 + $0x1c] sm:$0xff]
        %v2237 = vld [vmem:[%s974 + $0x24] sm:$0xff]
        %v2238 = vld [vmem:[%s974 + $0x34] sm:$0xff]
        %v2239 = vld [vmem:[%s974 + $0x3c] sm:$0xff]
        %v2240 = vld [vmem:[%s974 + $0x4c] sm:$0xff]
        %v2241 = vld [vmem:[%s974 + $0x54] sm:$0xff]
        %v2242 = vld [vmem:[%s974 + $0x64] sm:$0xff]
        %v2243 = vld [vmem:[%s974 + $0x6c] sm:$0xff]
        %v2244 = vld [vmem:[%s974 + $0x7c] sm:$0xff]
        %v2245 = vld [vmem:[%s974 + $0x84] sm:$0xff]
        %v2246 = vld [vmem:[%s974 + $0x94] sm:$0xff]
        %v2247 = vld [vmem:[%s974 + $0x9c] sm:$0xff]
        %v2248 = vld [vmem:[%s974 + $0xac] sm:$0xff]
        %v2249 = vld [vmem:[%s974 + $0xb4] sm:$0xff]
        %s2250 = sadd.s32 %s836, 4
        %s2251 = smul.u32 %s2250, 24
        %s2252 = scalar_lea.vmem [#allocation2], %s2251
        %v2253 = vld [vmem:[%s2252] sm:$0xff]
        %v2254 = vld [vmem:[%s2252 + $0x8] sm:$0xff]
        %v2255 = vld [vmem:[%s2252 + $0x18] sm:$0xff]
        %v2256 = vld [vmem:[%s2252 + $0x20] sm:$0xff]
        %v2257 = vld [vmem:[%s2252 + $0x30] sm:$0xff]
        %v2258 = vld [vmem:[%s2252 + $0x38] sm:$0xff]
        %v2259 = vld [vmem:[%s2252 + $0x48] sm:$0xff]
        %v2260 = vld [vmem:[%s2252 + $0x50] sm:$0xff]
        %v2261 = vld [vmem:[%s2252 + $0x60] sm:$0xff]
        %v2262 = vld [vmem:[%s2252 + $0x68] sm:$0xff]
        %v2263 = vld [vmem:[%s2252 + $0x78] sm:$0xff]
        %v2264 = vld [vmem:[%s2252 + $0x80] sm:$0xff]
        %v2265 = vld [vmem:[%s2252 + $0x90] sm:$0xff]
        %v2266 = vld [vmem:[%s2252 + $0x98] sm:$0xff]
        %v2267 = vld [vmem:[%s2252 + $0xa8] sm:$0xff]
        %v2268 = vld [vmem:[%s2252 + $0xb0] sm:$0xff]
        %v2269 = vld [vmem:[%s2252 + $0x1] sm:$0xff]
        %v2270 = vld [vmem:[%s2252 + $0x9] sm:$0xff]
        %v2271 = vld [vmem:[%s2252 + $0x19] sm:$0xff]
        %v2272 = vld [vmem:[%s2252 + $0x21] sm:$0xff]
        %v2273 = vld [vmem:[%s2252 + $0x31] sm:$0xff]
        %v2274 = vld [vmem:[%s2252 + $0x39] sm:$0xff]
        %v2275 = vld [vmem:[%s2252 + $0x49] sm:$0xff]
        %v2276 = vld [vmem:[%s2252 + $0x51] sm:$0xff]
        %v2277 = vld [vmem:[%s2252 + $0x61] sm:$0xff]
        %v2278 = vld [vmem:[%s2252 + $0x69] sm:$0xff]
        %v2279 = vld [vmem:[%s2252 + $0x79] sm:$0xff]
        %v2280 = vld [vmem:[%s2252 + $0x81] sm:$0xff]
        %v2281 = vld [vmem:[%s2252 + $0x91] sm:$0xff]
        %v2282 = vld [vmem:[%s2252 + $0x99] sm:$0xff]
        %v2283 = vld [vmem:[%s2252 + $0xa9] sm:$0xff]
        %v2284 = vld [vmem:[%s2252 + $0xb1] sm:$0xff]
        %v2285 = vld [vmem:[%s2252 + $0x2] sm:$0xff]
        %v2286 = vld [vmem:[%s2252 + $0xa] sm:$0xff]
        %v2287 = vld [vmem:[%s2252 + $0x1a] sm:$0xff]
        %v2288 = vld [vmem:[%s2252 + $0x22] sm:$0xff]
        %v2289 = vld [vmem:[%s2252 + $0x32] sm:$0xff]
        %v2290 = vld [vmem:[%s2252 + $0x3a] sm:$0xff]
        %v2291 = vld [vmem:[%s2252 + $0x4a] sm:$0xff]
        %v2292 = vld [vmem:[%s2252 + $0x52] sm:$0xff]
        %v2293 = vld [vmem:[%s2252 + $0x62] sm:$0xff]
        %v2294 = vld [vmem:[%s2252 + $0x6a] sm:$0xff]
        %v2295 = vld [vmem:[%s2252 + $0x7a] sm:$0xff]
        %v2296 = vld [vmem:[%s2252 + $0x82] sm:$0xff]
        %v2297 = vld [vmem:[%s2252 + $0x92] sm:$0xff]
        %v2298 = vld [vmem:[%s2252 + $0x9a] sm:$0xff]
        %v2299 = vld [vmem:[%s2252 + $0xaa] sm:$0xff]
        %v2300 = vld [vmem:[%s2252 + $0xb2] sm:$0xff]
        %v2301 = vld [vmem:[%s2252 + $0x3] sm:$0xff]
        %v2302 = vld [vmem:[%s2252 + $0xb] sm:$0xff]
        %v2303 = vld [vmem:[%s2252 + $0x1b] sm:$0xff]
        %v2304 = vld [vmem:[%s2252 + $0x23] sm:$0xff]
        %v2305 = vld [vmem:[%s2252 + $0x33] sm:$0xff]
        %v2306 = vld [vmem:[%s2252 + $0x3b] sm:$0xff]
        %v2307 = vld [vmem:[%s2252 + $0x4b] sm:$0xff]
        %v2308 = vld [vmem:[%s2252 + $0x53] sm:$0xff]
        %v2309 = vld [vmem:[%s2252 + $0x63] sm:$0xff]
        %v2310 = vld [vmem:[%s2252 + $0x6b] sm:$0xff]
        %v2311 = vld [vmem:[%s2252 + $0x7b] sm:$0xff]
        %v2312 = vld [vmem:[%s2252 + $0x83] sm:$0xff]
        %v2313 = vld [vmem:[%s2252 + $0x93] sm:$0xff]
        %v2314 = vld [vmem:[%s2252 + $0x9b] sm:$0xff]
        %v2315 = vld [vmem:[%s2252 + $0xab] sm:$0xff]
        %v2316 = vld [vmem:[%s2252 + $0xb3] sm:$0xff]
        %v2317 = vld [vmem:[%s2252 + $0x4] sm:$0xff]
        %v2318 = vld [vmem:[%s2252 + $0xc] sm:$0xff]
        %v2319 = vld [vmem:[%s2252 + $0x1c] sm:$0xff]
        %v2320 = vld [vmem:[%s2252 + $0x24] sm:$0xff]
        %v2321 = vld [vmem:[%s2252 + $0x34] sm:$0xff]
        %v2322 = vld [vmem:[%s2252 + $0x3c] sm:$0xff]
        %v2323 = vld [vmem:[%s2252 + $0x4c] sm:$0xff]
        %v2324 = vld [vmem:[%s2252 + $0x54] sm:$0xff]
        %v2325 = vld [vmem:[%s2252 + $0x64] sm:$0xff]
        %v2326 = vld [vmem:[%s2252 + $0x6c] sm:$0xff]
        %v2327 = vld [vmem:[%s2252 + $0x7c] sm:$0xff]
        %v2328 = vld [vmem:[%s2252 + $0x84] sm:$0xff]
        %v2329 = vld [vmem:[%s2252 + $0x94] sm:$0xff]
        %v2330 = vld [vmem:[%s2252 + $0x9c] sm:$0xff]
        %v2331 = vld [vmem:[%s2252 + $0xac] sm:$0xff]
        %v2332 = vld [vmem:[%s2252 + $0xb4] sm:$0xff]
        %2349 = vrot.lane.b32.xlu0 %v1930, 116
        %v2350 = vpop.permute.xlu0 %2349
        %2351 = vrot.lane.b32.xlu0 %v1931, 116
        %v2352 = vpop.permute.xlu0 %2351
        %2353 = vrot.lane.b32.xlu0 %v1932, 116
        %v2354 = vpop.permute.xlu0 %2353
        %2355 = vrot.lane.b32.xlu0 %v1933, 116
        %v2356 = vpop.permute.xlu0 %2355
        %2357 = vrot.lane.b32.xlu0 %v1934, 116
        %v2358 = vpop.permute.xlu0 %2357
        %2359 = vrot.lane.b32.xlu0 %v1935, 116
        %v2360 = vpop.permute.xlu0 %2359
        %2361 = vrot.lane.b32.xlu0 %v1936, 116
        %v2362 = vpop.permute.xlu0 %2361
        %2363 = vrot.lane.b32.xlu0 %v1937, 116
        %v2364 = vpop.permute.xlu0 %2363
        %2365 = vrot.lane.b32.xlu0 %v1938, 116
        %v2366 = vpop.permute.xlu0 %2365
        %2367 = vrot.lane.b32.xlu0 %v1939, 116
        %v2368 = vpop.permute.xlu0 %2367
        %2369 = vrot.lane.b32.xlu0 %v1940, 116
        %v2370 = vpop.permute.xlu0 %2369
        %2371 = vrot.lane.b32.xlu0 %v1941, 116
        %v2372 = vpop.permute.xlu0 %2371
        %2373 = vrot.lane.b32.xlu0 %v1942, 116
        %v2374 = vpop.permute.xlu0 %2373
        %2375 = vrot.lane.b32.xlu0 %v1943, 116
        %v2376 = vpop.permute.xlu0 %2375
        %2377 = vrot.lane.b32.xlu0 %v1944, 116
        %v2378 = vpop.permute.xlu0 %2377
        %2379 = vrot.lane.b32.xlu0 %v1945, 116
        %v2380 = vpop.permute.xlu0 %2379
        %2413 = vrot.lane.b32.xlu0 %v1946, 120
        %v2414 = vpop.permute.xlu0 %2413
        %2415 = vrot.lane.b32.xlu0 %v1947, 120
        %v2416 = vpop.permute.xlu0 %2415
        %2417 = vrot.lane.b32.xlu0 %v1948, 120
        %v2418 = vpop.permute.xlu0 %2417
        %2419 = vrot.lane.b32.xlu0 %v1949, 120
        %v2420 = vpop.permute.xlu0 %2419
        %2421 = vrot.lane.b32.xlu0 %v1950, 120
        %v2422 = vpop.permute.xlu0 %2421
        %2423 = vrot.lane.b32.xlu0 %v1951, 120
        %v2424 = vpop.permute.xlu0 %2423
        %2425 = vrot.lane.b32.xlu0 %v1952, 120
        %v2426 = vpop.permute.xlu0 %2425
        %2427 = vrot.lane.b32.xlu0 %v1953, 120
        %v2428 = vpop.permute.xlu0 %2427
        %2429 = vrot.lane.b32.xlu0 %v1954, 120
        %v2430 = vpop.permute.xlu0 %2429
        %2431 = vrot.lane.b32.xlu0 %v1955, 120
        %v2432 = vpop.permute.xlu0 %2431
        %2433 = vrot.lane.b32.xlu0 %v1956, 120
        %v2434 = vpop.permute.xlu0 %2433
        %2435 = vrot.lane.b32.xlu0 %v1957, 120
        %v2436 = vpop.permute.xlu0 %2435
        %2437 = vrot.lane.b32.xlu0 %v1958, 120
        %v2438 = vpop.permute.xlu0 %2437
        %2439 = vrot.lane.b32.xlu0 %v1959, 120
        %v2440 = vpop.permute.xlu0 %2439
        %2441 = vrot.lane.b32.xlu0 %v1960, 120
        %v2442 = vpop.permute.xlu0 %2441
        %2443 = vrot.lane.b32.xlu0 %v1961, 120
        %v2444 = vpop.permute.xlu0 %2443
        %2477 = vrot.lane.b32.xlu0 %v1962, 124
        %v2478 = vpop.permute.xlu0 %2477
        %2479 = vrot.lane.b32.xlu0 %v1963, 124
        %v2480 = vpop.permute.xlu0 %2479
        %2481 = vrot.lane.b32.xlu0 %v1964, 124
        %v2482 = vpop.permute.xlu0 %2481
        %2483 = vrot.lane.b32.xlu0 %v1965, 124
        %v2484 = vpop.permute.xlu0 %2483
        %2485 = vrot.lane.b32.xlu0 %v1966, 124
        %v2486 = vpop.permute.xlu0 %2485
        %2487 = vrot.lane.b32.xlu0 %v1967, 124
        %v2488 = vpop.permute.xlu0 %2487
        %2489 = vrot.lane.b32.xlu0 %v1968, 124
        %v2490 = vpop.permute.xlu0 %2489
        %2491 = vrot.lane.b32.xlu0 %v1969, 124
        %v2492 = vpop.permute.xlu0 %2491
        %2493 = vrot.lane.b32.xlu0 %v1970, 124
        %v2494 = vpop.permute.xlu0 %2493
        %2495 = vrot.lane.b32.xlu0 %v1971, 124
        %v2496 = vpop.permute.xlu0 %2495
        %2497 = vrot.lane.b32.xlu0 %v1972, 124
        %v2498 = vpop.permute.xlu0 %2497
        %2499 = vrot.lane.b32.xlu0 %v1973, 124
        %v2500 = vpop.permute.xlu0 %2499
        %2501 = vrot.lane.b32.xlu0 %v1974, 124
        %v2502 = vpop.permute.xlu0 %2501
        %2503 = vrot.lane.b32.xlu0 %v1975, 124
        %v2504 = vpop.permute.xlu0 %2503
        %2505 = vrot.lane.b32.xlu0 %v1976, 124
        %v2506 = vpop.permute.xlu0 %2505
        %2507 = vrot.lane.b32.xlu0 %v1977, 124
        %v2508 = vpop.permute.xlu0 %2507
        %2541 = vrot.lane.b32.xlu0 %v1994, 4
        %v2542 = vpop.permute.xlu0 %2541
        %2543 = vrot.lane.b32.xlu0 %v1995, 4
        %v2544 = vpop.permute.xlu0 %2543
        %2545 = vrot.lane.b32.xlu0 %v1996, 4
        %v2546 = vpop.permute.xlu0 %2545
        %2547 = vrot.lane.b32.xlu0 %v1997, 4
        %v2548 = vpop.permute.xlu0 %2547
        %2549 = vrot.lane.b32.xlu0 %v1998, 4
        %v2550 = vpop.permute.xlu0 %2549
        %2551 = vrot.lane.b32.xlu0 %v1999, 4
        %v2552 = vpop.permute.xlu0 %2551
        %2553 = vrot.lane.b32.xlu0 %v2000, 4
        %v2554 = vpop.permute.xlu0 %2553
        %2555 = vrot.lane.b32.xlu0 %v2001, 4
        %v2556 = vpop.permute.xlu0 %2555
        %2557 = vrot.lane.b32.xlu0 %v2002, 4
        %v2558 = vpop.permute.xlu0 %2557
        %2559 = vrot.lane.b32.xlu0 %v2003, 4
        %v2560 = vpop.permute.xlu0 %2559
        %2561 = vrot.lane.b32.xlu0 %v2004, 4
        %v2562 = vpop.permute.xlu0 %2561
        %2563 = vrot.lane.b32.xlu0 %v2005, 4
        %v2564 = vpop.permute.xlu0 %2563
        %2565 = vrot.lane.b32.xlu0 %v2006, 4
        %v2566 = vpop.permute.xlu0 %2565
        %2567 = vrot.lane.b32.xlu0 %v2007, 4
        %v2568 = vpop.permute.xlu0 %2567
        %2569 = vrot.lane.b32.xlu0 %v2008, 4
        %v2570 = vpop.permute.xlu0 %2569
        %2571 = vrot.lane.b32.xlu0 %v2009, 4
        %v2572 = vpop.permute.xlu0 %2571
        %2605 = vrot.lane.b32.xlu0 %v2010, 8
        %v2606 = vpop.permute.xlu0 %2605
        %2607 = vrot.lane.b32.xlu0 %v2011, 8
        %v2608 = vpop.permute.xlu0 %2607
        %2609 = vrot.lane.b32.xlu0 %v2012, 8
        %v2610 = vpop.permute.xlu0 %2609
        %2611 = vrot.lane.b32.xlu0 %v2013, 8
        %v2612 = vpop.permute.xlu0 %2611
        %2613 = vrot.lane.b32.xlu0 %v2014, 8
        %v2614 = vpop.permute.xlu0 %2613
        %2615 = vrot.lane.b32.xlu0 %v2015, 8
        %v2616 = vpop.permute.xlu0 %2615
        %2617 = vrot.lane.b32.xlu0 %v2016, 8
        %v2618 = vpop.permute.xlu0 %2617
        %2619 = vrot.lane.b32.xlu0 %v2017, 8
        %v2620 = vpop.permute.xlu0 %2619
        %2621 = vrot.lane.b32.xlu0 %v2018, 8
        %v2622 = vpop.permute.xlu0 %2621
        %2623 = vrot.lane.b32.xlu0 %v2019, 8
        %v2624 = vpop.permute.xlu0 %2623
        %2625 = vrot.lane.b32.xlu0 %v2020, 8
        %v2626 = vpop.permute.xlu0 %2625
        %2627 = vrot.lane.b32.xlu0 %v2021, 8
        %v2628 = vpop.permute.xlu0 %2627
        %2629 = vrot.lane.b32.xlu0 %v2022, 8
        %v2630 = vpop.permute.xlu0 %2629
        %2631 = vrot.lane.b32.xlu0 %v2023, 8
        %v2632 = vpop.permute.xlu0 %2631
        %2633 = vrot.lane.b32.xlu0 %v2024, 8
        %v2634 = vpop.permute.xlu0 %2633
        %2635 = vrot.lane.b32.xlu0 %v2025, 8
        %v2636 = vpop.permute.xlu0 %2635
        %2669 = vrot.lane.b32.xlu0 %v2026, 12
        %v2670 = vpop.permute.xlu0 %2669
        %2671 = vrot.lane.b32.xlu0 %v2027, 12
        %v2672 = vpop.permute.xlu0 %2671
        %2673 = vrot.lane.b32.xlu0 %v2028, 12
        %v2674 = vpop.permute.xlu0 %2673
        %2675 = vrot.lane.b32.xlu0 %v2029, 12
        %v2676 = vpop.permute.xlu0 %2675
        %2677 = vrot.lane.b32.xlu0 %v2030, 12
        %v2678 = vpop.permute.xlu0 %2677
        %2679 = vrot.lane.b32.xlu0 %v2031, 12
        %v2680 = vpop.permute.xlu0 %2679
        %2681 = vrot.lane.b32.xlu0 %v2032, 12
        %v2682 = vpop.permute.xlu0 %2681
        %2683 = vrot.lane.b32.xlu0 %v2033, 12
        %v2684 = vpop.permute.xlu0 %2683
        %2685 = vrot.lane.b32.xlu0 %v2034, 12
        %v2686 = vpop.permute.xlu0 %2685
        %2687 = vrot.lane.b32.xlu0 %v2035, 12
        %v2688 = vpop.permute.xlu0 %2687
        %2689 = vrot.lane.b32.xlu0 %v2036, 12
        %v2690 = vpop.permute.xlu0 %2689
        %2691 = vrot.lane.b32.xlu0 %v2037, 12
        %v2692 = vpop.permute.xlu0 %2691
        %2693 = vrot.lane.b32.xlu0 %v2038, 12
        %v2694 = vpop.permute.xlu0 %2693
        %2695 = vrot.lane.b32.xlu0 %v2039, 12
        %v2696 = vpop.permute.xlu0 %2695
        %2697 = vrot.lane.b32.xlu0 %v2040, 12
        %v2698 = vpop.permute.xlu0 %2697
        %2699 = vrot.lane.b32.xlu0 %v2041, 12
        %v2700 = vpop.permute.xlu0 %2699
        %2733 = vrot.lane.b32.xlu0 %v2042, 16
        %v2734 = vpop.permute.xlu0 %2733
        %2735 = vrot.lane.b32.xlu0 %v2043, 16
        %v2736 = vpop.permute.xlu0 %2735
        %2737 = vrot.lane.b32.xlu0 %v2044, 16
        %v2738 = vpop.permute.xlu0 %2737
        %2739 = vrot.lane.b32.xlu0 %v2045, 16
        %v2740 = vpop.permute.xlu0 %2739
        %2741 = vrot.lane.b32.xlu0 %v2046, 16
        %v2742 = vpop.permute.xlu0 %2741
        %2743 = vrot.lane.b32.xlu0 %v2047, 16
        %v2744 = vpop.permute.xlu0 %2743
        %2745 = vrot.lane.b32.xlu0 %v2048, 16
        %v2746 = vpop.permute.xlu0 %2745
        %2747 = vrot.lane.b32.xlu0 %v2049, 16
        %v2748 = vpop.permute.xlu0 %2747
        %2749 = vrot.lane.b32.xlu0 %v2050, 16
        %v2750 = vpop.permute.xlu0 %2749
        %2751 = vrot.lane.b32.xlu0 %v2051, 16
        %v2752 = vpop.permute.xlu0 %2751
        %2753 = vrot.lane.b32.xlu0 %v2052, 16
        %v2754 = vpop.permute.xlu0 %2753
        %2755 = vrot.lane.b32.xlu0 %v2053, 16
        %v2756 = vpop.permute.xlu0 %2755
        %2757 = vrot.lane.b32.xlu0 %v2054, 16
        %v2758 = vpop.permute.xlu0 %2757
        %2759 = vrot.lane.b32.xlu0 %v2055, 16
        %v2760 = vpop.permute.xlu0 %2759
        %2761 = vrot.lane.b32.xlu0 %v2056, 16
        %v2762 = vpop.permute.xlu0 %2761
        %2763 = vrot.lane.b32.xlu0 %v2057, 16
        %v2764 = vpop.permute.xlu0 %2763
        %2797 = vrot.lane.b32.xlu0 %v2058, 20
        %v2798 = vpop.permute.xlu0 %2797
        %2799 = vrot.lane.b32.xlu0 %v2059, 20
        %v2800 = vpop.permute.xlu0 %2799
        %2801 = vrot.lane.b32.xlu0 %v2060, 20
        %v2802 = vpop.permute.xlu0 %2801
        %2803 = vrot.lane.b32.xlu0 %v2061, 20
        %v2804 = vpop.permute.xlu0 %2803
        %2805 = vrot.lane.b32.xlu0 %v2062, 20
        %v2806 = vpop.permute.xlu0 %2805
        %2807 = vrot.lane.b32.xlu0 %v2063, 20
        %v2808 = vpop.permute.xlu0 %2807
        %2809 = vrot.lane.b32.xlu0 %v2064, 20
        %v2810 = vpop.permute.xlu0 %2809
        %2811 = vrot.lane.b32.xlu0 %v2065, 20
        %v2812 = vpop.permute.xlu0 %2811
        %2813 = vrot.lane.b32.xlu0 %v2066, 20
        %v2814 = vpop.permute.xlu0 %2813
        %2815 = vrot.lane.b32.xlu0 %v2067, 20
        %v2816 = vpop.permute.xlu0 %2815
        %2817 = vrot.lane.b32.xlu0 %v2068, 20
        %v2818 = vpop.permute.xlu0 %2817
        %2819 = vrot.lane.b32.xlu0 %v2069, 20
        %v2820 = vpop.permute.xlu0 %2819
        %2821 = vrot.lane.b32.xlu0 %v2070, 20
        %v2822 = vpop.permute.xlu0 %2821
        %2823 = vrot.lane.b32.xlu0 %v2071, 20
        %v2824 = vpop.permute.xlu0 %2823
        %2825 = vrot.lane.b32.xlu0 %v2072, 20
        %v2826 = vpop.permute.xlu0 %2825
        %2827 = vrot.lane.b32.xlu0 %v2073, 20
        %v2828 = vpop.permute.xlu0 %2827
        %2861 = vrot.lane.b32.xlu0 %v2074, 24
        %v2862 = vpop.permute.xlu0 %2861
        %2863 = vrot.lane.b32.xlu0 %v2075, 24
        %v2864 = vpop.permute.xlu0 %2863
        %2865 = vrot.lane.b32.xlu0 %v2076, 24
        %v2866 = vpop.permute.xlu0 %2865
        %2867 = vrot.lane.b32.xlu0 %v2077, 24
        %v2868 = vpop.permute.xlu0 %2867
        %2869 = vrot.lane.b32.xlu0 %v2078, 24
        %v2870 = vpop.permute.xlu0 %2869
        %2871 = vrot.lane.b32.xlu0 %v2079, 24
        %v2872 = vpop.permute.xlu0 %2871
        %2873 = vrot.lane.b32.xlu0 %v2080, 24
        %v2874 = vpop.permute.xlu0 %2873
        %2875 = vrot.lane.b32.xlu0 %v2081, 24
        %v2876 = vpop.permute.xlu0 %2875
        %2877 = vrot.lane.b32.xlu0 %v2082, 24
        %v2878 = vpop.permute.xlu0 %2877
        %2879 = vrot.lane.b32.xlu0 %v2083, 24
        %v2880 = vpop.permute.xlu0 %2879
        %2881 = vrot.lane.b32.xlu0 %v2084, 24
        %v2882 = vpop.permute.xlu0 %2881
        %2883 = vrot.lane.b32.xlu0 %v2085, 24
        %v2884 = vpop.permute.xlu0 %2883
        %2885 = vrot.lane.b32.xlu0 %v2086, 24
        %v2886 = vpop.permute.xlu0 %2885
        %2887 = vrot.lane.b32.xlu0 %v2087, 24
        %v2888 = vpop.permute.xlu0 %2887
        %2889 = vrot.lane.b32.xlu0 %v2088, 24
        %v2890 = vpop.permute.xlu0 %2889
        %2891 = vrot.lane.b32.xlu0 %v2089, 24
        %v2892 = vpop.permute.xlu0 %2891
        %2925 = vrot.lane.b32.xlu0 %v2090, 28
        %v2926 = vpop.permute.xlu0 %2925
        %2927 = vrot.lane.b32.xlu0 %v2091, 28
        %v2928 = vpop.permute.xlu0 %2927
        %2929 = vrot.lane.b32.xlu0 %v2092, 28
        %v2930 = vpop.permute.xlu0 %2929
        %2931 = vrot.lane.b32.xlu0 %v2093, 28
        %v2932 = vpop.permute.xlu0 %2931
        %2933 = vrot.lane.b32.xlu0 %v2094, 28
        %v2934 = vpop.permute.xlu0 %2933
        %2935 = vrot.lane.b32.xlu0 %v2095, 28
        %v2936 = vpop.permute.xlu0 %2935
        %2937 = vrot.lane.b32.xlu0 %v2096, 28
        %v2938 = vpop.permute.xlu0 %2937
        %2939 = vrot.lane.b32.xlu0 %v2097, 28
        %v2940 = vpop.permute.xlu0 %2939
        %2941 = vrot.lane.b32.xlu0 %v2098, 28
        %v2942 = vpop.permute.xlu0 %2941
        %2943 = vrot.lane.b32.xlu0 %v2099, 28
        %v2944 = vpop.permute.xlu0 %2943
        %2945 = vrot.lane.b32.xlu0 %v2100, 28
        %v2946 = vpop.permute.xlu0 %2945
        %2947 = vrot.lane.b32.xlu0 %v2101, 28
        %v2948 = vpop.permute.xlu0 %2947
        %2949 = vrot.lane.b32.xlu0 %v2102, 28
        %v2950 = vpop.permute.xlu0 %2949
        %2951 = vrot.lane.b32.xlu0 %v2103, 28
        %v2952 = vpop.permute.xlu0 %2951
        %2953 = vrot.lane.b32.xlu0 %v2104, 28
        %v2954 = vpop.permute.xlu0 %2953
        %2955 = vrot.lane.b32.xlu0 %v2105, 28
        %v2956 = vpop.permute.xlu0 %2955
        %2989 = vrot.lane.b32.xlu0 %v2106, 32
        %v2990 = vpop.permute.xlu0 %2989
        %2991 = vrot.lane.b32.xlu0 %v2107, 32
        %v2992 = vpop.permute.xlu0 %2991
        %2993 = vrot.lane.b32.xlu0 %v2108, 32
        %v2994 = vpop.permute.xlu0 %2993
        %2995 = vrot.lane.b32.xlu0 %v2109, 32
        %v2996 = vpop.permute.xlu0 %2995
        %2997 = vrot.lane.b32.xlu0 %v2110, 32
        %v2998 = vpop.permute.xlu0 %2997
        %2999 = vrot.lane.b32.xlu0 %v2111, 32
        %v3000 = vpop.permute.xlu0 %2999
        %3001 = vrot.lane.b32.xlu0 %v2112, 32
        %v3002 = vpop.permute.xlu0 %3001
        %3003 = vrot.lane.b32.xlu0 %v2113, 32
        %v3004 = vpop.permute.xlu0 %3003
        %3005 = vrot.lane.b32.xlu0 %v2114, 32
        %v3006 = vpop.permute.xlu0 %3005
        %3007 = vrot.lane.b32.xlu0 %v2115, 32
        %v3008 = vpop.permute.xlu0 %3007
        %3009 = vrot.lane.b32.xlu0 %v2116, 32
        %v3010 = vpop.permute.xlu0 %3009
        %3011 = vrot.lane.b32.xlu0 %v2117, 32
        %v3012 = vpop.permute.xlu0 %3011
        %3013 = vrot.lane.b32.xlu0 %v2118, 32
        %v3014 = vpop.permute.xlu0 %3013
        %3015 = vrot.lane.b32.xlu0 %v2119, 32
        %v3016 = vpop.permute.xlu0 %3015
        %3017 = vrot.lane.b32.xlu0 %v2120, 32
        %v3018 = vpop.permute.xlu0 %3017
        %3019 = vrot.lane.b32.xlu0 %v2121, 32
        %v3020 = vpop.permute.xlu0 %3019
        %3053 = vrot.lane.b32.xlu0 %v2122, 36
        %v3054 = vpop.permute.xlu0 %3053
        %3055 = vrot.lane.b32.xlu0 %v2123, 36
        %v3056 = vpop.permute.xlu0 %3055
        %3057 = vrot.lane.b32.xlu0 %v2124, 36
        %v3058 = vpop.permute.xlu0 %3057
        %3059 = vrot.lane.b32.xlu0 %v2125, 36
        %v3060 = vpop.permute.xlu0 %3059
        %3061 = vrot.lane.b32.xlu0 %v2126, 36
        %v3062 = vpop.permute.xlu0 %3061
        %3063 = vrot.lane.b32.xlu0 %v2127, 36
        %v3064 = vpop.permute.xlu0 %3063
        %3065 = vrot.lane.b32.xlu0 %v2128, 36
        %v3066 = vpop.permute.xlu0 %3065
        %3067 = vrot.lane.b32.xlu0 %v2129, 36
        %v3068 = vpop.permute.xlu0 %3067
        %3069 = vrot.lane.b32.xlu0 %v2130, 36
        %v3070 = vpop.permute.xlu0 %3069
        %3071 = vrot.lane.b32.xlu0 %v2131, 36
        %v3072 = vpop.permute.xlu0 %3071
        %3073 = vrot.lane.b32.xlu0 %v2132, 36
        %v3074 = vpop.permute.xlu0 %3073
        %3075 = vrot.lane.b32.xlu0 %v2133, 36
        %v3076 = vpop.permute.xlu0 %3075
        %3077 = vrot.lane.b32.xlu0 %v2134, 36
        %v3078 = vpop.permute.xlu0 %3077
        %3079 = vrot.lane.b32.xlu0 %v2135, 36
        %v3080 = vpop.permute.xlu0 %3079
        %3081 = vrot.lane.b32.xlu0 %v2136, 36
        %v3082 = vpop.permute.xlu0 %3081
        %3083 = vrot.lane.b32.xlu0 %v2137, 36
        %v3084 = vpop.permute.xlu0 %3083
        %3117 = vrot.lane.b32.xlu0 %v2138, 40
        %v3118 = vpop.permute.xlu0 %3117
        %3119 = vrot.lane.b32.xlu0 %v2139, 40
        %v3120 = vpop.permute.xlu0 %3119
        %3121 = vrot.lane.b32.xlu0 %v2140, 40
        %v3122 = vpop.permute.xlu0 %3121
        %3123 = vrot.lane.b32.xlu0 %v2141, 40
        %v3124 = vpop.permute.xlu0 %3123
        %3125 = vrot.lane.b32.xlu0 %v2142, 40
        %v3126 = vpop.permute.xlu0 %3125
        %3127 = vrot.lane.b32.xlu0 %v2143, 40
        %v3128 = vpop.permute.xlu0 %3127
        %3129 = vrot.lane.b32.xlu0 %v2144, 40
        %v3130 = vpop.permute.xlu0 %3129
        %3131 = vrot.lane.b32.xlu0 %v2145, 40
        %v3132 = vpop.permute.xlu0 %3131
        %3133 = vrot.lane.b32.xlu0 %v2146, 40
        %v3134 = vpop.permute.xlu0 %3133
        %3135 = vrot.lane.b32.xlu0 %v2147, 40
        %v3136 = vpop.permute.xlu0 %3135
        %3137 = vrot.lane.b32.xlu0 %v2148, 40
        %v3138 = vpop.permute.xlu0 %3137
        %3139 = vrot.lane.b32.xlu0 %v2149, 40
        %v3140 = vpop.permute.xlu0 %3139
        %3141 = vrot.lane.b32.xlu0 %v2150, 40
        %v3142 = vpop.permute.xlu0 %3141
        %3143 = vrot.lane.b32.xlu0 %v2151, 40
        %v3144 = vpop.permute.xlu0 %3143
        %3145 = vrot.lane.b32.xlu0 %v2152, 40
        %v3146 = vpop.permute.xlu0 %3145
        %3147 = vrot.lane.b32.xlu0 %v2153, 40
        %v3148 = vpop.permute.xlu0 %3147
        %3181 = vrot.lane.b32.xlu0 %v2154, 44
        %v3182 = vpop.permute.xlu0 %3181
        %3183 = vrot.lane.b32.xlu0 %v2155, 44
        %v3184 = vpop.permute.xlu0 %3183
        %3185 = vrot.lane.b32.xlu0 %v2156, 44
        %v3186 = vpop.permute.xlu0 %3185
        %3187 = vrot.lane.b32.xlu0 %v2157, 44
        %v3188 = vpop.permute.xlu0 %3187
        %3189 = vrot.lane.b32.xlu0 %v2158, 44
        %v3190 = vpop.permute.xlu0 %3189
        %3191 = vrot.lane.b32.xlu0 %v2159, 44
        %v3192 = vpop.permute.xlu0 %3191
        %3193 = vrot.lane.b32.xlu0 %v2160, 44
        %v3194 = vpop.permute.xlu0 %3193
        %3195 = vrot.lane.b32.xlu0 %v2161, 44
        %v3196 = vpop.permute.xlu0 %3195
        %3197 = vrot.lane.b32.xlu0 %v2162, 44
        %v3198 = vpop.permute.xlu0 %3197
        %3199 = vrot.lane.b32.xlu0 %v2163, 44
        %v3200 = vpop.permute.xlu0 %3199
        %3201 = vrot.lane.b32.xlu0 %v2164, 44
        %v3202 = vpop.permute.xlu0 %3201
        %3203 = vrot.lane.b32.xlu0 %v2165, 44
        %v3204 = vpop.permute.xlu0 %3203
        %3205 = vrot.lane.b32.xlu0 %v2166, 44
        %v3206 = vpop.permute.xlu0 %3205
        %3207 = vrot.lane.b32.xlu0 %v2167, 44
        %v3208 = vpop.permute.xlu0 %3207
        %3209 = vrot.lane.b32.xlu0 %v2168, 44
        %v3210 = vpop.permute.xlu0 %3209
        %3211 = vrot.lane.b32.xlu0 %v2169, 44
        %v3212 = vpop.permute.xlu0 %3211
        %3245 = vrot.lane.b32.xlu0 %v2170, 48
        %v3246 = vpop.permute.xlu0 %3245
        %3247 = vrot.lane.b32.xlu0 %v2171, 48
        %v3248 = vpop.permute.xlu0 %3247
        %3249 = vrot.lane.b32.xlu0 %v2172, 48
        %v3250 = vpop.permute.xlu0 %3249
        %3251 = vrot.lane.b32.xlu0 %v2173, 48
        %v3252 = vpop.permute.xlu0 %3251
        %3253 = vrot.lane.b32.xlu0 %v2174, 48
        %v3254 = vpop.permute.xlu0 %3253
        %3255 = vrot.lane.b32.xlu0 %v2175, 48
        %v3256 = vpop.permute.xlu0 %3255
        %3257 = vrot.lane.b32.xlu0 %v2176, 48
        %v3258 = vpop.permute.xlu0 %3257
        %3259 = vrot.lane.b32.xlu0 %v2177, 48
        %v3260 = vpop.permute.xlu0 %3259
        %3261 = vrot.lane.b32.xlu0 %v2178, 48
        %v3262 = vpop.permute.xlu0 %3261
        %3263 = vrot.lane.b32.xlu0 %v2179, 48
        %v3264 = vpop.permute.xlu0 %3263
        %3265 = vrot.lane.b32.xlu0 %v2180, 48
        %v3266 = vpop.permute.xlu0 %3265
        %3267 = vrot.lane.b32.xlu0 %v2181, 48
        %v3268 = vpop.permute.xlu0 %3267
        %3269 = vrot.lane.b32.xlu0 %v2182, 48
        %v3270 = vpop.permute.xlu0 %3269
        %3271 = vrot.lane.b32.xlu0 %v2183, 48
        %v3272 = vpop.permute.xlu0 %3271
        %3273 = vrot.lane.b32.xlu0 %v2184, 48
        %v3274 = vpop.permute.xlu0 %3273
        %3275 = vrot.lane.b32.xlu0 %v2185, 48
        %v3276 = vpop.permute.xlu0 %3275
        %v3293 = vsel %vm1535, %v2350, %v2414
        %v3294 = vsel %vm1535, %v2352, %v2416
        %v3295 = vsel %vm1535, %v2354, %v2418
        %v3296 = vsel %vm1535, %v2356, %v2420
        %v3297 = vsel %vm1535, %v2358, %v2422
        %v3298 = vsel %vm1535, %v2360, %v2424
        %v3299 = vsel %vm1535, %v2362, %v2426
        %v3300 = vsel %vm1535, %v2364, %v2428
        %v3301 = vsel %vm1535, %v2366, %v2430
        %v3302 = vsel %vm1535, %v2368, %v2432
        %v3303 = vsel %vm1535, %v2370, %v2434
        %v3304 = vsel %vm1535, %v2372, %v2436
        %v3305 = vsel %vm1535, %v2374, %v2438
        %v3306 = vsel %vm1535, %v2376, %v2440
        %v3307 = vsel %vm1535, %v2378, %v2442
        %v3308 = vsel %vm1535, %v2380, %v2444
        %v3309 = vsel %vm856, %v3293, %v2478
        %v3310 = vsel %vm856, %v3294, %v2480
        %v3311 = vsel %vm856, %v3295, %v2482
        %v3312 = vsel %vm856, %v3296, %v2484
        %v3313 = vsel %vm856, %v3297, %v2486
        %v3314 = vsel %vm856, %v3298, %v2488
        %v3315 = vsel %vm856, %v3299, %v2490
        %v3316 = vsel %vm856, %v3300, %v2492
        %v3317 = vsel %vm856, %v3301, %v2494
        %v3318 = vsel %vm856, %v3302, %v2496
        %v3319 = vsel %vm856, %v3303, %v2498
        %v3320 = vsel %vm856, %v3304, %v2500
        %v3321 = vsel %vm856, %v3305, %v2502
        %v3322 = vsel %vm856, %v3306, %v2504
        %v3323 = vsel %vm856, %v3307, %v2506
        %v3324 = vsel %vm856, %v3308, %v2508
        %v3325 = vsel %vm1568, %v3309, %v1978
        %v3326 = vsel %vm1568, %v3310, %v1979
        %v3327 = vsel %vm1568, %v3311, %v1980
        %v3328 = vsel %vm1568, %v3312, %v1981
        %v3329 = vsel %vm1568, %v3313, %v1982
        %v3330 = vsel %vm1568, %v3314, %v1983
        %v3331 = vsel %vm1568, %v3315, %v1984
        %v3332 = vsel %vm1568, %v3316, %v1985
        %v3333 = vsel %vm1568, %v3317, %v1986
        %v3334 = vsel %vm1568, %v3318, %v1987
        %v3335 = vsel %vm1568, %v3319, %v1988
        %v3336 = vsel %vm1568, %v3320, %v1989
        %v3337 = vsel %vm1568, %v3321, %v1990
        %v3338 = vsel %vm1568, %v3322, %v1991
        %v3339 = vsel %vm1568, %v3323, %v1992
        %v3340 = vsel %vm1568, %v3324, %v1993
        %v3341 = vsel %vm1585, %v3325, %v2542
        %v3342 = vsel %vm1585, %v3326, %v2544
        %v3343 = vsel %vm1585, %v3327, %v2546
        %v3344 = vsel %vm1585, %v3328, %v2548
        %v3345 = vsel %vm1585, %v3329, %v2550
        %v3346 = vsel %vm1585, %v3330, %v2552
        %v3347 = vsel %vm1585, %v3331, %v2554
        %v3348 = vsel %vm1585, %v3332, %v2556
        %v3349 = vsel %vm1585, %v3333, %v2558
        %v3350 = vsel %vm1585, %v3334, %v2560
        %v3351 = vsel %vm1585, %v3335, %v2562
        %v3352 = vsel %vm1585, %v3336, %v2564
        %v3353 = vsel %vm1585, %v3337, %v2566
        %v3354 = vsel %vm1585, %v3338, %v2568
        %v3355 = vsel %vm1585, %v3339, %v2570
        %v3356 = vsel %vm1585, %v3340, %v2572
        %v3357 = vsel %vm1602, %v3341, %v2606
        %v3358 = vsel %vm1602, %v3342, %v2608
        %v3359 = vsel %vm1602, %v3343, %v2610
        %v3360 = vsel %vm1602, %v3344, %v2612
        %v3361 = vsel %vm1602, %v3345, %v2614
        %v3362 = vsel %vm1602, %v3346, %v2616
        %v3363 = vsel %vm1602, %v3347, %v2618
        %v3364 = vsel %vm1602, %v3348, %v2620
        %v3365 = vsel %vm1602, %v3349, %v2622
        %v3366 = vsel %vm1602, %v3350, %v2624
        %v3367 = vsel %vm1602, %v3351, %v2626
        %v3368 = vsel %vm1602, %v3352, %v2628
        %v3369 = vsel %vm1602, %v3353, %v2630
        %v3370 = vsel %vm1602, %v3354, %v2632
        %v3371 = vsel %vm1602, %v3355, %v2634
        %v3372 = vsel %vm1602, %v3356, %v2636
        %v3373 = vsel %vm1619, %v3357, %v2670
        %v3374 = vsel %vm1619, %v3358, %v2672
        %v3375 = vsel %vm1619, %v3359, %v2674
        %v3376 = vsel %vm1619, %v3360, %v2676
        %v3377 = vsel %vm1619, %v3361, %v2678
        %v3378 = vsel %vm1619, %v3362, %v2680
        %v3379 = vsel %vm1619, %v3363, %v2682
        %v3380 = vsel %vm1619, %v3364, %v2684
        %v3381 = vsel %vm1619, %v3365, %v2686
        %v3382 = vsel %vm1619, %v3366, %v2688
        %v3383 = vsel %vm1619, %v3367, %v2690
        %v3384 = vsel %vm1619, %v3368, %v2692
        %v3385 = vsel %vm1619, %v3369, %v2694
        %v3386 = vsel %vm1619, %v3370, %v2696
        %v3387 = vsel %vm1619, %v3371, %v2698
        %v3388 = vsel %vm1619, %v3372, %v2700
        %v3389 = vsel %vm1636, %v3373, %v2734
        %v3390 = vsel %vm1636, %v3374, %v2736
        %v3391 = vsel %vm1636, %v3375, %v2738
        %v3392 = vsel %vm1636, %v3376, %v2740
        %v3393 = vsel %vm1636, %v3377, %v2742
        %v3394 = vsel %vm1636, %v3378, %v2744
        %v3395 = vsel %vm1636, %v3379, %v2746
        %v3396 = vsel %vm1636, %v3380, %v2748
        %v3397 = vsel %vm1636, %v3381, %v2750
        %v3398 = vsel %vm1636, %v3382, %v2752
        %v3399 = vsel %vm1636, %v3383, %v2754
        %v3400 = vsel %vm1636, %v3384, %v2756
        %v3401 = vsel %vm1636, %v3385, %v2758
        %v3402 = vsel %vm1636, %v3386, %v2760
        %v3403 = vsel %vm1636, %v3387, %v2762
        %v3404 = vsel %vm1636, %v3388, %v2764
        %v3405 = vsel %vm1653, %v3389, %v2798
        %v3406 = vsel %vm1653, %v3390, %v2800
        %v3407 = vsel %vm1653, %v3391, %v2802
        %v3408 = vsel %vm1653, %v3392, %v2804
        %v3409 = vsel %vm1653, %v3393, %v2806
        %v3410 = vsel %vm1653, %v3394, %v2808
        %v3411 = vsel %vm1653, %v3395, %v2810
        %v3412 = vsel %vm1653, %v3396, %v2812
        %v3413 = vsel %vm1653, %v3397, %v2814
        %v3414 = vsel %vm1653, %v3398, %v2816
        %v3415 = vsel %vm1653, %v3399, %v2818
        %v3416 = vsel %vm1653, %v3400, %v2820
        %v3417 = vsel %vm1653, %v3401, %v2822
        %v3418 = vsel %vm1653, %v3402, %v2824
        %v3419 = vsel %vm1653, %v3403, %v2826
        %v3420 = vsel %vm1653, %v3404, %v2828
        %v3421 = vsel %vm1705, %v3405, %v2862
        %v3422 = vsel %vm1705, %v3406, %v2864
        %v3423 = vsel %vm1705, %v3407, %v2866
        %v3424 = vsel %vm1705, %v3408, %v2868
        %v3425 = vsel %vm1705, %v3409, %v2870
        %v3426 = vsel %vm1705, %v3410, %v2872
        %v3427 = vsel %vm1705, %v3411, %v2874
        %v3428 = vsel %vm1705, %v3412, %v2876
        %v3429 = vsel %vm1705, %v3413, %v2878
        %v3430 = vsel %vm1705, %v3414, %v2880
        %v3431 = vsel %vm1705, %v3415, %v2882
        %v3432 = vsel %vm1705, %v3416, %v2884
        %v3433 = vsel %vm1705, %v3417, %v2886
        %v3434 = vsel %vm1705, %v3418, %v2888
        %v3435 = vsel %vm1705, %v3419, %v2890
        %v3436 = vsel %vm1705, %v3420, %v2892
        %vm3437 = vcmask 326656
        %v3438 = vsel %vm3437, %v3421, %v2926
        %v3439 = vsel %vm3437, %v3422, %v2928
        %v3440 = vsel %vm3437, %v3423, %v2930
        %v3441 = vsel %vm3437, %v3424, %v2932
        %v3442 = vsel %vm3437, %v3425, %v2934
        %v3443 = vsel %vm3437, %v3426, %v2936
        %v3444 = vsel %vm3437, %v3427, %v2938
        %v3445 = vsel %vm3437, %v3428, %v2940
        %v3446 = vsel %vm3437, %v3429, %v2942
        %v3447 = vsel %vm3437, %v3430, %v2944
        %v3448 = vsel %vm3437, %v3431, %v2946
        %v3449 = vsel %vm3437, %v3432, %v2948
        %v3450 = vsel %vm3437, %v3433, %v2950
        %v3451 = vsel %vm3437, %v3434, %v2952
        %v3452 = vsel %vm3437, %v3435, %v2954
        %v3453 = vsel %vm3437, %v3436, %v2956
        %vm3454 = vcmask 359424
        %v3455 = vsel %vm3454, %v3438, %v2990
        %v3456 = vsel %vm3454, %v3439, %v2992
        %v3457 = vsel %vm3454, %v3440, %v2994
        %v3458 = vsel %vm3454, %v3441, %v2996
        %v3459 = vsel %vm3454, %v3442, %v2998
        %v3460 = vsel %vm3454, %v3443, %v3000
        %v3461 = vsel %vm3454, %v3444, %v3002
        %v3462 = vsel %vm3454, %v3445, %v3004
        %v3463 = vsel %vm3454, %v3446, %v3006
        %v3464 = vsel %vm3454, %v3447, %v3008
        %v3465 = vsel %vm3454, %v3448, %v3010
        %v3466 = vsel %vm3454, %v3449, %v3012
        %v3467 = vsel %vm3454, %v3450, %v3014
        %v3468 = vsel %vm3454, %v3451, %v3016
        %v3469 = vsel %vm3454, %v3452, %v3018
        %v3470 = vsel %vm3454, %v3453, %v3020
        %vm3471 = vcmask 392192
        %v3472 = vsel %vm3471, %v3455, %v3054
        %v3473 = vsel %vm3471, %v3456, %v3056
        %v3474 = vsel %vm3471, %v3457, %v3058
        %v3475 = vsel %vm3471, %v3458, %v3060
        %v3476 = vsel %vm3471, %v3459, %v3062
        %v3477 = vsel %vm3471, %v3460, %v3064
        %v3478 = vsel %vm3471, %v3461, %v3066
        %v3479 = vsel %vm3471, %v3462, %v3068
        %v3480 = vsel %vm3471, %v3463, %v3070
        %v3481 = vsel %vm3471, %v3464, %v3072
        %v3482 = vsel %vm3471, %v3465, %v3074
        %v3483 = vsel %vm3471, %v3466, %v3076
        %v3484 = vsel %vm3471, %v3467, %v3078
        %v3485 = vsel %vm3471, %v3468, %v3080
        %v3486 = vsel %vm3471, %v3469, %v3082
        %v3487 = vsel %vm3471, %v3470, %v3084
        %vm3488 = vcmask 424960
        %v3489 = vsel %vm3488, %v3472, %v3118
        %v3490 = vsel %vm3488, %v3473, %v3120
        %v3491 = vsel %vm3488, %v3474, %v3122
        %v3492 = vsel %vm3488, %v3475, %v3124
        %v3493 = vsel %vm3488, %v3476, %v3126
        %v3494 = vsel %vm3488, %v3477, %v3128
        %v3495 = vsel %vm3488, %v3478, %v3130
        %v3496 = vsel %vm3488, %v3479, %v3132
        %v3497 = vsel %vm3488, %v3480, %v3134
        %v3498 = vsel %vm3488, %v3481, %v3136
        %v3499 = vsel %vm3488, %v3482, %v3138
        %v3500 = vsel %vm3488, %v3483, %v3140
        %v3501 = vsel %vm3488, %v3484, %v3142
        %v3502 = vsel %vm3488, %v3485, %v3144
        %v3503 = vsel %vm3488, %v3486, %v3146
        %v3504 = vsel %vm3488, %v3487, %v3148
        %vm3505 = vcmask 457728
        %v3506 = vsel %vm3505, %v3489, %v3182
        %v3507 = vsel %vm3505, %v3490, %v3184
        %v3508 = vsel %vm3505, %v3491, %v3186
        %v3509 = vsel %vm3505, %v3492, %v3188
        %v3510 = vsel %vm3505, %v3493, %v3190
        %v3511 = vsel %vm3505, %v3494, %v3192
        %v3512 = vsel %vm3505, %v3495, %v3194
        %v3513 = vsel %vm3505, %v3496, %v3196
        %v3514 = vsel %vm3505, %v3497, %v3198
        %v3515 = vsel %vm3505, %v3498, %v3200
        %v3516 = vsel %vm3505, %v3499, %v3202
        %v3517 = vsel %vm3505, %v3500, %v3204
        %v3518 = vsel %vm3505, %v3501, %v3206
        %v3519 = vsel %vm3505, %v3502, %v3208
        %v3520 = vsel %vm3505, %v3503, %v3210
        %v3521 = vsel %vm3505, %v3504, %v3212
        %vm3522 = vcmask 490496
        %v3523 = vsel %vm3522, %v3506, %v3246
        %v3524 = vsel %vm3522, %v3507, %v3248
        %v3525 = vsel %vm3522, %v3508, %v3250
        %v3526 = vsel %vm3522, %v3509, %v3252
        %v3527 = vsel %vm3522, %v3510, %v3254
        %v3528 = vsel %vm3522, %v3511, %v3256
        %v3529 = vsel %vm3522, %v3512, %v3258
        %v3530 = vsel %vm3522, %v3513, %v3260
        %v3531 = vsel %vm3522, %v3514, %v3262
        %v3532 = vsel %vm3522, %v3515, %v3264
        %v3533 = vsel %vm3522, %v3516, %v3266
        %v3534 = vsel %vm3522, %v3517, %v3268
        %v3535 = vsel %vm3522, %v3518, %v3270
        %v3536 = vsel %vm3522, %v3519, %v3272
        %v3537 = vsel %vm3522, %v3520, %v3274
        %v3538 = vsel %vm3522, %v3521, %v3276
        %3555 = vrot.lane.b32.xlu0 %v2186, 116
        %v3556 = vpop.permute.xlu0 %3555
        %3557 = vrot.lane.b32.xlu0 %v2187, 116
        %v3558 = vpop.permute.xlu0 %3557
        %3559 = vrot.lane.b32.xlu0 %v2188, 116
        %v3560 = vpop.permute.xlu0 %3559
        %3561 = vrot.lane.b32.xlu0 %v2189, 116
        %v3562 = vpop.permute.xlu0 %3561
        %3563 = vrot.lane.b32.xlu0 %v2190, 116
        %v3564 = vpop.permute.xlu0 %3563
        %3565 = vrot.lane.b32.xlu0 %v2191, 116
        %v3566 = vpop.permute.xlu0 %3565
        %3567 = vrot.lane.b32.xlu0 %v2192, 116
        %v3568 = vpop.permute.xlu0 %3567
        %3569 = vrot.lane.b32.xlu0 %v2193, 116
        %v3570 = vpop.permute.xlu0 %3569
        %3571 = vrot.lane.b32.xlu0 %v2194, 116
        %v3572 = vpop.permute.xlu0 %3571
        %3573 = vrot.lane.b32.xlu0 %v2195, 116
        %v3574 = vpop.permute.xlu0 %3573
        %3575 = vrot.lane.b32.xlu0 %v2196, 116
        %v3576 = vpop.permute.xlu0 %3575
        %3577 = vrot.lane.b32.xlu0 %v2197, 116
        %v3578 = vpop.permute.xlu0 %3577
        %3579 = vrot.lane.b32.xlu0 %v2198, 116
        %v3580 = vpop.permute.xlu0 %3579
        %3581 = vrot.lane.b32.xlu0 %v2199, 116
        %v3582 = vpop.permute.xlu0 %3581
        %3583 = vrot.lane.b32.xlu0 %v2200, 116
        %v3584 = vpop.permute.xlu0 %3583
        %3585 = vrot.lane.b32.xlu0 %v2201, 116
        %v3586 = vpop.permute.xlu0 %3585
        %3619 = vrot.lane.b32.xlu0 %v2202, 120
        %v3620 = vpop.permute.xlu0 %3619
        %3621 = vrot.lane.b32.xlu0 %v2203, 120
        %v3622 = vpop.permute.xlu0 %3621
        %3623 = vrot.lane.b32.xlu0 %v2204, 120
        %v3624 = vpop.permute.xlu0 %3623
        %3625 = vrot.lane.b32.xlu0 %v2205, 120
        %v3626 = vpop.permute.xlu0 %3625
        %3627 = vrot.lane.b32.xlu0 %v2206, 120
        %v3628 = vpop.permute.xlu0 %3627
        %3629 = vrot.lane.b32.xlu0 %v2207, 120
        %v3630 = vpop.permute.xlu0 %3629
        %3631 = vrot.lane.b32.xlu0 %v2208, 120
        %v3632 = vpop.permute.xlu0 %3631
        %3633 = vrot.lane.b32.xlu0 %v2209, 120
        %v3634 = vpop.permute.xlu0 %3633
        %3635 = vrot.lane.b32.xlu0 %v2210, 120
        %v3636 = vpop.permute.xlu0 %3635
        %3637 = vrot.lane.b32.xlu0 %v2211, 120
        %v3638 = vpop.permute.xlu0 %3637
        %3639 = vrot.lane.b32.xlu0 %v2212, 120
        %v3640 = vpop.permute.xlu0 %3639
        %3641 = vrot.lane.b32.xlu0 %v2213, 120
        %v3642 = vpop.permute.xlu0 %3641
        %3643 = vrot.lane.b32.xlu0 %v2214, 120
        %v3644 = vpop.permute.xlu0 %3643
        %3645 = vrot.lane.b32.xlu0 %v2215, 120
        %v3646 = vpop.permute.xlu0 %3645
        %3647 = vrot.lane.b32.xlu0 %v2216, 120
        %v3648 = vpop.permute.xlu0 %3647
        %3649 = vrot.lane.b32.xlu0 %v2217, 120
        %v3650 = vpop.permute.xlu0 %3649
        %3683 = vrot.lane.b32.xlu0 %v2218, 124
        %v3684 = vpop.permute.xlu0 %3683
        %3685 = vrot.lane.b32.xlu0 %v2219, 124
        %v3686 = vpop.permute.xlu0 %3685
        %3687 = vrot.lane.b32.xlu0 %v2220, 124
        %v3688 = vpop.permute.xlu0 %3687
        %3689 = vrot.lane.b32.xlu0 %v2221, 124
        %v3690 = vpop.permute.xlu0 %3689
        %3691 = vrot.lane.b32.xlu0 %v2222, 124
        %v3692 = vpop.permute.xlu0 %3691
        %3693 = vrot.lane.b32.xlu0 %v2223, 124
        %v3694 = vpop.permute.xlu0 %3693
        %3695 = vrot.lane.b32.xlu0 %v2224, 124
        %v3696 = vpop.permute.xlu0 %3695
        %3697 = vrot.lane.b32.xlu0 %v2225, 124
        %v3698 = vpop.permute.xlu0 %3697
        %3699 = vrot.lane.b32.xlu0 %v2226, 124
        %v3700 = vpop.permute.xlu0 %3699
        %3701 = vrot.lane.b32.xlu0 %v2227, 124
        %v3702 = vpop.permute.xlu0 %3701
        %3703 = vrot.lane.b32.xlu0 %v2228, 124
        %v3704 = vpop.permute.xlu0 %3703
        %3705 = vrot.lane.b32.xlu0 %v2229, 124
        %v3706 = vpop.permute.xlu0 %3705
        %3707 = vrot.lane.b32.xlu0 %v2230, 124
        %v3708 = vpop.permute.xlu0 %3707
        %3709 = vrot.lane.b32.xlu0 %v2231, 124
        %v3710 = vpop.permute.xlu0 %3709
        %3711 = vrot.lane.b32.xlu0 %v2232, 124
        %v3712 = vpop.permute.xlu0 %3711
        %3713 = vrot.lane.b32.xlu0 %v2233, 124
        %v3714 = vpop.permute.xlu0 %3713
        %3747 = vrot.lane.b32.xlu0 %v2253, 4
        %v3748 = vpop.permute.xlu0 %3747
        %3749 = vrot.lane.b32.xlu0 %v2254, 4
        %v3750 = vpop.permute.xlu0 %3749
        %3751 = vrot.lane.b32.xlu0 %v2255, 4
        %v3752 = vpop.permute.xlu0 %3751
        %3753 = vrot.lane.b32.xlu0 %v2256, 4
        %v3754 = vpop.permute.xlu0 %3753
        %3755 = vrot.lane.b32.xlu0 %v2257, 4
        %v3756 = vpop.permute.xlu0 %3755
        %3757 = vrot.lane.b32.xlu0 %v2258, 4
        %v3758 = vpop.permute.xlu0 %3757
        %3759 = vrot.lane.b32.xlu0 %v2259, 4
        %v3760 = vpop.permute.xlu0 %3759
        %3761 = vrot.lane.b32.xlu0 %v2260, 4
        %v3762 = vpop.permute.xlu0 %3761
        %3763 = vrot.lane.b32.xlu0 %v2261, 4
        %v3764 = vpop.permute.xlu0 %3763
        %3765 = vrot.lane.b32.xlu0 %v2262, 4
        %v3766 = vpop.permute.xlu0 %3765
        %3767 = vrot.lane.b32.xlu0 %v2263, 4
        %v3768 = vpop.permute.xlu0 %3767
        %3769 = vrot.lane.b32.xlu0 %v2264, 4
        %v3770 = vpop.permute.xlu0 %3769
        %3771 = vrot.lane.b32.xlu0 %v2265, 4
        %v3772 = vpop.permute.xlu0 %3771
        %3773 = vrot.lane.b32.xlu0 %v2266, 4
        %v3774 = vpop.permute.xlu0 %3773
        %3775 = vrot.lane.b32.xlu0 %v2267, 4
        %v3776 = vpop.permute.xlu0 %3775
        %3777 = vrot.lane.b32.xlu0 %v2268, 4
        %v3778 = vpop.permute.xlu0 %3777
        %3811 = vrot.lane.b32.xlu0 %v2269, 8
        %v3812 = vpop.permute.xlu0 %3811
        %3813 = vrot.lane.b32.xlu0 %v2270, 8
        %v3814 = vpop.permute.xlu0 %3813
        %3815 = vrot.lane.b32.xlu0 %v2271, 8
        %v3816 = vpop.permute.xlu0 %3815
        %3817 = vrot.lane.b32.xlu0 %v2272, 8
        %v3818 = vpop.permute.xlu0 %3817
        %3819 = vrot.lane.b32.xlu0 %v2273, 8
        %v3820 = vpop.permute.xlu0 %3819
        %3821 = vrot.lane.b32.xlu0 %v2274, 8
        %v3822 = vpop.permute.xlu0 %3821
        %3823 = vrot.lane.b32.xlu0 %v2275, 8
        %v3824 = vpop.permute.xlu0 %3823
        %3825 = vrot.lane.b32.xlu0 %v2276, 8
        %v3826 = vpop.permute.xlu0 %3825
        %3827 = vrot.lane.b32.xlu0 %v2277, 8
        %v3828 = vpop.permute.xlu0 %3827
        %3829 = vrot.lane.b32.xlu0 %v2278, 8
        %v3830 = vpop.permute.xlu0 %3829
        %3831 = vrot.lane.b32.xlu0 %v2279, 8
        %v3832 = vpop.permute.xlu0 %3831
        %3833 = vrot.lane.b32.xlu0 %v2280, 8
        %v3834 = vpop.permute.xlu0 %3833
        %3835 = vrot.lane.b32.xlu0 %v2281, 8
        %v3836 = vpop.permute.xlu0 %3835
        %3837 = vrot.lane.b32.xlu0 %v2282, 8
        %v3838 = vpop.permute.xlu0 %3837
        %3839 = vrot.lane.b32.xlu0 %v2283, 8
        %v3840 = vpop.permute.xlu0 %3839
        %3841 = vrot.lane.b32.xlu0 %v2284, 8
        %v3842 = vpop.permute.xlu0 %3841
        %3875 = vrot.lane.b32.xlu0 %v2285, 12
        %v3876 = vpop.permute.xlu0 %3875
        %3877 = vrot.lane.b32.xlu0 %v2286, 12
        %v3878 = vpop.permute.xlu0 %3877
        %3879 = vrot.lane.b32.xlu0 %v2287, 12
        %v3880 = vpop.permute.xlu0 %3879
        %3881 = vrot.lane.b32.xlu0 %v2288, 12
        %v3882 = vpop.permute.xlu0 %3881
        %3883 = vrot.lane.b32.xlu0 %v2289, 12
        %v3884 = vpop.permute.xlu0 %3883
        %3885 = vrot.lane.b32.xlu0 %v2290, 12
        %v3886 = vpop.permute.xlu0 %3885
        %3887 = vrot.lane.b32.xlu0 %v2291, 12
        %v3888 = vpop.permute.xlu0 %3887
        %3889 = vrot.lane.b32.xlu0 %v2292, 12
        %v3890 = vpop.permute.xlu0 %3889
        %3891 = vrot.lane.b32.xlu0 %v2293, 12
        %v3892 = vpop.permute.xlu0 %3891
        %3893 = vrot.lane.b32.xlu0 %v2294, 12
        %v3894 = vpop.permute.xlu0 %3893
        %3895 = vrot.lane.b32.xlu0 %v2295, 12
        %v3896 = vpop.permute.xlu0 %3895
        %3897 = vrot.lane.b32.xlu0 %v2296, 12
        %v3898 = vpop.permute.xlu0 %3897
        %3899 = vrot.lane.b32.xlu0 %v2297, 12
        %v3900 = vpop.permute.xlu0 %3899
        %3901 = vrot.lane.b32.xlu0 %v2298, 12
        %v3902 = vpop.permute.xlu0 %3901
        %3903 = vrot.lane.b32.xlu0 %v2299, 12
        %v3904 = vpop.permute.xlu0 %3903
        %3905 = vrot.lane.b32.xlu0 %v2300, 12
        %v3906 = vpop.permute.xlu0 %3905
        %3939 = vrot.lane.b32.xlu0 %v2301, 16
        %v3940 = vpop.permute.xlu0 %3939
        %3941 = vrot.lane.b32.xlu0 %v2302, 16
        %v3942 = vpop.permute.xlu0 %3941
        %3943 = vrot.lane.b32.xlu0 %v2303, 16
        %v3944 = vpop.permute.xlu0 %3943
        %3945 = vrot.lane.b32.xlu0 %v2304, 16
        %v3946 = vpop.permute.xlu0 %3945
        %3947 = vrot.lane.b32.xlu0 %v2305, 16
        %v3948 = vpop.permute.xlu0 %3947
        %3949 = vrot.lane.b32.xlu0 %v2306, 16
        %v3950 = vpop.permute.xlu0 %3949
        %3951 = vrot.lane.b32.xlu0 %v2307, 16
        %v3952 = vpop.permute.xlu0 %3951
        %3953 = vrot.lane.b32.xlu0 %v2308, 16
        %v3954 = vpop.permute.xlu0 %3953
        %3955 = vrot.lane.b32.xlu0 %v2309, 16
        %v3956 = vpop.permute.xlu0 %3955
        %3957 = vrot.lane.b32.xlu0 %v2310, 16
        %v3958 = vpop.permute.xlu0 %3957
        %3959 = vrot.lane.b32.xlu0 %v2311, 16
        %v3960 = vpop.permute.xlu0 %3959
        %3961 = vrot.lane.b32.xlu0 %v2312, 16
        %v3962 = vpop.permute.xlu0 %3961
        %3963 = vrot.lane.b32.xlu0 %v2313, 16
        %v3964 = vpop.permute.xlu0 %3963
        %3965 = vrot.lane.b32.xlu0 %v2314, 16
        %v3966 = vpop.permute.xlu0 %3965
        %3967 = vrot.lane.b32.xlu0 %v2315, 16
        %v3968 = vpop.permute.xlu0 %3967
        %3969 = vrot.lane.b32.xlu0 %v2316, 16
        %v3970 = vpop.permute.xlu0 %3969
        %4003 = vrot.lane.b32.xlu0 %v2317, 20
        %v4004 = vpop.permute.xlu0 %4003
        %4005 = vrot.lane.b32.xlu0 %v2318, 20
        %v4006 = vpop.permute.xlu0 %4005
        %4007 = vrot.lane.b32.xlu0 %v2319, 20
        %v4008 = vpop.permute.xlu0 %4007
        %4009 = vrot.lane.b32.xlu0 %v2320, 20
        %v4010 = vpop.permute.xlu0 %4009
        %4011 = vrot.lane.b32.xlu0 %v2321, 20
        %v4012 = vpop.permute.xlu0 %4011
        %4013 = vrot.lane.b32.xlu0 %v2322, 20
        %v4014 = vpop.permute.xlu0 %4013
        %4015 = vrot.lane.b32.xlu0 %v2323, 20
        %v4016 = vpop.permute.xlu0 %4015
        %4017 = vrot.lane.b32.xlu0 %v2324, 20
        %v4018 = vpop.permute.xlu0 %4017
        %4019 = vrot.lane.b32.xlu0 %v2325, 20
        %v4020 = vpop.permute.xlu0 %4019
        %4021 = vrot.lane.b32.xlu0 %v2326, 20
        %v4022 = vpop.permute.xlu0 %4021
        %4023 = vrot.lane.b32.xlu0 %v2327, 20
        %v4024 = vpop.permute.xlu0 %4023
        %4025 = vrot.lane.b32.xlu0 %v2328, 20
        %v4026 = vpop.permute.xlu0 %4025
        %4027 = vrot.lane.b32.xlu0 %v2329, 20
        %v4028 = vpop.permute.xlu0 %4027
        %4029 = vrot.lane.b32.xlu0 %v2330, 20
        %v4030 = vpop.permute.xlu0 %4029
        %4031 = vrot.lane.b32.xlu0 %v2331, 20
        %v4032 = vpop.permute.xlu0 %4031
        %4033 = vrot.lane.b32.xlu0 %v2332, 20
        %v4034 = vpop.permute.xlu0 %4033
        %v4051 = vsel %vm1535, %v3556, %v3620
        %v4052 = vsel %vm1535, %v3558, %v3622
        %v4053 = vsel %vm1535, %v3560, %v3624
        %v4054 = vsel %vm1535, %v3562, %v3626
        %v4055 = vsel %vm1535, %v3564, %v3628
        %v4056 = vsel %vm1535, %v3566, %v3630
        %v4057 = vsel %vm1535, %v3568, %v3632
        %v4058 = vsel %vm1535, %v3570, %v3634
        %v4059 = vsel %vm1535, %v3572, %v3636
        %v4060 = vsel %vm1535, %v3574, %v3638
        %v4061 = vsel %vm1535, %v3576, %v3640
        %v4062 = vsel %vm1535, %v3578, %v3642
        %v4063 = vsel %vm1535, %v3580, %v3644
        %v4064 = vsel %vm1535, %v3582, %v3646
        %v4065 = vsel %vm1535, %v3584, %v3648
        %v4066 = vsel %vm1535, %v3586, %v3650
        %v4067 = vsel %vm856, %v4051, %v3684
        %v4068 = vsel %vm856, %v4052, %v3686
        %v4069 = vsel %vm856, %v4053, %v3688
        %v4070 = vsel %vm856, %v4054, %v3690
        %v4071 = vsel %vm856, %v4055, %v3692
        %v4072 = vsel %vm856, %v4056, %v3694
        %v4073 = vsel %vm856, %v4057, %v3696
        %v4074 = vsel %vm856, %v4058, %v3698
        %v4075 = vsel %vm856, %v4059, %v3700
        %v4076 = vsel %vm856, %v4060, %v3702
        %v4077 = vsel %vm856, %v4061, %v3704
        %v4078 = vsel %vm856, %v4062, %v3706
        %v4079 = vsel %vm856, %v4063, %v3708
        %v4080 = vsel %vm856, %v4064, %v3710
        %v4081 = vsel %vm856, %v4065, %v3712
        %v4082 = vsel %vm856, %v4066, %v3714
        %v4083 = vsel %vm1568, %v4067, %v2234
        %v4084 = vsel %vm1568, %v4068, %v2235
        %v4085 = vsel %vm1568, %v4069, %v2236
        %v4086 = vsel %vm1568, %v4070, %v2237
        %v4087 = vsel %vm1568, %v4071, %v2238
        %v4088 = vsel %vm1568, %v4072, %v2239
        %v4089 = vsel %vm1568, %v4073, %v2240
        %v4090 = vsel %vm1568, %v4074, %v2241
        %v4091 = vsel %vm1568, %v4075, %v2242
        %v4092 = vsel %vm1568, %v4076, %v2243
        %v4093 = vsel %vm1568, %v4077, %v2244
        %v4094 = vsel %vm1568, %v4078, %v2245
        %v4095 = vsel %vm1568, %v4079, %v2246
        %v4096 = vsel %vm1568, %v4080, %v2247
        %v4097 = vsel %vm1568, %v4081, %v2248
        %v4098 = vsel %vm1568, %v4082, %v2249
        %v4099 = vsel %vm1585, %v4083, %v3748
        %v4100 = vsel %vm1585, %v4084, %v3750
        %v4101 = vsel %vm1585, %v4085, %v3752
        %v4102 = vsel %vm1585, %v4086, %v3754
        %v4103 = vsel %vm1585, %v4087, %v3756
        %v4104 = vsel %vm1585, %v4088, %v3758
        %v4105 = vsel %vm1585, %v4089, %v3760
        %v4106 = vsel %vm1585, %v4090, %v3762
        %v4107 = vsel %vm1585, %v4091, %v3764
        %v4108 = vsel %vm1585, %v4092, %v3766
        %v4109 = vsel %vm1585, %v4093, %v3768
        %v4110 = vsel %vm1585, %v4094, %v3770
        %v4111 = vsel %vm1585, %v4095, %v3772
        %v4112 = vsel %vm1585, %v4096, %v3774
        %v4113 = vsel %vm1585, %v4097, %v3776
        %v4114 = vsel %vm1585, %v4098, %v3778
        %v4115 = vsel %vm1602, %v4099, %v3812
        %v4116 = vsel %vm1602, %v4100, %v3814
        %v4117 = vsel %vm1602, %v4101, %v3816
        %v4118 = vsel %vm1602, %v4102, %v3818
        %v4119 = vsel %vm1602, %v4103, %v3820
        %v4120 = vsel %vm1602, %v4104, %v3822
        %v4121 = vsel %vm1602, %v4105, %v3824
        %v4122 = vsel %vm1602, %v4106, %v3826
        %v4123 = vsel %vm1602, %v4107, %v3828
        %v4124 = vsel %vm1602, %v4108, %v3830
        %v4125 = vsel %vm1602, %v4109, %v3832
        %v4126 = vsel %vm1602, %v4110, %v3834
        %v4127 = vsel %vm1602, %v4111, %v3836
        %v4128 = vsel %vm1602, %v4112, %v3838
        %v4129 = vsel %vm1602, %v4113, %v3840
        %v4130 = vsel %vm1602, %v4114, %v3842
        %v4131 = vsel %vm1619, %v4115, %v3876
        %v4132 = vsel %vm1619, %v4116, %v3878
        %v4133 = vsel %vm1619, %v4117, %v3880
        %v4134 = vsel %vm1619, %v4118, %v3882
        %v4135 = vsel %vm1619, %v4119, %v3884
        %v4136 = vsel %vm1619, %v4120, %v3886
        %v4137 = vsel %vm1619, %v4121, %v3888
        %v4138 = vsel %vm1619, %v4122, %v3890
        %v4139 = vsel %vm1619, %v4123, %v3892
        %v4140 = vsel %vm1619, %v4124, %v3894
        %v4141 = vsel %vm1619, %v4125, %v3896
        %v4142 = vsel %vm1619, %v4126, %v3898
        %v4143 = vsel %vm1619, %v4127, %v3900
        %v4144 = vsel %vm1619, %v4128, %v3902
        %v4145 = vsel %vm1619, %v4129, %v3904
        %v4146 = vsel %vm1619, %v4130, %v3906
        %v4147 = vsel %vm1636, %v4131, %v3940
        %v4148 = vsel %vm1636, %v4132, %v3942
        %v4149 = vsel %vm1636, %v4133, %v3944
        %v4150 = vsel %vm1636, %v4134, %v3946
        %v4151 = vsel %vm1636, %v4135, %v3948
        %v4152 = vsel %vm1636, %v4136, %v3950
        %v4153 = vsel %vm1636, %v4137, %v3952
        %v4154 = vsel %vm1636, %v4138, %v3954
        %v4155 = vsel %vm1636, %v4139, %v3956
        %v4156 = vsel %vm1636, %v4140, %v3958
        %v4157 = vsel %vm1636, %v4141, %v3960
        %v4158 = vsel %vm1636, %v4142, %v3962
        %v4159 = vsel %vm1636, %v4143, %v3964
        %v4160 = vsel %vm1636, %v4144, %v3966
        %v4161 = vsel %vm1636, %v4145, %v3968
        %v4162 = vsel %vm1636, %v4146, %v3970
        %v4163 = vsel %vm1653, %v4147, %v4004
        %v4164 = vsel %vm1653, %v4148, %v4006
        %v4165 = vsel %vm1653, %v4149, %v4008
        %v4166 = vsel %vm1653, %v4150, %v4010
        %v4167 = vsel %vm1653, %v4151, %v4012
        %v4168 = vsel %vm1653, %v4152, %v4014
        %v4169 = vsel %vm1653, %v4153, %v4016
        %v4170 = vsel %vm1653, %v4154, %v4018
        %v4171 = vsel %vm1653, %v4155, %v4020
        %v4172 = vsel %vm1653, %v4156, %v4022
        %v4173 = vsel %vm1653, %v4157, %v4024
        %v4174 = vsel %vm1653, %v4158, %v4026
        %v4175 = vsel %vm1653, %v4159, %v4028
        %v4176 = vsel %vm1653, %v4160, %v4030
        %v4177 = vsel %vm1653, %v4161, %v4032
        %v4178 = vsel %vm1653, %v4162, %v4034
        %4195 = vrot.lane.b32.xlu0 %v4163, 64
        %v4196 = vpop.permute.xlu0 %4195
        %4197 = vrot.lane.b32.xlu0 %v4164, 64
        %v4198 = vpop.permute.xlu0 %4197
        %4199 = vrot.lane.b32.xlu0 %v4165, 64
        %v4200 = vpop.permute.xlu0 %4199
        %4201 = vrot.lane.b32.xlu0 %v4166, 64
        %v4202 = vpop.permute.xlu0 %4201
        %4203 = vrot.lane.b32.xlu0 %v4167, 64
        %v4204 = vpop.permute.xlu0 %4203
        %4205 = vrot.lane.b32.xlu0 %v4168, 64
        %v4206 = vpop.permute.xlu0 %4205
        %4207 = vrot.lane.b32.xlu0 %v4169, 64
        %v4208 = vpop.permute.xlu0 %4207
        %4209 = vrot.lane.b32.xlu0 %v4170, 64
        %v4210 = vpop.permute.xlu0 %4209
        %4211 = vrot.lane.b32.xlu0 %v4171, 64
        %v4212 = vpop.permute.xlu0 %4211
        %4213 = vrot.lane.b32.xlu0 %v4172, 64
        %v4214 = vpop.permute.xlu0 %4213
        %4215 = vrot.lane.b32.xlu0 %v4173, 64
        %v4216 = vpop.permute.xlu0 %4215
        %4217 = vrot.lane.b32.xlu0 %v4174, 64
        %v4218 = vpop.permute.xlu0 %4217
        %4219 = vrot.lane.b32.xlu0 %v4175, 64
        %v4220 = vpop.permute.xlu0 %4219
        %4221 = vrot.lane.b32.xlu0 %v4176, 64
        %v4222 = vpop.permute.xlu0 %4221
        %4223 = vrot.lane.b32.xlu0 %v4177, 64
        %v4224 = vpop.permute.xlu0 %4223
        %4225 = vrot.lane.b32.xlu0 %v4178, 64
        %v4226 = vpop.permute.xlu0 %4225
        %vm4243 = vcmask 523264
        %v4244 = vsel %vm4243, %v3523, %v4196
        %v4245 = vsel %vm4243, %v3524, %v4198
        %v4246 = vsel %vm4243, %v3525, %v4200
        %v4247 = vsel %vm4243, %v3526, %v4202
        %v4248 = vsel %vm4243, %v3527, %v4204
        %v4249 = vsel %vm4243, %v3528, %v4206
        %v4250 = vsel %vm4243, %v3529, %v4208
        %v4251 = vsel %vm4243, %v3530, %v4210
        %v4252 = vsel %vm4243, %v3531, %v4212
        %v4253 = vsel %vm4243, %v3532, %v4214
        %v4254 = vsel %vm4243, %v3533, %v4216
        %v4255 = vsel %vm4243, %v3534, %v4218
        %v4256 = vsel %vm4243, %v3535, %v4220
        %v4257 = vsel %vm4243, %v3536, %v4222
        %v4258 = vsel %vm4243, %v3537, %v4224
        %v4259 = vsel %vm4243, %v3538, %v4226
        %v4260 = vpack.c.bf16 %v4245, %v4244
        %v4261 = vpack.c.bf16 %v4247, %v4246
        %v4262 = vpack.c.bf16 %v4249, %v4248
        %v4263 = vpack.c.bf16 %v4251, %v4250
        %v4264 = vpack.c.bf16 %v4253, %v4252
        %v4265 = vpack.c.bf16 %v4255, %v4254
        %v4266 = vpack.c.bf16 %v4257, %v4256
        %v4267 = vpack.c.bf16 %v4259, %v4258
        %v4268 = vld [vmem:[%s5] sm:$0xf]
        %v4269 = vld [vmem:[%s5 + $0x4] sm:$0xf]
        %v4270 = vld [vmem:[%s5 + $0x8] sm:$0xf]
        %v4271 = vld [vmem:[%s5 + $0xc] sm:$0xf]
        %v4272 = vld [vmem:[%s5 + $0x10] sm:$0xf]
        %v4273 = vld [vmem:[%s5 + $0x14] sm:$0xf]
        %v4274 = vld [vmem:[%s5 + $0x18] sm:$0xf]
        %v4275 = vld [vmem:[%s5 + $0x1c] sm:$0xf]
        %v4276 = vld [vmem:[%s5 + $0x20] sm:$0xf]
        %v4277 = vld [vmem:[%s5 + $0x24] sm:$0xf]
        %v4278 = vld [vmem:[%s5 + $0x28] sm:$0xf]
        %v4279 = vld [vmem:[%s5 + $0x2c] sm:$0xf]
        %v4280 = vld [vmem:[%s5 + $0x30] sm:$0x3]
        %v4281 = vld [vmem:[%s6] sm:$0x1]
        %v4283 = vlaneseq
        %v4284 = vshrl.u32 %v4283, 7
        %v4285 = vsub.s32 0, %v4284
        %v4286 = vrot.slane %v4281, %v4285
        %v4301 = vunpack.c.l.b16 %v4268
        %v4302 = vunpack.c.l.b16 %v4269
        %v4303 = vunpack.c.l.b16 %v4270
        %v4304 = vunpack.c.l.b16 %v4271
        %v4305 = vunpack.c.l.b16 %v4272
        %v4306 = vunpack.c.l.b16 %v4273
        %v4307 = vunpack.c.l.b16 %v4274
        %v4308 = vunpack.c.l.b16 %v4275
        %v4309 = vunpack.c.l.b16 %v4276
        %v4310 = vunpack.c.l.b16 %v4277
        %v4311 = vunpack.c.l.b16 %v4278
        %v4312 = vunpack.c.l.b16 %v4279
        %v4313 = vunpack.c.l.b16 %v4280
        %v4314 = vpack.c.b16 %v4302, %v4301
        %v4315 = vpack.c.b16 %v4304, %v4303
        %v4316 = vpack.c.b16 %v4306, %v4305
        %v4317 = vpack.c.b16 %v4308, %v4307
        %v4318 = vpack.c.b16 %v4310, %v4309
        %v4319 = vpack.c.b16 %v4312, %v4311
        %v4320 = vpack.c.b16 %v4313, %v4313
        %vm4327 = vcmask 818176
        %v4329 = vsel %vm4327, %v4260, 0
        %v4332 = vsel %vm4327, %v4261, 0
        %v4335 = vsel %vm4327, %v4262, 0
        %v4338 = vsel %vm4327, %v4263, 0
        %v4341 = vsel %vm4327, %v4264, 0
        %v4344 = vsel %vm4327, %v4265, 0
        %v4347 = vsel %vm4327, %v4266, 0
        %v4350 = vsel %vm4327, %v4267, 0
        %v4353 = vsel %vm1730, %v4320, 0
        %4355 = vmatprep.subr.bf16.mxu0 0
        %4356 = vmatpush1.bf16.msra.mxu0 %v4314
        %4357 = vmatprep.subr.bf16.mxu0 0
        %4358 = vmatpush1.bf16.msra.mxu0 %v4315
        %4359 = vmatprep.subr.bf16.mxu0 0
        %4360 = vmatpush1.bf16.msra.mxu0 %v4316
        %4361 = vmatprep.subr.bf16.mxu0 0
        %4362 = vmatpush1.bf16.msra.mxu0 %v4317
        %4363 = vmatprep.subr.bf16.mxu0 0
        %4364 = vmatpush1.bf16.msra.mxu0 %v4318
        %4365 = vmatprep.subr.bf16.mxu0 0
        %4366 = vmatpush1.bf16.msra.mxu0 %v4319
        %4367 = vmatprep.subr.bf16.mxu0 0
        %4368 = vmatpush1.bf16.msra.mxu0 %v4353
        %4369 = vmatprep.subr.bf16.mxu0 0
        %4370 = vmatpush1.bf16.msra.mxu0 0
        %4371 = vmatprep.subr.bf16.mxu0 0
        %4372 = vmatpush1.bf16.msra.mxu0 0
        %4373 = vmatprep.subr.bf16.mxu0 0
        %4374 = vmatpush1.bf16.msra.mxu0 0
        %4375 = vmatprep.subr.bf16.mxu0 0
        %4376 = vmatpush1.bf16.msra.mxu0 0
        %4377 = vmatprep.subr.bf16.mxu0 0
        %4378 = vmatpush1.bf16.msra.mxu0 0
        %4379 = vmatprep.subr.bf16.mxu0 0
        %4380 = vmatpush1.bf16.msra.mxu0 0
        %4381 = vmatprep.subr.bf16.mxu0 0
        %4382 = vmatpush1.bf16.msra.mxu0 0
        %4383 = vmatprep.subr.bf16.mxu0 0
        %4384 = vmatpush1.bf16.msra.mxu0 0
        %4385 = vmatprep.subr.bf16.mxu0 0
        %4386 = vmatpush1.bf16.msra.mxu0 0
        %4387 = vmatprep.mubr.bf16.mxu0 0
        %4388 = vmatmul.mubr.bf16.gmra.mrb[0].mxu0 %v4329
        %v4389 = vpop.f32.mrb[0].mxu0
        %v4390 = vadd.f32 %v4286, %v4389
        %v4391 = vpop.f32.mrb[0].mxu0
        %v4392 = vpop.f32.mrb[0].mxu0
        %v4393 = vadd.f32 %v4286, %v4392
        %v4394 = vpop.f32.mrb[0].mxu0
        %4395 = vmatprep.mubr.bf16.mxu0 0
        %4396 = vmatmul.mubr.bf16.gmra.mrb[0].mxu0 %v4332
        %v4397 = vpop.f32.mrb[0].mxu0
        %v4398 = vadd.f32 %v4286, %v4397
        %v4399 = vpop.f32.mrb[0].mxu0
        %v4400 = vpop.f32.mrb[0].mxu0
        %v4401 = vadd.f32 %v4286, %v4400
        %v4402 = vpop.f32.mrb[0].mxu0
        %4403 = vmatprep.mubr.bf16.mxu0 0
        %4404 = vmatmul.mubr.bf16.gmra.mrb[0].mxu0 %v4335
        %v4405 = vpop.f32.mrb[0].mxu0
        %v4406 = vadd.f32 %v4286, %v4405
        %v4407 = vpop.f32.mrb[0].mxu0
        %v4408 = vpop.f32.mrb[0].mxu0
        %v4409 = vadd.f32 %v4286, %v4408
        %v4410 = vpop.f32.mrb[0].mxu0
        %4411 = vmatprep.mubr.bf16.mxu0 0
        %4412 = vmatmul.mubr.bf16.gmra.mrb[0].mxu0 %v4338
        %v4413 = vpop.f32.mrb[0].mxu0
        %v4414 = vadd.f32 %v4286, %v4413
        %v4415 = vpop.f32.mrb[0].mxu0
        %v4416 = vpop.f32.mrb[0].mxu0
        %v4417 = vadd.f32 %v4286, %v4416
        %v4418 = vpop.f32.mrb[0].mxu0
        %4419 = vmatprep.mubr.bf16.mxu0 0
        %4420 = vmatmul.mubr.bf16.gmra.mrb[0].mxu0 %v4341
        %v4421 = vpop.f32.mrb[0].mxu0
        %v4422 = vadd.f32 %v4286, %v4421
        %v4423 = vpop.f32.mrb[0].mxu0
        %v4424 = vpop.f32.mrb[0].mxu0
        %v4425 = vadd.f32 %v4286, %v4424
        %v4426 = vpop.f32.mrb[0].mxu0
        %4427 = vmatprep.mubr.bf16.mxu0 0
        %4428 = vmatmul.mubr.bf16.gmra.mrb[0].mxu0 %v4344
        %v4429 = vpop.f32.mrb[0].mxu0
        %v4430 = vadd.f32 %v4286, %v4429
        %v4431 = vpop.f32.mrb[0].mxu0
        %v4432 = vpop.f32.mrb[0].mxu0
        %v4433 = vadd.f32 %v4286, %v4432
        %v4434 = vpop.f32.mrb[0].mxu0
        %4435 = vmatprep.mubr.bf16.mxu0 0
        %4436 = vmatmul.mubr.bf16.gmra.mrb[0].mxu0 %v4347
        %v4437 = vpop.f32.mrb[0].mxu0
        %v4438 = vadd.f32 %v4286, %v4437
        %v4439 = vpop.f32.mrb[0].mxu0
        %v4440 = vpop.f32.mrb[0].mxu0
        %v4441 = vadd.f32 %v4286, %v4440
        %v4442 = vpop.f32.mrb[0].mxu0
        %4443 = vmatprep.mubr.bf16.mxu0 0
        %4444 = vmatmul.mubr.bf16.gmra.mrb[0].mxu0 %v4350
        %v4445 = vpop.f32.mrb[0].mxu0
        %v4446 = vadd.f32 %v4286, %v4445
        %v4447 = vpop.f32.mrb[0].mxu0
        %v4448 = vpop.f32.mrb[0].mxu0
        %v4449 = vadd.f32 %v4286, %v4448
        %v4450 = vpop.f32.mrb[0].mxu0
        %4451 = vdwg.mxu0
        %v4452 = vmax.f32 %v4390, 0.0
        %v4453 = vmax.f32 %v4393, 0.0
        %v4454 = vmax.f32 %v4398, 0.0
        %v4455 = vmax.f32 %v4401, 0.0
        %v4456 = vmax.f32 %v4406, 0.0
        %v4457 = vmax.f32 %v4409, 0.0
        %v4458 = vmax.f32 %v4414, 0.0
        %v4459 = vmax.f32 %v4417, 0.0
        %v4460 = vmax.f32 %v4422, 0.0
        %v4461 = vmax.f32 %v4425, 0.0
        %v4462 = vmax.f32 %v4430, 0.0
        %v4463 = vmax.f32 %v4433, 0.0
        %v4464 = vmax.f32 %v4438, 0.0
        %v4465 = vmax.f32 %v4441, 0.0
        %v4466 = vmax.f32 %v4446, 0.0
        %v4467 = vmax.f32 %v4449, 0.0
        %4484 = vrot.lane.b32.xlu0 %v4452, 16
        %v4485 = vpop.permute.xlu0 %4484
        %4486 = vrot.lane.b32.xlu0 %v4453, 16
        %v4487 = vpop.permute.xlu0 %4486
        %4488 = vrot.lane.b32.xlu0 %v4454, 16
        %v4489 = vpop.permute.xlu0 %4488
        %4490 = vrot.lane.b32.xlu0 %v4455, 16
        %v4491 = vpop.permute.xlu0 %4490
        %4492 = vrot.lane.b32.xlu0 %v4456, 16
        %v4493 = vpop.permute.xlu0 %4492
        %4494 = vrot.lane.b32.xlu0 %v4457, 16
        %v4495 = vpop.permute.xlu0 %4494
        %4496 = vrot.lane.b32.xlu0 %v4458, 16
        %v4497 = vpop.permute.xlu0 %4496
        %4498 = vrot.lane.b32.xlu0 %v4459, 16
        %v4499 = vpop.permute.xlu0 %4498
        %4500 = vrot.lane.b32.xlu0 %v4460, 16
        %v4501 = vpop.permute.xlu0 %4500
        %4502 = vrot.lane.b32.xlu0 %v4461, 16
        %v4503 = vpop.permute.xlu0 %4502
        %4504 = vrot.lane.b32.xlu0 %v4462, 16
        %v4505 = vpop.permute.xlu0 %4504
        %4506 = vrot.lane.b32.xlu0 %v4463, 16
        %v4507 = vpop.permute.xlu0 %4506
        %4508 = vrot.lane.b32.xlu0 %v4464, 16
        %v4509 = vpop.permute.xlu0 %4508
        %4510 = vrot.lane.b32.xlu0 %v4465, 16
        %v4511 = vpop.permute.xlu0 %4510
        %4512 = vrot.lane.b32.xlu0 %v4466, 16
        %v4513 = vpop.permute.xlu0 %4512
        %4514 = vrot.lane.b32.xlu0 %v4467, 16
        %v4515 = vpop.permute.xlu0 %4514
        %vm4532 = vcmask 195712
        %4533 = vst.msk [vmem:[%s339] sm:$0xff] %vm4532, %v4485
        %4534 = vst.msk [vmem:[%s339 + $0x8] sm:$0xff] %vm4532, %v4487
        %4535 = vst.msk [vmem:[%s339 + $0x10] sm:$0xff] %vm4532, %v4489
        %4536 = vst.msk [vmem:[%s339 + $0x18] sm:$0xff] %vm4532, %v4491
        %4537 = vst.msk [vmem:[%s339 + $0x20] sm:$0xff] %vm4532, %v4493
        %4538 = vst.msk [vmem:[%s339 + $0x28] sm:$0xff] %vm4532, %v4495
        %4539 = vst.msk [vmem:[%s339 + $0x30] sm:$0xff] %vm4532, %v4497
        %4540 = vst.msk [vmem:[%s339 + $0x38] sm:$0xff] %vm4532, %v4499
        %4541 = vst.msk [vmem:[%s339 + $0x40] sm:$0xff] %vm4532, %v4501
        %4542 = vst.msk [vmem:[%s339 + $0x48] sm:$0xff] %vm4532, %v4503
        %4543 = vst.msk [vmem:[%s339 + $0x50] sm:$0xff] %vm4532, %v4505
        %4544 = vst.msk [vmem:[%s339 + $0x58] sm:$0xff] %vm4532, %v4507
        %4545 = vst.msk [vmem:[%s339 + $0x60] sm:$0xff] %vm4532, %v4509
        %4546 = vst.msk [vmem:[%s339 + $0x68] sm:$0xff] %vm4532, %v4511
        %4547 = vst.msk [vmem:[%s339 + $0x70] sm:$0xff] %vm4532, %v4513
        %4548 = vst.msk [vmem:[%s339 + $0x78] sm:$0xff] %vm4532, %v4515
        %s4549 = scalar_lea.vmem [#allocation3], %s1928
        %v4550 = vld [vmem:[%s4549] sm:$0xff]
        %v4551 = vld [vmem:[%s4549 + $0x8] sm:$0xff]
        %v4552 = vld [vmem:[%s4549 + $0x18] sm:$0xff]
        %v4553 = vld [vmem:[%s4549 + $0x20] sm:$0xff]
        %v4554 = vld [vmem:[%s4549 + $0x30] sm:$0xff]
        %v4555 = vld [vmem:[%s4549 + $0x38] sm:$0xff]
        %v4556 = vld [vmem:[%s4549 + $0x48] sm:$0xff]
        %v4557 = vld [vmem:[%s4549 + $0x50] sm:$0xff]
        %v4558 = vld [vmem:[%s4549 + $0x60] sm:$0xff]
        %v4559 = vld [vmem:[%s4549 + $0x68] sm:$0xff]
        %v4560 = vld [vmem:[%s4549 + $0x78] sm:$0xff]
        %v4561 = vld [vmem:[%s4549 + $0x80] sm:$0xff]
        %v4562 = vld [vmem:[%s4549 + $0x90] sm:$0xff]
        %v4563 = vld [vmem:[%s4549 + $0x98] sm:$0xff]
        %v4564 = vld [vmem:[%s4549 + $0xa8] sm:$0xff]
        %v4565 = vld [vmem:[%s4549 + $0xb0] sm:$0xff]
        %v4566 = vld [vmem:[%s4549 + $0x1] sm:$0xff]
        %v4567 = vld [vmem:[%s4549 + $0x9] sm:$0xff]
        %v4568 = vld [vmem:[%s4549 + $0x19] sm:$0xff]
        %v4569 = vld [vmem:[%s4549 + $0x21] sm:$0xff]
        %v4570 = vld [vmem:[%s4549 + $0x31] sm:$0xff]
        %v4571 = vld [vmem:[%s4549 + $0x39] sm:$0xff]
        %v4572 = vld [vmem:[%s4549 + $0x49] sm:$0xff]
        %v4573 = vld [vmem:[%s4549 + $0x51] sm:$0xff]
        %v4574 = vld [vmem:[%s4549 + $0x61] sm:$0xff]
        %v4575 = vld [vmem:[%s4549 + $0x69] sm:$0xff]
        %v4576 = vld [vmem:[%s4549 + $0x79] sm:$0xff]
        %v4577 = vld [vmem:[%s4549 + $0x81] sm:$0xff]
        %v4578 = vld [vmem:[%s4549 + $0x91] sm:$0xff]
        %v4579 = vld [vmem:[%s4549 + $0x99] sm:$0xff]
        %v4580 = vld [vmem:[%s4549 + $0xa9] sm:$0xff]
        %v4581 = vld [vmem:[%s4549 + $0xb1] sm:$0xff]
        %v4582 = vmax.f32 %v4550, %v4566
        %v4583 = vmax.f32 %v4551, %v4567
        %v4584 = vmax.f32 %v4552, %v4568
        %v4585 = vmax.f32 %v4553, %v4569
        %v4586 = vmax.f32 %v4554, %v4570
        %v4587 = vmax.f32 %v4555, %v4571
        %v4588 = vmax.f32 %v4556, %v4572
        %v4589 = vmax.f32 %v4557, %v4573
        %v4590 = vmax.f32 %v4558, %v4574
        %v4591 = vmax.f32 %v4559, %v4575
        %v4592 = vmax.f32 %v4560, %v4576
        %v4593 = vmax.f32 %v4561, %v4577
        %v4594 = vmax.f32 %v4562, %v4578
        %v4595 = vmax.f32 %v4563, %v4579
        %v4596 = vmax.f32 %v4564, %v4580
        %v4597 = vmax.f32 %v4565, %v4581
        %v4598 = vld [vmem:[%s4549 + $0x2] sm:$0xff]
        %v4599 = vld [vmem:[%s4549 + $0xa] sm:$0xff]
        %v4600 = vld [vmem:[%s4549 + $0x1a] sm:$0xff]
        %v4601 = vld [vmem:[%s4549 + $0x22] sm:$0xff]
        %v4602 = vld [vmem:[%s4549 + $0x32] sm:$0xff]
        %v4603 = vld [vmem:[%s4549 + $0x3a] sm:$0xff]
        %v4604 = vld [vmem:[%s4549 + $0x4a] sm:$0xff]
        %v4605 = vld [vmem:[%s4549 + $0x52] sm:$0xff]
        %v4606 = vld [vmem:[%s4549 + $0x62] sm:$0xff]
        %v4607 = vld [vmem:[%s4549 + $0x6a] sm:$0xff]
        %v4608 = vld [vmem:[%s4549 + $0x7a] sm:$0xff]
        %v4609 = vld [vmem:[%s4549 + $0x82] sm:$0xff]
        %v4610 = vld [vmem:[%s4549 + $0x92] sm:$0xff]
        %v4611 = vld [vmem:[%s4549 + $0x9a] sm:$0xff]
        %v4612 = vld [vmem:[%s4549 + $0xaa] sm:$0xff]
        %v4613 = vld [vmem:[%s4549 + $0xb2] sm:$0xff]
        %v4614 = vmax.f32 %v4582, %v4598
        %v4615 = vmax.f32 %v4583, %v4599
        %v4616 = vmax.f32 %v4584, %v4600
        %v4617 = vmax.f32 %v4585, %v4601
        %v4618 = vmax.f32 %v4586, %v4602
        %v4619 = vmax.f32 %v4587, %v4603
        %v4620 = vmax.f32 %v4588, %v4604
        %v4621 = vmax.f32 %v4589, %v4605
        %v4622 = vmax.f32 %v4590, %v4606
        %v4623 = vmax.f32 %v4591, %v4607
        %v4624 = vmax.f32 %v4592, %v4608
        %v4625 = vmax.f32 %v4593, %v4609
        %v4626 = vmax.f32 %v4594, %v4610
        %v4627 = vmax.f32 %v4595, %v4611
        %v4628 = vmax.f32 %v4596, %v4612
        %v4629 = vmax.f32 %v4597, %v4613
        %s4630 = scalar_lea.vmem [#allocation3], %s874
        %v4631 = vld [vmem:[%s4630] sm:$0xff]
        %v4632 = vld [vmem:[%s4630 + $0x8] sm:$0xff]
        %v4633 = vld [vmem:[%s4630 + $0x18] sm:$0xff]
        %v4634 = vld [vmem:[%s4630 + $0x20] sm:$0xff]
        %v4635 = vld [vmem:[%s4630 + $0x30] sm:$0xff]
        %v4636 = vld [vmem:[%s4630 + $0x38] sm:$0xff]
        %v4637 = vld [vmem:[%s4630 + $0x48] sm:$0xff]
        %v4638 = vld [vmem:[%s4630 + $0x50] sm:$0xff]
        %v4639 = vld [vmem:[%s4630 + $0x60] sm:$0xff]
        %v4640 = vld [vmem:[%s4630 + $0x68] sm:$0xff]
        %v4641 = vld [vmem:[%s4630 + $0x78] sm:$0xff]
        %v4642 = vld [vmem:[%s4630 + $0x80] sm:$0xff]
        %v4643 = vld [vmem:[%s4630 + $0x90] sm:$0xff]
        %v4644 = vld [vmem:[%s4630 + $0x98] sm:$0xff]
        %v4645 = vld [vmem:[%s4630 + $0xa8] sm:$0xff]
        %v4646 = vld [vmem:[%s4630 + $0xb0] sm:$0xff]
        %v4647 = vmax.f32 %v4614, %v4631
        %v4648 = vmax.f32 %v4615, %v4632
        %v4649 = vmax.f32 %v4616, %v4633
        %v4650 = vmax.f32 %v4617, %v4634
        %v4651 = vmax.f32 %v4618, %v4635
        %v4652 = vmax.f32 %v4619, %v4636
        %v4653 = vmax.f32 %v4620, %v4637
        %v4654 = vmax.f32 %v4621, %v4638
        %v4655 = vmax.f32 %v4622, %v4639
        %v4656 = vmax.f32 %v4623, %v4640
        %v4657 = vmax.f32 %v4624, %v4641
        %v4658 = vmax.f32 %v4625, %v4642
        %v4659 = vmax.f32 %v4626, %v4643
        %v4660 = vmax.f32 %v4627, %v4644
        %v4661 = vmax.f32 %v4628, %v4645
        %v4662 = vmax.f32 %v4629, %v4646
        %v4663 = vld [vmem:[%s4630 + $0x1] sm:$0xff]
        %v4664 = vld [vmem:[%s4630 + $0x9] sm:$0xff]
        %v4665 = vld [vmem:[%s4630 + $0x19] sm:$0xff]
        %v4666 = vld [vmem:[%s4630 + $0x21] sm:$0xff]
        %v4667 = vld [vmem:[%s4630 + $0x31] sm:$0xff]
        %v4668 = vld [vmem:[%s4630 + $0x39] sm:$0xff]
        %v4669 = vld [vmem:[%s4630 + $0x49] sm:$0xff]
        %v4670 = vld [vmem:[%s4630 + $0x51] sm:$0xff]
        %v4671 = vld [vmem:[%s4630 + $0x61] sm:$0xff]
        %v4672 = vld [vmem:[%s4630 + $0x69] sm:$0xff]
        %v4673 = vld [vmem:[%s4630 + $0x79] sm:$0xff]
        %v4674 = vld [vmem:[%s4630 + $0x81] sm:$0xff]
        %v4675 = vld [vmem:[%s4630 + $0x91] sm:$0xff]
        %v4676 = vld [vmem:[%s4630 + $0x99] sm:$0xff]
        %v4677 = vld [vmem:[%s4630 + $0xa9] sm:$0xff]
        %v4678 = vld [vmem:[%s4630 + $0xb1] sm:$0xff]
        %v4679 = vmax.f32 %v4647, %v4663
        %v4680 = vmax.f32 %v4648, %v4664
        %v4681 = vmax.f32 %v4649, %v4665
        %v4682 = vmax.f32 %v4650, %v4666
        %v4683 = vmax.f32 %v4651, %v4667
        %v4684 = vmax.f32 %v4652, %v4668
        %v4685 = vmax.f32 %v4653, %v4669
        %v4686 = vmax.f32 %v4654, %v4670
        %v4687 = vmax.f32 %v4655, %v4671
        %v4688 = vmax.f32 %v4656, %v4672
        %v4689 = vmax.f32 %v4657, %v4673
        %v4690 = vmax.f32 %v4658, %v4674
        %v4691 = vmax.f32 %v4659, %v4675
        %v4692 = vmax.f32 %v4660, %v4676
        %v4693 = vmax.f32 %v4661, %v4677
        %v4694 = vmax.f32 %v4662, %v4678
        %v4695 = vld [vmem:[%s4630 + $0x2] sm:$0xff]
        %v4696 = vld [vmem:[%s4630 + $0xa] sm:$0xff]
        %v4697 = vld [vmem:[%s4630 + $0x1a] sm:$0xff]
        %v4698 = vld [vmem:[%s4630 + $0x22] sm:$0xff]
        %v4699 = vld [vmem:[%s4630 + $0x32] sm:$0xff]
        %v4700 = vld [vmem:[%s4630 + $0x3a] sm:$0xff]
        %v4701 = vld [vmem:[%s4630 + $0x4a] sm:$0xff]
        %v4702 = vld [vmem:[%s4630 + $0x52] sm:$0xff]
        %v4703 = vld [vmem:[%s4630 + $0x62] sm:$0xff]
        %v4704 = vld [vmem:[%s4630 + $0x6a] sm:$0xff]
        %v4705 = vld [vmem:[%s4630 + $0x7a] sm:$0xff]
        %v4706 = vld [vmem:[%s4630 + $0x82] sm:$0xff]
        %v4707 = vld [vmem:[%s4630 + $0x92] sm:$0xff]
        %v4708 = vld [vmem:[%s4630 + $0x9a] sm:$0xff]
        %v4709 = vld [vmem:[%s4630 + $0xaa] sm:$0xff]
        %v4710 = vld [vmem:[%s4630 + $0xb2] sm:$0xff]
        %v4711 = vmax.f32 %v4679, %v4695
        %v4712 = vmax.f32 %v4680, %v4696
        %v4713 = vmax.f32 %v4681, %v4697
        %v4714 = vmax.f32 %v4682, %v4698
        %v4715 = vmax.f32 %v4683, %v4699
        %v4716 = vmax.f32 %v4684, %v4700
        %v4717 = vmax.f32 %v4685, %v4701
        %v4718 = vmax.f32 %v4686, %v4702
        %v4719 = vmax.f32 %v4687, %v4703
        %v4720 = vmax.f32 %v4688, %v4704
        %v4721 = vmax.f32 %v4689, %v4705
        %v4722 = vmax.f32 %v4690, %v4706
        %v4723 = vmax.f32 %v4691, %v4707
        %v4724 = vmax.f32 %v4692, %v4708
        %v4725 = vmax.f32 %v4693, %v4709
        %v4726 = vmax.f32 %v4694, %v4710
        %s4727 = scalar_lea.vmem [#allocation3], %s838
        %v4728 = vld [vmem:[%s4727] sm:$0xff]
        %v4729 = vld [vmem:[%s4727 + $0x8] sm:$0xff]
        %v4730 = vld [vmem:[%s4727 + $0x18] sm:$0xff]
        %v4731 = vld [vmem:[%s4727 + $0x20] sm:$0xff]
        %v4732 = vld [vmem:[%s4727 + $0x30] sm:$0xff]
        %v4733 = vld [vmem:[%s4727 + $0x38] sm:$0xff]
        %v4734 = vld [vmem:[%s4727 + $0x48] sm:$0xff]
        %v4735 = vld [vmem:[%s4727 + $0x50] sm:$0xff]
        %v4736 = vld [vmem:[%s4727 + $0x60] sm:$0xff]
        %v4737 = vld [vmem:[%s4727 + $0x68] sm:$0xff]
        %v4738 = vld [vmem:[%s4727 + $0x78] sm:$0xff]
        %v4739 = vld [vmem:[%s4727 + $0x80] sm:$0xff]
        %v4740 = vld [vmem:[%s4727 + $0x90] sm:$0xff]
        %v4741 = vld [vmem:[%s4727 + $0x98] sm:$0xff]
        %v4742 = vld [vmem:[%s4727 + $0xa8] sm:$0xff]
        %v4743 = vld [vmem:[%s4727 + $0xb0] sm:$0xff]
        %v4744 = vmax.f32 %v4711, %v4728
        %v4745 = vmax.f32 %v4712, %v4729
        %v4746 = vmax.f32 %v4713, %v4730
        %v4747 = vmax.f32 %v4714, %v4731
        %v4748 = vmax.f32 %v4715, %v4732
        %v4749 = vmax.f32 %v4716, %v4733
        %v4750 = vmax.f32 %v4717, %v4734
        %v4751 = vmax.f32 %v4718, %v4735
        %v4752 = vmax.f32 %v4719, %v4736
        %v4753 = vmax.f32 %v4720, %v4737
        %v4754 = vmax.f32 %v4721, %v4738
        %v4755 = vmax.f32 %v4722, %v4739
        %v4756 = vmax.f32 %v4723, %v4740
        %v4757 = vmax.f32 %v4724, %v4741
        %v4758 = vmax.f32 %v4725, %v4742
        %v4759 = vmax.f32 %v4726, %v4743
        %v4760 = vld [vmem:[%s4727 + $0x1] sm:$0xff]
        %v4761 = vld [vmem:[%s4727 + $0x9] sm:$0xff]
        %v4762 = vld [vmem:[%s4727 + $0x19] sm:$0xff]
        %v4763 = vld [vmem:[%s4727 + $0x21] sm:$0xff]
        %v4764 = vld [vmem:[%s4727 + $0x31] sm:$0xff]
        %v4765 = vld [vmem:[%s4727 + $0x39] sm:$0xff]
        %v4766 = vld [vmem:[%s4727 + $0x49] sm:$0xff]
        %v4767 = vld [vmem:[%s4727 + $0x51] sm:$0xff]
        %v4768 = vld [vmem:[%s4727 + $0x61] sm:$0xff]
        %v4769 = vld [vmem:[%s4727 + $0x69] sm:$0xff]
        %v4770 = vld [vmem:[%s4727 + $0x79] sm:$0xff]
        %v4771 = vld [vmem:[%s4727 + $0x81] sm:$0xff]
        %v4772 = vld [vmem:[%s4727 + $0x91] sm:$0xff]
        %v4773 = vld [vmem:[%s4727 + $0x99] sm:$0xff]
        %v4774 = vld [vmem:[%s4727 + $0xa9] sm:$0xff]
        %v4775 = vld [vmem:[%s4727 + $0xb1] sm:$0xff]
        %v4776 = vmax.f32 %v4744, %v4760
        %v4777 = vmax.f32 %v4745, %v4761
        %v4778 = vmax.f32 %v4746, %v4762
        %v4779 = vmax.f32 %v4747, %v4763
        %v4780 = vmax.f32 %v4748, %v4764
        %v4781 = vmax.f32 %v4749, %v4765
        %v4782 = vmax.f32 %v4750, %v4766
        %v4783 = vmax.f32 %v4751, %v4767
        %v4784 = vmax.f32 %v4752, %v4768
        %v4785 = vmax.f32 %v4753, %v4769
        %v4786 = vmax.f32 %v4754, %v4770
        %v4787 = vmax.f32 %v4755, %v4771
        %v4788 = vmax.f32 %v4756, %v4772
        %v4789 = vmax.f32 %v4757, %v4773
        %v4790 = vmax.f32 %v4758, %v4774
        %v4791 = vmax.f32 %v4759, %v4775
        %v4792 = vld [vmem:[%s4727 + $0x2] sm:$0xff]
        %v4793 = vld [vmem:[%s4727 + $0xa] sm:$0xff]
        %v4794 = vld [vmem:[%s4727 + $0x1a] sm:$0xff]
        %v4795 = vld [vmem:[%s4727 + $0x22] sm:$0xff]
        %v4796 = vld [vmem:[%s4727 + $0x32] sm:$0xff]
        %v4797 = vld [vmem:[%s4727 + $0x3a] sm:$0xff]
        %v4798 = vld [vmem:[%s4727 + $0x4a] sm:$0xff]
        %v4799 = vld [vmem:[%s4727 + $0x52] sm:$0xff]
        %v4800 = vld [vmem:[%s4727 + $0x62] sm:$0xff]
        %v4801 = vld [vmem:[%s4727 + $0x6a] sm:$0xff]
        %v4802 = vld [vmem:[%s4727 + $0x7a] sm:$0xff]
        %v4803 = vld [vmem:[%s4727 + $0x82] sm:$0xff]
        %v4804 = vld [vmem:[%s4727 + $0x92] sm:$0xff]
        %v4805 = vld [vmem:[%s4727 + $0x9a] sm:$0xff]
        %v4806 = vld [vmem:[%s4727 + $0xaa] sm:$0xff]
        %v4807 = vld [vmem:[%s4727 + $0xb2] sm:$0xff]
        %v4808 = vmax.f32 %v4776, %v4792
        %v4809 = vmax.f32 %v4777, %v4793
        %v4810 = vmax.f32 %v4778, %v4794
        %v4811 = vmax.f32 %v4779, %v4795
        %v4812 = vmax.f32 %v4780, %v4796
        %v4813 = vmax.f32 %v4781, %v4797
        %v4814 = vmax.f32 %v4782, %v4798
        %v4815 = vmax.f32 %v4783, %v4799
        %v4816 = vmax.f32 %v4784, %v4800
        %v4817 = vmax.f32 %v4785, %v4801
        %v4818 = vmax.f32 %v4786, %v4802
        %v4819 = vmax.f32 %v4787, %v4803
        %v4820 = vmax.f32 %v4788, %v4804
        %v4821 = vmax.f32 %v4789, %v4805
        %v4822 = vmax.f32 %v4790, %v4806
        %v4823 = vmax.f32 %v4791, %v4807
        %v4824 = vpack.c.bf16 %v4809, %v4808
        %v4825 = vpack.c.bf16 %v4811, %v4810
        %v4826 = vpack.c.bf16 %v4813, %v4812
        %v4827 = vpack.c.bf16 %v4815, %v4814
        %v4828 = vpack.c.bf16 %v4817, %v4816
        %v4829 = vpack.c.bf16 %v4819, %v4818
        %v4830 = vpack.c.bf16 %v4821, %v4820
        %v4831 = vpack.c.bf16 %v4823, %v4822
        %v4832 = vld [vmem:[%s7] sm:$0x3]
        %v4833 = vld [vmem:[%s8] sm:$0x1]
        %v4835 = vlaneseq
        %v4836 = vshrl.u32 %v4835, 7
        %v4837 = vsub.s32 0, %v4836
        %v4838 = vrot.slane %v4833, %v4837
        %v4841 = vsel %vm1535, %v4824, 0
        %v4844 = vsel %vm1535, %v4825, 0
        %v4847 = vsel %vm1535, %v4826, 0
        %v4850 = vsel %vm1535, %v4827, 0
        %v4853 = vsel %vm1535, %v4828, 0
        %v4856 = vsel %vm1535, %v4829, 0
        %v4859 = vsel %vm1535, %v4830, 0
        %v4862 = vsel %vm1535, %v4831, 0
        %v4865 = vsel %vm1730, %v4832, 0
        %4867 = vmatprep.subr.bf16.mxu0 0
        %4868 = vmatpush1.bf16.msra.mxu0 %v4865
        %4869 = vmatprep.subr.bf16.mxu0 0
        %4870 = vmatpush1.bf16.msra.mxu0 0
        %4871 = vmatprep.subr.bf16.mxu0 0
        %4872 = vmatpush1.bf16.msra.mxu0 0
        %4873 = vmatprep.subr.bf16.mxu0 0
        %4874 = vmatpush1.bf16.msra.mxu0 0
        %4875 = vmatprep.subr.bf16.mxu0 0
        %4876 = vmatpush1.bf16.msra.mxu0 0
        %4877 = vmatprep.subr.bf16.mxu0 0
        %4878 = vmatpush1.bf16.msra.mxu0 0
        %4879 = vmatprep.subr.bf16.mxu0 0
        %4880 = vmatpush1.bf16.msra.mxu0 0
        %4881 = vmatprep.subr.bf16.mxu0 0
        %4882 = vmatpush1.bf16.msra.mxu0 0
        %4883 = vmatprep.subr.bf16.mxu0 0
        %4884 = vmatpush1.bf16.msra.mxu0 0
        %4885 = vmatprep.subr.bf16.mxu0 0
        %4886 = vmatpush1.bf16.msra.mxu0 0
        %4887 = vmatprep.subr.bf16.mxu0 0
        %4888 = vmatpush1.bf16.msra.mxu0 0
        %4889 = vmatprep.subr.bf16.mxu0 0
        %4890 = vmatpush1.bf16.msra.mxu0 0
        %4891 = vmatprep.subr.bf16.mxu0 0
        %4892 = vmatpush1.bf16.msra.mxu0 0
        %4893 = vmatprep.subr.bf16.mxu0 0
        %4894 = vmatpush1.bf16.msra.mxu0 0
        %4895 = vmatprep.subr.bf16.mxu0 0
        %4896 = vmatpush1.bf16.msra.mxu0 0
        %4897 = vmatprep.subr.bf16.mxu0 0
        %4898 = vmatpush1.bf16.msra.mxu0 0
        %4899 = vmatprep.mubr.bf16.mxu0 0
        %4900 = vmatmul.mubr.bf16.gmra.mrb[0].mxu0 %v4841
        %v4901 = vpop.f32.mrb[0].mxu0
        %v4902 = vadd.f32 %v4838, %v4901
        %v4903 = vpop.f32.mrb[0].mxu0
        %v4904 = vpop.f32.mrb[0].mxu0
        %v4905 = vadd.f32 %v4838, %v4904
        %v4906 = vpop.f32.mrb[0].mxu0
        %4907 = vmatprep.mubr.bf16.mxu0 0
        %4908 = vmatmul.mubr.bf16.gmra.mrb[0].mxu0 %v4844
        %v4909 = vpop.f32.mrb[0].mxu0
        %v4910 = vadd.f32 %v4838, %v4909
        %v4911 = vpop.f32.mrb[0].mxu0
        %v4912 = vpop.f32.mrb[0].mxu0
        %v4913 = vadd.f32 %v4838, %v4912
        %v4914 = vpop.f32.mrb[0].mxu0
        %4915 = vmatprep.mubr.bf16.mxu0 0
        %4916 = vmatmul.mubr.bf16.gmra.mrb[0].mxu0 %v4847
        %v4917 = vpop.f32.mrb[0].mxu0
        %v4918 = vadd.f32 %v4838, %v4917
        %v4919 = vpop.f32.mrb[0].mxu0
        %v4920 = vpop.f32.mrb[0].mxu0
        %v4921 = vadd.f32 %v4838, %v4920
        %v4922 = vpop.f32.mrb[0].mxu0
        %4923 = vmatprep.mubr.bf16.mxu0 0
        %4924 = vmatmul.mubr.bf16.gmra.mrb[0].mxu0 %v4850
        %v4925 = vpop.f32.mrb[0].mxu0
        %v4926 = vadd.f32 %v4838, %v4925
        %v4927 = vpop.f32.mrb[0].mxu0
        %v4928 = vpop.f32.mrb[0].mxu0
        %v4929 = vadd.f32 %v4838, %v4928
        %v4930 = vpop.f32.mrb[0].mxu0
        %4931 = vmatprep.mubr.bf16.mxu0 0
        %4932 = vmatmul.mubr.bf16.gmra.mrb[0].mxu0 %v4853
        %v4933 = vpop.f32.mrb[0].mxu0
        %v4934 = vadd.f32 %v4838, %v4933
        %v4935 = vpop.f32.mrb[0].mxu0
        %v4936 = vpop.f32.mrb[0].mxu0
        %v4937 = vadd.f32 %v4838, %v4936
        %v4938 = vpop.f32.mrb[0].mxu0
        %4939 = vmatprep.mubr.bf16.mxu0 0
        %4940 = vmatmul.mubr.bf16.gmra.mrb[0].mxu0 %v4856
        %v4941 = vpop.f32.mrb[0].mxu0
        %v4942 = vadd.f32 %v4838, %v4941
        %v4943 = vpop.f32.mrb[0].mxu0
        %v4944 = vpop.f32.mrb[0].mxu0
        %v4945 = vadd.f32 %v4838, %v4944
        %v4946 = vpop.f32.mrb[0].mxu0
        %4947 = vmatprep.mubr.bf16.mxu0 0
        %4948 = vmatmul.mubr.bf16.gmra.mrb[0].mxu0 %v4859
        %v4949 = vpop.f32.mrb[0].mxu0
        %v4950 = vadd.f32 %v4838, %v4949
        %v4951 = vpop.f32.mrb[0].mxu0
        %v4952 = vpop.f32.mrb[0].mxu0
        %v4953 = vadd.f32 %v4838, %v4952
        %v4954 = vpop.f32.mrb[0].mxu0
        %4955 = vmatprep.mubr.bf16.mxu0 0
        %4956 = vmatmul.mubr.bf16.gmra.mrb[0].mxu0 %v4862
        %v4957 = vpop.f32.mrb[0].mxu0
        %v4958 = vadd.f32 %v4838, %v4957
        %v4959 = vpop.f32.mrb[0].mxu0
        %v4960 = vpop.f32.mrb[0].mxu0
        %v4961 = vadd.f32 %v4838, %v4960
        %v4962 = vpop.f32.mrb[0].mxu0
        %4963 = vdwg.mxu0
        %v4964 = vmax.f32 %v4902, 0.0
        %v4965 = vmax.f32 %v4905, 0.0
        %v4966 = vmax.f32 %v4910, 0.0
        %v4967 = vmax.f32 %v4913, 0.0
        %v4968 = vmax.f32 %v4918, 0.0
        %v4969 = vmax.f32 %v4921, 0.0
        %v4970 = vmax.f32 %v4926, 0.0
        %v4971 = vmax.f32 %v4929, 0.0
        %v4972 = vmax.f32 %v4934, 0.0
        %v4973 = vmax.f32 %v4937, 0.0
        %v4974 = vmax.f32 %v4942, 0.0
        %v4975 = vmax.f32 %v4945, 0.0
        %v4976 = vmax.f32 %v4950, 0.0
        %v4977 = vmax.f32 %v4953, 0.0
        %v4978 = vmax.f32 %v4958, 0.0
        %v4979 = vmax.f32 %v4961, 0.0
        %4996 = vrot.lane.b32.xlu0 %v4964, 24
        %v4997 = vpop.permute.xlu0 %4996
        %4998 = vrot.lane.b32.xlu0 %v4965, 24
        %v4999 = vpop.permute.xlu0 %4998
        %5000 = vrot.lane.b32.xlu0 %v4966, 24
        %v5001 = vpop.permute.xlu0 %5000
        %5002 = vrot.lane.b32.xlu0 %v4967, 24
        %v5003 = vpop.permute.xlu0 %5002
        %5004 = vrot.lane.b32.xlu0 %v4968, 24
        %v5005 = vpop.permute.xlu0 %5004
        %5006 = vrot.lane.b32.xlu0 %v4969, 24
        %v5007 = vpop.permute.xlu0 %5006
        %5008 = vrot.lane.b32.xlu0 %v4970, 24
        %v5009 = vpop.permute.xlu0 %5008
        %5010 = vrot.lane.b32.xlu0 %v4971, 24
        %v5011 = vpop.permute.xlu0 %5010
        %5012 = vrot.lane.b32.xlu0 %v4972, 24
        %v5013 = vpop.permute.xlu0 %5012
        %5014 = vrot.lane.b32.xlu0 %v4973, 24
        %v5015 = vpop.permute.xlu0 %5014
        %5016 = vrot.lane.b32.xlu0 %v4974, 24
        %v5017 = vpop.permute.xlu0 %5016
        %5018 = vrot.lane.b32.xlu0 %v4975, 24
        %v5019 = vpop.permute.xlu0 %5018
        %5020 = vrot.lane.b32.xlu0 %v4976, 24
        %v5021 = vpop.permute.xlu0 %5020
        %5022 = vrot.lane.b32.xlu0 %v4977, 24
        %v5023 = vpop.permute.xlu0 %5022
        %5024 = vrot.lane.b32.xlu0 %v4978, 24
        %v5025 = vpop.permute.xlu0 %5024
        %5026 = vrot.lane.b32.xlu0 %v4979, 24
        %v5027 = vpop.permute.xlu0 %5026
        %vm5044 = vcmask 261312
        %5045 = vst.msk [vmem:[%s339] sm:$0xff] %vm5044, %v4997
        %5046 = vst.msk [vmem:[%s339 + $0x8] sm:$0xff] %vm5044, %v4999
        %5047 = vst.msk [vmem:[%s339 + $0x10] sm:$0xff] %vm5044, %v5001
        %5048 = vst.msk [vmem:[%s339 + $0x18] sm:$0xff] %vm5044, %v5003
        %5049 = vst.msk [vmem:[%s339 + $0x20] sm:$0xff] %vm5044, %v5005
        %5050 = vst.msk [vmem:[%s339 + $0x28] sm:$0xff] %vm5044, %v5007
        %5051 = vst.msk [vmem:[%s339 + $0x30] sm:$0xff] %vm5044, %v5009
        %5052 = vst.msk [vmem:[%s339 + $0x38] sm:$0xff] %vm5044, %v5011
        %5053 = vst.msk [vmem:[%s339 + $0x40] sm:$0xff] %vm5044, %v5013
        %5054 = vst.msk [vmem:[%s339 + $0x48] sm:$0xff] %vm5044, %v5015
        %5055 = vst.msk [vmem:[%s339 + $0x50] sm:$0xff] %vm5044, %v5017
        %5056 = vst.msk [vmem:[%s339 + $0x58] sm:$0xff] %vm5044, %v5019
        %5057 = vst.msk [vmem:[%s339 + $0x60] sm:$0xff] %vm5044, %v5021
        %5058 = vst.msk [vmem:[%s339 + $0x68] sm:$0xff] %vm5044, %v5023
        %5059 = vst.msk [vmem:[%s339 + $0x70] sm:$0xff] %vm5044, %v5025
        %5060 = vst.msk [vmem:[%s339 + $0x78] sm:$0xff] %vm5044, %v5027
        %s5061 = sand.u32 %s239, 1
        %s5062 = scalar_lea.sflag [#allocation5], %s5061
        %s5063 = sand.u32 %s239, 1
        %s5064 = smul.addr %s5063, 128
        %s5065 = scalar_lea.vmem [#allocation4], %s5064
        // Predicated region
        $region61: #{inception_forward.1} parent=55 // pred_check
          %p5066 = pneg %p249
        $region62: #{inception_forward.1} parent=55 // pred_check_branch
          %5068 = sbr.rel (%p5066) target = $region64
        $region63: #{inception_forward.1} parent=55 // pred_region
          %s5069 = smul.u32 8, %s28
          %s5071 = ssub.s32 2048, 2048
          %5072 = vsyncadd %s5062, %s5071
          %s5073 = smul.addr %s5069, 2
          %s5074 = smul.addr %s27, 32
          %s5075 = sadd.s32 %s5073, %s5074
          %s5076 = smul.addr %s5075, 128
          %s5077 = scalar_lea.hbm %s9, %s5076
          %s5078 = sshll.u32 %s5065, 4
          %s5079 = int_to_ptr.vmem [resolvable:$true] %s5078
          %5084 = dma.vmem_to_hbm [thread:$0]  %s5079, 2048, %s5077, %s5062, 128, 128, 8
        $region64: #{inception_forward.1} parent=55 // pred_fallthru
          _
      $region56: #{inception_forward.1} parent=5 // pred_fallthru
        _
      %p5085 = scmp.le.s32.totalorder 2, %s18
      // Predicated region
      $region65: #{inception_forward.1} parent=5 // pred_check
        %p5086 = pneg %p5085
      $region66: #{inception_forward.1} parent=5 // pred_check_branch
        %5088 = sbr.rel (%p5086) target = $region68
      $region67: #{inception_forward.1} parent=5 // pred_region
        %s5089 = ssub.s32 %s18, 2
        // Predicated region
        $region69: #{inception_forward.1} parent=67 // pred_check
          %p5090 = pneg %p255
        $region70: #{inception_forward.1} parent=67 // pred_check_branch
          %5092 = sbr.rel (%p5090) target = $region72
        $region71: #{inception_forward.1} parent=67 // pred_region
          %s5093 = sand.u32 %s240, 1
          %s5094 = scalar_lea.sflag [#allocation5], %s5093
          %s5095 = sand.u32 %s240, 1
          %s5096 = smul.addr %s5095, 128
          %s5097 = scalar_lea.vmem [#allocation4], %s5096
          %5098 = dma.done %s5094, 2048
        $region72: #{inception_forward.1} parent=67 // pred_fallthru
          _
      $region68: #{inception_forward.1} parent=5 // pred_fallthru
        _
    $region6: #{inception_forward.1} parent=1 // loop_footer
      %s22 = sadd.s32 1, %s18
    $region7: #{inception_forward.1} parent=1 // loop_footer_branch
      %17 = sbr.rel target = $region3
    $region8: #{inception_forward.1} parent=1 // loop_exit
      _
    %5099 = vsyncpa [#allocation5], 1
    %s5100 = scalar_lea.sflag [#allocation5], 1
    %5101 = vsyncpa %s5100, 1

</llo_original>
